<compile_context>
chip_gen: v7x
topology: tpu7x:2x2x1
jax: 0.10.0
libtpu: 0.0.40
codegen_flags: <defaults>
</compile_context>

<pallas_src>
import jax
import jax.numpy as jnp
from jax.experimental import pallas as pl
from jax.experimental.pallas import tpu as pltpu

# ----------------------------------------------------------------------------
# Network layer sizes (from CustomNet.__init__)
# ----------------------------------------------------------------------------
HIDDEN_SIZES = [128, 512, 1024, 512, 256, 64]   # Linear+BN+ReLU stack
LAST_OUT = 2                                    # self.last_layer = Linear(64, 2)
PAD_WIDTH = 128                                 # pad narrow dims to a full lane tile
BN_EPS = 1e-5


# ----------------------------------------------------------------------------
# Pallas kernel: full fused MLP on one batch tile.
# refs = (x_ref, w1, b1, ..., w7, b7, out_ref)
#   weights: bf16 (in, out)   biases: f32 (1, out)   x/out: f32
# ----------------------------------------------------------------------------
def _mlp_kernel(*refs):
    x_ref = refs[0]
    out_ref = refs[-1]
    wb_refs = refs[1:-1]
    n_layers = len(wb_refs) // 2

    h = x_ref[...].astype(jnp.bfloat16)
    # Hidden layers: fused Linear+BN (folded) -> ReLU, activations kept in bf16.
    for i in range(n_layers - 1):
        w = wb_refs[2 * i][...]
        b = wb_refs[2 * i + 1][...]
        y = jnp.dot(h, w, preferred_element_type=jnp.float32) + b
        h = jnp.maximum(y, 0.0).astype(jnp.bfloat16)
    # Last layer: plain Linear (output padded to 128 lanes; zeros beyond col 2).
    w = wb_refs[-2][...]
    b = wb_refs[-1][...]
    out_ref[...] = jnp.dot(h, w, preferred_element_type=jnp.float32) + b


# ----------------------------------------------------------------------------
# Parameter construction (deterministic, PyTorch-shaped) + BN folding
# ----------------------------------------------------------------------------
def init_params(key, input_channels):
    """Returns a list of dicts with PyTorch-convention shapes."""
    params = []
    in_dim = input_channels
    for out_dim in HIDDEN_SIZES:
        key, k_w, k_b, k_g, k_be, k_m, k_v = jax.random.split(key, 7)
        lin_w = jax.random.normal(k_w, (out_dim, in_dim), jnp.float32) * 0.05
        lin_b = jax.random.normal(k_b, (out_dim,), jnp.float32) * 0.05
        bn_gamma = 1.0 + 0.1 * jax.random.normal(k_g, (out_dim,), jnp.float32)
        bn_beta = 0.1 * jax.random.normal(k_be, (out_dim,), jnp.float32)
        bn_mean = 0.1 * jax.random.normal(k_m, (out_dim,), jnp.float32)
        bn_var = jnp.abs(1.0 + 0.1 * jax.random.normal(k_v, (out_dim,), jnp.float32))
        params.append(dict(kind="lin_bn", w=lin_w, b=lin_b, gamma=bn_gamma,
                           beta=bn_beta, mean=bn_mean, var=bn_var))
        in_dim = out_dim
    key, k_w, k_b = jax.random.split(key, 3)
    last_w = jax.random.normal(k_w, (LAST_OUT, in_dim), jnp.float32) * 0.05
    last_b = jax.random.normal(k_b, (LAST_OUT,), jnp.float32) * 0.05
    params.append(dict(kind="lin", w=last_w, b=last_b))
    return params


def fold_params(params, input_dim):
    """Fold eval-mode BN into each Linear; transpose weights to (in, out).

    Pads any hidden/output width below 128 up to 128 (zero columns + zero bias)
    and zero-pads the following layer's input rows to match, so all matmuls are
    full-tile and the output store is lane-dense. Weights are cast to bf16
    (activations stay bf16 in-kernel; accumulation is f32), biases stay f32.

    Returns a flat list [w1, b1, ..., w7, b7] with weights bf16 (in, out) and
    biases f32 (1, out).
    """
    fused = []
    prev_out = input_dim
    for p in params:
        w_t = p["w"].T.astype(jnp.float32)                 # (in, out)
        b = p["b"].astype(jnp.float32)                     # (out,)
        if p["kind"] == "lin_bn":
            scale = p["gamma"] / jnp.sqrt(p["var"] + BN_EPS)
            shift = p["beta"] - p["mean"] * scale
            w_t = w_t * scale[None, :]
            b = b * scale + shift
        in_dim, out_dim = w_t.shape
        # Match the previous (possibly padded) activation width with zero rows.
        if prev_out > in_dim:
            w_t = jnp.pad(w_t, ((0, prev_out - in_dim), (0, 0)))
        # Pad narrow outputs up to a lane-dense 128.
        out_padded = max(out_dim, PAD_WIDTH)
        if out_padded > out_dim:
            w_t = jnp.pad(w_t, ((0, 0), (0, out_padded - out_dim)))
            b = jnp.pad(b, ((0, out_padded - out_dim),))
        fused.append(w_t.astype(jnp.bfloat16))
        fused.append(b[None, :].astype(jnp.float32))
        prev_out = out_padded
    return fused


# ----------------------------------------------------------------------------
# Wrapper
# ----------------------------------------------------------------------------
def _cost_estimate(batch, in_dim, fused_params):
    flops = 0
    bytes_accessed = batch * in_dim * 4
    for i in range(0, len(fused_params), 2):
        w = fused_params[i]
        flops += 2 * batch * w.shape[0] * w.shape[1]
        bytes_accessed += w.size * w.dtype.itemsize
        bytes_accessed += fused_params[i + 1].size * 4
    bytes_accessed += batch * fused_params[-2].shape[1] * 4
    return pl.CostEstimate(flops=flops, transcendentals=0,
                           bytes_accessed=bytes_accessed)


@jax.jit
def custom_net_forward(x, *fused_params):
    batch, in_dim = x.shape
    out_width = fused_params[-2].shape[1]        # padded final width (128)

    # Batch block: fill MXU rows for large batches; round small batches to a
    # sublane multiple so the block shape is legal.
    if batch >= 256:
        bm = 256
    else:
        bm = max(8, ((batch + 7) // 8) * 8)
    padded_batch = ((batch + bm - 1) // bm) * bm
    if padded_batch != batch:
        x = jnp.pad(x, ((0, padded_batch - batch), (0, 0)))

    grid = (padded_batch // bm,)
    x_spec = pl.BlockSpec((bm, in_dim), lambda i: (i, 0))
    out_spec = pl.BlockSpec((bm, out_width), lambda i: (i, 0))
    # Weights/biases: constant index_map -> resident in VMEM across all tiles.
    wb_specs = [pl.BlockSpec(p.shape, lambda i: (0, 0)) for p in fused_params]

    out_padded = pl.pallas_call(
        _mlp_kernel,
        out_shape=jax.ShapeDtypeStruct((padded_batch, out_width), jnp.float32),
        grid_spec=pltpu.PrefetchScalarGridSpec(
            num_scalar_prefetch=0,
            grid=grid,
            in_specs=[x_spec] + wb_specs,
            out_specs=out_spec,
        ),
        compiler_params=pltpu.CompilerParams(
            dimension_semantics=("parallel",),
            vmem_limit_bytes=32 * 1024 * 1024,
        ),
        cost_estimate=_cost_estimate(padded_batch, in_dim, fused_params),
    )(x, *fused_params)
    return out_padded[:batch, :LAST_OUT]


# ----------------------------------------------------------------------------
# Pure-JAX reference (f32, unfused) for a sanity check
# ----------------------------------------------------------------------------
def reference_forward(x, params):
    h = x
    for p in params:
        h = h @ p["w"].T + p["b"]
        if p["kind"] == "lin_bn":
            scale = p["gamma"] / jnp.sqrt(p["var"] + BN_EPS)
            h = (h - p["mean"]) * scale + p["beta"]
            h = jnp.maximum(h, 0.0)
    return h


if __name__ == "__main__":
    batch = 8
    input_channels = 32

    key = jax.random.PRNGKey(0)
    key, k_x, k_p = jax.random.split(key, 3)
    x = jax.random.normal(k_x, (batch, input_channels), jnp.float32)

    params = init_params(k_p, input_channels)
    fused = fold_params(params, input_channels)

    out = custom_net_forward(x, *fused)
    out = jax.block_until_ready(out)

    ref = reference_forward(x, params)
    assert out.shape == (batch, LAST_OUT), out.shape
    max_err = jnp.max(jnp.abs(out - ref))
    # bf16 weights/activations with f32 accumulation -> loosened tolerance.
    assert jnp.allclose(out, ref, atol=2e-2, rtol=2e-2), f"max abs err = {max_err}"

    print("KERNEL_OK")
</pallas_src>

<mosaic_0001>
module attributes {stable_mosaic.version = 11 : i64} {
  func.func @_mlp_kernel(%arg0: i32, %arg1: memref<8x32xf32, #tpu.memory_space<vmem>>, %arg2: memref<32x128xbf16, #tpu.memory_space<vmem>>, %arg3: memref<1x128xf32, #tpu.memory_space<vmem>>, %arg4: memref<128x512xbf16, #tpu.memory_space<vmem>>, %arg5: memref<1x512xf32, #tpu.memory_space<vmem>>, %arg6: memref<512x1024xbf16, #tpu.memory_space<vmem>>, %arg7: memref<1x1024xf32, #tpu.memory_space<vmem>>, %arg8: memref<1024x512xbf16, #tpu.memory_space<vmem>>, %arg9: memref<1x512xf32, #tpu.memory_space<vmem>>, %arg10: memref<512x256xbf16, #tpu.memory_space<vmem>>, %arg11: memref<1x256xf32, #tpu.memory_space<vmem>>, %arg12: memref<256x128xbf16, #tpu.memory_space<vmem>>, %arg13: memref<1x128xf32, #tpu.memory_space<vmem>>, %arg14: memref<128x128xbf16, #tpu.memory_space<vmem>>, %arg15: memref<1x128xf32, #tpu.memory_space<vmem>>, %arg16: memref<8x128xf32, #tpu.memory_space<vmem>>) attributes {dimension_semantics = [#tpu.dimension_semantics<parallel>], iteration_bounds = array<i64: 1>, scalar_prefetch = 0 : i64, scratch_operands = 0 : i64, tpu.core_type = #tpu.core_type<tc>, window_params = [{transform_indices = @transform_0, window_bounds = array<i64: 8, 32>}, {pipeline_mode = #tpu.pipeline_mode<synchronous>, transform_indices = @transform_1, window_bounds = array<i64: 32, 128>}, {pipeline_mode = #tpu.pipeline_mode<synchronous>, transform_indices = @transform_2, window_bounds = array<i64: 1, 128>}, {pipeline_mode = #tpu.pipeline_mode<synchronous>, transform_indices = @transform_3, window_bounds = array<i64: 128, 512>}, {pipeline_mode = #tpu.pipeline_mode<synchronous>, transform_indices = @transform_4, window_bounds = array<i64: 1, 512>}, {pipeline_mode = #tpu.pipeline_mode<synchronous>, transform_indices = @transform_5, window_bounds = array<i64: 512, 1024>}, {pipeline_mode = #tpu.pipeline_mode<synchronous>, transform_indices = @transform_6, window_bounds = array<i64: 1, 1024>}, {pipeline_mode = #tpu.pipeline_mode<synchronous>, transform_indices = @transform_7, window_bounds = array<i64: 1024, 512>}, {pipeline_mode = #tpu.pipeline_mode<synchronous>, transform_indices = @transform_8, window_bounds = array<i64: 1, 512>}, {pipeline_mode = #tpu.pipeline_mode<synchronous>, transform_indices = @transform_9, window_bounds = array<i64: 512, 256>}, {pipeline_mode = #tpu.pipeline_mode<synchronous>, transform_indices = @transform_10, window_bounds = array<i64: 1, 256>}, {pipeline_mode = #tpu.pipeline_mode<synchronous>, transform_indices = @transform_11, window_bounds = array<i64: 256, 128>}, {pipeline_mode = #tpu.pipeline_mode<synchronous>, transform_indices = @transform_12, window_bounds = array<i64: 1, 128>}, {pipeline_mode = #tpu.pipeline_mode<synchronous>, transform_indices = @transform_13, window_bounds = array<i64: 128, 128>}, {pipeline_mode = #tpu.pipeline_mode<synchronous>, transform_indices = @transform_14, window_bounds = array<i64: 1, 128>}, {transform_indices = @transform_15, window_bounds = array<i64: 8, 128>}]} {
    %c0 = arith.constant 0 : index
    %c0_0 = arith.constant 0 : index
    %0 = vector.load %arg1[%c0, %c0_0] : memref<8x32xf32, #tpu.memory_space<vmem>>, vector<8x32xf32>
    %1 = arith.truncf %0 : vector<8x32xf32> to vector<8x32xbf16>
    %c0_1 = arith.constant 0 : index
    %c0_2 = arith.constant 0 : index
    %2 = vector.load %arg2[%c0_1, %c0_2] : memref<32x128xbf16, #tpu.memory_space<vmem>>, vector<32x128xbf16>
    %c0_3 = arith.constant 0 : index
    %c0_4 = arith.constant 0 : index
    %3 = vector.load %arg3[%c0_3, %c0_4] : memref<1x128xf32, #tpu.memory_space<vmem>>, vector<1x128xf32>
    %cst = arith.constant dense<0.000000e+00> : vector<8x128xf32>
    %4 = tpu.matmul %1, %2, %cst {dimension_numbers = #tpu.dot_dimension_numbers<[1], [0], [0], [1], [0, 0, 1, 1], [], []>} : vector<8x32xbf16>, vector<32x128xbf16>, vector<8x128xf32> -> vector<8x128xf32>
    %5 = vector.broadcast %3 : vector<1x128xf32> to vector<8x128xf32>
    %6 = arith.addf %4, %5 : vector<8x128xf32>
    %cst_5 = arith.constant 0.000000e+00 : f32
    %7 = vector.broadcast %cst_5 : f32 to vector<8x128xf32>
    %8 = arith.maximumf %6, %7 : vector<8x128xf32>
    %9 = arith.truncf %8 : vector<8x128xf32> to vector<8x128xbf16>
    %c0_6 = arith.constant 0 : index
    %c0_7 = arith.constant 0 : index
    %10 = vector.load %arg4[%c0_6, %c0_7] : memref<128x512xbf16, #tpu.memory_space<vmem>>, vector<128x512xbf16>
    %c0_8 = arith.constant 0 : index
    %c0_9 = arith.constant 0 : index
    %11 = vector.load %arg5[%c0_8, %c0_9] : memref<1x512xf32, #tpu.memory_space<vmem>>, vector<1x512xf32>
    %cst_10 = arith.constant dense<0.000000e+00> : vector<8x512xf32>
    %12 = tpu.matmul %9, %10, %cst_10 {dimension_numbers = #tpu.dot_dimension_numbers<[1], [0], [0], [1], [0, 0, 1, 1], [], []>} : vector<8x128xbf16>, vector<128x512xbf16>, vector<8x512xf32> -> vector<8x512xf32>
    %13 = vector.broadcast %11 : vector<1x512xf32> to vector<8x512xf32>
    %14 = arith.addf %12, %13 : vector<8x512xf32>
    %cst_11 = arith.constant 0.000000e+00 : f32
    %15 = vector.broadcast %cst_11 : f32 to vector<8x512xf32>
    %16 = arith.maximumf %14, %15 : vector<8x512xf32>
    %17 = arith.truncf %16 : vector<8x512xf32> to vector<8x512xbf16>
    %c0_12 = arith.constant 0 : index
    %c0_13 = arith.constant 0 : index
    %18 = vector.load %arg6[%c0_12, %c0_13] : memref<512x1024xbf16, #tpu.memory_space<vmem>>, vector<512x1024xbf16>
    %c0_14 = arith.constant 0 : index
    %c0_15 = arith.constant 0 : index
    %19 = vector.load %arg7[%c0_14, %c0_15] : memref<1x1024xf32, #tpu.memory_space<vmem>>, vector<1x1024xf32>
    %cst_16 = arith.constant dense<0.000000e+00> : vector<8x1024xf32>
    %20 = tpu.matmul %17, %18, %cst_16 {dimension_numbers = #tpu.dot_dimension_numbers<[1], [0], [0], [1], [0, 0, 1, 1], [], []>} : vector<8x512xbf16>, vector<512x1024xbf16>, vector<8x1024xf32> -> vector<8x1024xf32>
    %21 = vector.broadcast %19 : vector<1x1024xf32> to vector<8x1024xf32>
    %22 = arith.addf %20, %21 : vector<8x1024xf32>
    %cst_17 = arith.constant 0.000000e+00 : f32
    %23 = vector.broadcast %cst_17 : f32 to vector<8x1024xf32>
    %24 = arith.maximumf %22, %23 : vector<8x1024xf32>
    %25 = arith.truncf %24 : vector<8x1024xf32> to vector<8x1024xbf16>
    %c0_18 = arith.constant 0 : index
    %c0_19 = arith.constant 0 : index
    %26 = vector.load %arg8[%c0_18, %c0_19] : memref<1024x512xbf16, #tpu.memory_space<vmem>>, vector<1024x512xbf16>
    %c0_20 = arith.constant 0 : index
    %c0_21 = arith.constant 0 : index
    %27 = vector.load %arg9[%c0_20, %c0_21] : memref<1x512xf32, #tpu.memory_space<vmem>>, vector<1x512xf32>
    %cst_22 = arith.constant dense<0.000000e+00> : vector<8x512xf32>
    %28 = tpu.matmul %25, %26, %cst_22 {dimension_numbers = #tpu.dot_dimension_numbers<[1], [0], [0], [1], [0, 0, 1, 1], [], []>} : vector<8x1024xbf16>, vector<1024x512xbf16>, vector<8x512xf32> -> vector<8x512xf32>
    %29 = vector.broadcast %27 : vector<1x512xf32> to vector<8x512xf32>
    %30 = arith.addf %28, %29 : vector<8x512xf32>
    %cst_23 = arith.constant 0.000000e+00 : f32
    %31 = vector.broadcast %cst_23 : f32 to vector<8x512xf32>
    %32 = arith.maximumf %30, %31 : vector<8x512xf32>
    %33 = arith.truncf %32 : vector<8x512xf32> to vector<8x512xbf16>
    %c0_24 = arith.constant 0 : index
    %c0_25 = arith.constant 0 : index
    %34 = vector.load %arg10[%c0_24, %c0_25] : memref<512x256xbf16, #tpu.memory_space<vmem>>, vector<512x256xbf16>
    %c0_26 = arith.constant 0 : index
    %c0_27 = arith.constant 0 : index
    %35 = vector.load %arg11[%c0_26, %c0_27] : memref<1x256xf32, #tpu.memory_space<vmem>>, vector<1x256xf32>
    %cst_28 = arith.constant dense<0.000000e+00> : vector<8x256xf32>
    %36 = tpu.matmul %33, %34, %cst_28 {dimension_numbers = #tpu.dot_dimension_numbers<[1], [0], [0], [1], [0, 0, 1, 1], [], []>} : vector<8x512xbf16>, vector<512x256xbf16>, vector<8x256xf32> -> vector<8x256xf32>
    %37 = vector.broadcast %35 : vector<1x256xf32> to vector<8x256xf32>
    %38 = arith.addf %36, %37 : vector<8x256xf32>
    %cst_29 = arith.constant 0.000000e+00 : f32
    %39 = vector.broadcast %cst_29 : f32 to vector<8x256xf32>
    %40 = arith.maximumf %38, %39 : vector<8x256xf32>
    %41 = arith.truncf %40 : vector<8x256xf32> to vector<8x256xbf16>
    %c0_30 = arith.constant 0 : index
    %c0_31 = arith.constant 0 : index
    %42 = vector.load %arg12[%c0_30, %c0_31] : memref<256x128xbf16, #tpu.memory_space<vmem>>, vector<256x128xbf16>
    %c0_32 = arith.constant 0 : index
    %c0_33 = arith.constant 0 : index
    %43 = vector.load %arg13[%c0_32, %c0_33] : memref<1x128xf32, #tpu.memory_space<vmem>>, vector<1x128xf32>
    %cst_34 = arith.constant dense<0.000000e+00> : vector<8x128xf32>
    %44 = tpu.matmul %41, %42, %cst_34 {dimension_numbers = #tpu.dot_dimension_numbers<[1], [0], [0], [1], [0, 0, 1, 1], [], []>} : vector<8x256xbf16>, vector<256x128xbf16>, vector<8x128xf32> -> vector<8x128xf32>
    %45 = vector.broadcast %43 : vector<1x128xf32> to vector<8x128xf32>
    %46 = arith.addf %44, %45 : vector<8x128xf32>
    %cst_35 = arith.constant 0.000000e+00 : f32
    %47 = vector.broadcast %cst_35 : f32 to vector<8x128xf32>
    %48 = arith.maximumf %46, %47 : vector<8x128xf32>
    %49 = arith.truncf %48 : vector<8x128xf32> to vector<8x128xbf16>
    %c0_36 = arith.constant 0 : index
    %c0_37 = arith.constant 0 : index
    %50 = vector.load %arg14[%c0_36, %c0_37] : memref<128x128xbf16, #tpu.memory_space<vmem>>, vector<128x128xbf16>
    %c0_38 = arith.constant 0 : index
    %c0_39 = arith.constant 0 : index
    %51 = vector.load %arg15[%c0_38, %c0_39] : memref<1x128xf32, #tpu.memory_space<vmem>>, vector<1x128xf32>
    %cst_40 = arith.constant dense<0.000000e+00> : vector<8x128xf32>
    %52 = tpu.matmul %49, %50, %cst_40 {dimension_numbers = #tpu.dot_dimension_numbers<[1], [0], [0], [1], [0, 0, 1, 1], [], []>} : vector<8x128xbf16>, vector<128x128xbf16>, vector<8x128xf32> -> vector<8x128xf32>
    %53 = vector.broadcast %51 : vector<1x128xf32> to vector<8x128xf32>
    %54 = arith.addf %52, %53 : vector<8x128xf32>
    %c0_41 = arith.constant 0 : index
    %c0_42 = arith.constant 0 : index
    %55 = vector.load %arg16[%c0_41, %c0_42] : memref<8x128xf32, #tpu.memory_space<vmem>>, vector<8x128xf32>
    tpu.vector_store %arg16[%c0_41, %c0_42], %54 {strides = array<i32>} : memref<8x128xf32, #tpu.memory_space<vmem>>, vector<8x128xf32>,
    return
  }
  func.func @transform_0(%arg0: i32) -> (i32, i32) {
    %c0_i32 = arith.constant 0 : i32
    %c0_i32_0 = arith.constant 0 : i32
    return %arg0, %c0_i32 : i32, i32
  }
  func.func @transform_1(%arg0: i32) -> (i32, i32) {
    %c0_i32 = arith.constant 0 : i32
    %c0_i32_0 = arith.constant 0 : i32
    %c0_i32_1 = arith.constant 0 : i32
    return %c0_i32, %c0_i32_0 : i32, i32
  }
  func.func @transform_2(%arg0: i32) -> (i32, i32) {
    %c0_i32 = arith.constant 0 : i32
    %c0_i32_0 = arith.constant 0 : i32
    %c0_i32_1 = arith.constant 0 : i32
    return %c0_i32, %c0_i32_0 : i32, i32
  }
  func.func @transform_3(%arg0: i32) -> (i32, i32) {
    %c0_i32 = arith.constant 0 : i32
    %c0_i32_0 = arith.constant 0 : i32
    %c0_i32_1 = arith.constant 0 : i32
    return %c0_i32, %c0_i32_0 : i32, i32
  }
  func.func @transform_4(%arg0: i32) -> (i32, i32) {
    %c0_i32 = arith.constant 0 : i32
    %c0_i32_0 = arith.constant 0 : i32
    %c0_i32_1 = arith.constant 0 : i32
    return %c0_i32, %c0_i32_0 : i32, i32
  }
  func.func @transform_5(%arg0: i32) -> (i32, i32) {
    %c0_i32 = arith.constant 0 : i32
    %c0_i32_0 = arith.constant 0 : i32
    %c0_i32_1 = arith.constant 0 : i32
    return %c0_i32, %c0_i32_0 : i32, i32
  }
  func.func @transform_6(%arg0: i32) -> (i32, i32) {
    %c0_i32 = arith.constant 0 : i32
    %c0_i32_0 = arith.constant 0 : i32
    %c0_i32_1 = arith.constant 0 : i32
    return %c0_i32, %c0_i32_0 : i32, i32
  }
  func.func @transform_7(%arg0: i32) -> (i32, i32) {
    %c0_i32 = arith.constant 0 : i32
    %c0_i32_0 = arith.constant 0 : i32
    %c0_i32_1 = arith.constant 0 : i32
    return %c0_i32, %c0_i32_0 : i32, i32
  }
  func.func @transform_8(%arg0: i32) -> (i32, i32) {
    %c0_i32 = arith.constant 0 : i32
    %c0_i32_0 = arith.constant 0 : i32
    %c0_i32_1 = arith.constant 0 : i32
    return %c0_i32, %c0_i32_0 : i32, i32
  }
  func.func @transform_9(%arg0: i32) -> (i32, i32) {
    %c0_i32 = arith.constant 0 : i32
    %c0_i32_0 = arith.constant 0 : i32
    %c0_i32_1 = arith.constant 0 : i32
    return %c0_i32, %c0_i32_0 : i32, i32
  }
  func.func @transform_10(%arg0: i32) -> (i32, i32) {
    %c0_i32 = arith.constant 0 : i32
    %c0_i32_0 = arith.constant 0 : i32
    %c0_i32_1 = arith.constant 0 : i32
    return %c0_i32, %c0_i32_0 : i32, i32
  }
  func.func @transform_11(%arg0: i32) -> (i32, i32) {
    %c0_i32 = arith.constant 0 : i32
    %c0_i32_0 = arith.constant 0 : i32
    %c0_i32_1 = arith.constant 0 : i32
    return %c0_i32, %c0_i32_0 : i32, i32
  }
  func.func @transform_12(%arg0: i32) -> (i32, i32) {
    %c0_i32 = arith.constant 0 : i32
    %c0_i32_0 = arith.constant 0 : i32
    %c0_i32_1 = arith.constant 0 : i32
    return %c0_i32, %c0_i32_0 : i32, i32
  }
  func.func @transform_13(%arg0: i32) -> (i32, i32) {
    %c0_i32 = arith.constant 0 : i32
    %c0_i32_0 = arith.constant 0 : i32
    %c0_i32_1 = arith.constant 0 : i32
    return %c0_i32, %c0_i32_0 : i32, i32
  }
  func.func @transform_14(%arg0: i32) -> (i32, i32) {
    %c0_i32 = arith.constant 0 : i32
    %c0_i32_0 = arith.constant 0 : i32
    %c0_i32_1 = arith.constant 0 : i32
    return %c0_i32, %c0_i32_0 : i32, i32
  }
  func.func @transform_15(%arg0: i32) -> (i32, i32) {
    %c0_i32 = arith.constant 0 : i32
    %c0_i32_0 = arith.constant 0 : i32
    return %arg0, %c0_i32 : i32, i32
  }
}

</mosaic_0001>

<llo_original>
// kernel: custom_net_forward.1
$region0: #{custom_net_forward.1}
  #allocation0 [shape = 'u32[]', space=smem, size = 0x4, offset = 0x4, fixed_abs, tag = 'smem constant byte address 0x4 - core index']
  #allocation1 [shape = 'u32[144,128]{1,0:T(1,128)}', space=vmem, size = 0x12000, scoped, tag = 'internal scratch']
  %s0 = inlined_call_operand.hbm [shape: f32[8,32], index: 0, kind: input, shape index: {}]
  %s1 = inlined_call_operand.hbm [shape: bf16[32,128], index: 1, kind: input, shape index: {}]
  %s2 = inlined_call_operand.hbm [shape: f32[1,128], index: 2, kind: input, shape index: {}]
  %s3 = inlined_call_operand.hbm [shape: bf16[128,512], index: 3, kind: input, shape index: {}]
  %s4 = inlined_call_operand.vmem [shape: f32[1,512], index: 4, kind: input, shape index: {}]
  %s5 = inlined_call_operand.hbm [shape: bf16[512,1024], index: 5, kind: input, shape index: {}]
  %s6 = inlined_call_operand.vmem [shape: f32[1,1024], index: 6, kind: input, shape index: {}]
  %s7 = inlined_call_operand.hbm [shape: bf16[1024,512], index: 7, kind: input, shape index: {}]
  %s8 = inlined_call_operand.vmem [shape: f32[1,512], index: 8, kind: input, shape index: {}]
  %s9 = inlined_call_operand.hbm [shape: bf16[512,256], index: 9, kind: input, shape index: {}]
  %s10 = inlined_call_operand.vmem [shape: f32[1,256], index: 10, kind: input, shape index: {}]
  %s11 = inlined_call_operand.hbm [shape: bf16[256,128], index: 11, kind: input, shape index: {}]
  %s12 = inlined_call_operand.vmem [shape: f32[1,128], index: 12, kind: input, shape index: {}]
  %s13 = inlined_call_operand.hbm [shape: bf16[128,128], index: 13, kind: input, shape index: {}]
  %s14 = inlined_call_operand.vmem [shape: f32[1,128], index: 14, kind: input, shape index: {}]
  %s15 = inlined_call_operand.vmem [shape: f32[8,128], index: 15, kind: output, shape index: {}]
  %s16 = sld [smem:[#allocation0]]
  $region106: #{custom_net_forward.1} parent=0
    _
  %s18 = ssub.s32 1, %s16
  %s19 = scalar_select 0, %s18, %s16
  $region1: #{custom_net_forward.1} parent=0
    #allocation2 [shape = 'u8[4096]{0}', space=vmem, size = 0x1000, scoped, tag = 'input window, operand 0, single buffered']
    #allocation3 [shape = 's32[1]{0}', space=sflag, size = 0x4, scoped, tag = 'scoped memory for custom_net_forward.1']
    #allocation4 [shape = 'u8[8192]{0}', space=vmem, size = 0x2000, scoped, tag = 'input window, operand 1, single buffered']
    #allocation5 [shape = 's32[1]{0}', space=sflag, size = 0x4, scoped, tag = 'scoped memory for custom_net_forward.1']
    #allocation6 [shape = 'u8[512]{0}', space=vmem, size = 0x400, scoped, tag = 'input window, operand 2, single buffered']
    #allocation7 [shape = 'u8[131072]{0}', space=vmem, size = 0x20000, scoped, tag = 'input window, operand 3, single buffered']
    #allocation8 [shape = 's32[1]{0}', space=sflag, size = 0x4, scoped, tag = 'scoped memory for custom_net_forward.1']
    #allocation9 [shape = 'u8[1048576]{0}', space=vmem, size = 0x100000, scoped, tag = 'input window, operand 5, single buffered']
    #allocation10 [shape = 'u8[1048576]{0}', space=vmem, size = 0x100000, scoped, tag = 'input window, operand 7, single buffered']
    #allocation11 [shape = 's32[1]{0}', space=sflag, size = 0x4, scoped, tag = 'scoped memory for custom_net_forward.1']
    #allocation12 [shape = 'u8[262144]{0}', space=vmem, size = 0x40000, scoped, tag = 'input window, operand 9, single buffered']
    #allocation13 [shape = 'u8[65536]{0}', space=vmem, size = 0x10000, scoped, tag = 'input window, operand 11, single buffered']
    #allocation14 [shape = 's32[1]{0}', space=sflag, size = 0x4, scoped, tag = 'scoped memory for custom_net_forward.1']
    #allocation15 [shape = 'u8[32768]{0}', space=vmem, size = 0x8000, scoped, tag = 'input window, operand 13, single buffered']
    %20 = vsyncpa [#allocation3], 0
    %21 = vsyncpa [#allocation5], 0
    %22 = vsyncpa [#allocation8], 0
    %23 = vsyncpa [#allocation11], 0
    %24 = vsyncpa [#allocation14], 0
    // Predicated region
    $region2: #{custom_net_forward.1} parent=1 // pred_check
      _
    $region3: #{custom_net_forward.1} parent=1 // pred_check_branch
      %26 = sbr.rel (0) target = $region5
    $region4: #{custom_net_forward.1} parent=1 // pred_region
      %s28 = ssub.s32 128, 128
      %29 = vsyncadd [#allocation3], %s28
      %s31 = sshll.u32 [#allocation2], 4
      %s32 = int_to_ptr.vmem [resolvable:$true] %s31
      %34 = dma.hbm_to_vmem [thread:$0]  %s0, 128, %s32, [#allocation3]
    $region5: #{custom_net_forward.1} parent=1 // pred_fallthru
      _
    // Predicated region
    $region6: #{custom_net_forward.1} parent=1 // pred_check
      _
    $region7: #{custom_net_forward.1} parent=1 // pred_check_branch
      %36 = sbr.rel (0) target = $region9
    $region8: #{custom_net_forward.1} parent=1 // pred_region
      %s38 = ssub.s32 256, 256
      %39 = vsyncadd [#allocation5], %s38
      %s40 = sshll.u32 [#allocation4], 4
      %s41 = int_to_ptr.vmem [resolvable:$true] %s40
      %46 = dma.hbm_to_vmem [thread:$0]  %s1, 256, %s41, [#allocation5], 64, 64, 4
    $region9: #{custom_net_forward.1} parent=1 // pred_fallthru
      _
    // Predicated region
    $region10: #{custom_net_forward.1} parent=1 // pred_check
      _
    $region11: #{custom_net_forward.1} parent=1 // pred_check_branch
      %48 = sbr.rel (0) target = $region13
    $region12: #{custom_net_forward.1} parent=1 // pred_region
      %s50 = ssub.s32 16, 16
      %51 = vsyncadd [#allocation5], %s50
      %s53 = sshll.u32 [#allocation6], 4
      %s54 = int_to_ptr.vmem [resolvable:$true] %s53
      %56 = dma.hbm_to_vmem [thread:$0]  %s2, 16, %s54, [#allocation5]
    $region13: #{custom_net_forward.1} parent=1 // pred_fallthru
      _
    // Predicated region
    $region14: #{custom_net_forward.1} parent=1 // pred_check
      _
    $region15: #{custom_net_forward.1} parent=1 // pred_check_branch
      %58 = sbr.rel (0) target = $region17
    $region16: #{custom_net_forward.1} parent=1 // pred_region
      %s60 = ssub.s32 4096, 4096
      %61 = vsyncadd [#allocation8], %s60
      %s62 = sshll.u32 [#allocation7], 4
      %s63 = int_to_ptr.vmem [resolvable:$true] %s62
      %68 = dma.hbm_to_vmem [thread:$0]  %s3, 4096, %s63, [#allocation8], 256, 256, 16
    $region17: #{custom_net_forward.1} parent=1 // pred_fallthru
      _
    // Predicated region
    $region18: #{custom_net_forward.1} parent=1 // pred_check
      _
    $region19: #{custom_net_forward.1} parent=1 // pred_check_branch
      %70 = sbr.rel (0) target = $region21
    $region20: #{custom_net_forward.1} parent=1 // pred_region
      _
    $region21: #{custom_net_forward.1} parent=1 // pred_fallthru
      _
    // Predicated region
    $region22: #{custom_net_forward.1} parent=1 // pred_check
      _
    $region23: #{custom_net_forward.1} parent=1 // pred_check_branch
      %72 = sbr.rel (0) target = $region25
    $region24: #{custom_net_forward.1} parent=1 // pred_region
      %s74 = ssub.s32 32768, 32768
      %75 = vsyncadd [#allocation8], %s74
      %s76 = sshll.u32 [#allocation9], 4
      %s77 = int_to_ptr.vmem [resolvable:$true] %s76
      %82 = dma.hbm_to_vmem [thread:$0]  %s5, 32768, %s77, [#allocation8], 512, 512, 32
    $region25: #{custom_net_forward.1} parent=1 // pred_fallthru
      _
    // Predicated region
    $region26: #{custom_net_forward.1} parent=1 // pred_check
      _
    $region27: #{custom_net_forward.1} parent=1 // pred_check_branch
      %84 = sbr.rel (0) target = $region29
    $region28: #{custom_net_forward.1} parent=1 // pred_region
      _
    $region29: #{custom_net_forward.1} parent=1 // pred_fallthru
      _
    // Predicated region
    $region30: #{custom_net_forward.1} parent=1 // pred_check
      _
    $region31: #{custom_net_forward.1} parent=1 // pred_check_branch
      %86 = sbr.rel (0) target = $region33
    $region32: #{custom_net_forward.1} parent=1 // pred_region
      %s88 = ssub.s32 32768, 32768
      %89 = vsyncadd [#allocation11], %s88
      %s90 = sshll.u32 [#allocation10], 4
      %s91 = int_to_ptr.vmem [resolvable:$true] %s90
      %96 = dma.hbm_to_vmem [thread:$0]  %s7, 32768, %s91, [#allocation11], 256, 256, 16
    $region33: #{custom_net_forward.1} parent=1 // pred_fallthru
      _
    // Predicated region
    $region34: #{custom_net_forward.1} parent=1 // pred_check
      _
    $region35: #{custom_net_forward.1} parent=1 // pred_check_branch
      %98 = sbr.rel (0) target = $region37
    $region36: #{custom_net_forward.1} parent=1 // pred_region
      _
    $region37: #{custom_net_forward.1} parent=1 // pred_fallthru
      _
    // Predicated region
    $region38: #{custom_net_forward.1} parent=1 // pred_check
      _
    $region39: #{custom_net_forward.1} parent=1 // pred_check_branch
      %100 = sbr.rel (0) target = $region41
    $region40: #{custom_net_forward.1} parent=1 // pred_region
      %s102 = ssub.s32 8192, 8192
      %103 = vsyncadd [#allocation11], %s102
      %s104 = sshll.u32 [#allocation12], 4
      %s105 = int_to_ptr.vmem [resolvable:$true] %s104
      %110 = dma.hbm_to_vmem [thread:$0]  %s9, 8192, %s105, [#allocation11], 128, 128, 8
    $region41: #{custom_net_forward.1} parent=1 // pred_fallthru
      _
    // Predicated region
    $region42: #{custom_net_forward.1} parent=1 // pred_check
      _
    $region43: #{custom_net_forward.1} parent=1 // pred_check_branch
      %112 = sbr.rel (0) target = $region45
    $region44: #{custom_net_forward.1} parent=1 // pred_region
      _
    $region45: #{custom_net_forward.1} parent=1 // pred_fallthru
      _
    // Predicated region
    $region46: #{custom_net_forward.1} parent=1 // pred_check
      _
    $region47: #{custom_net_forward.1} parent=1 // pred_check_branch
      %114 = sbr.rel (0) target = $region49
    $region48: #{custom_net_forward.1} parent=1 // pred_region
      %s116 = ssub.s32 2048, 2048
      %117 = vsyncadd [#allocation14], %s116
      %s118 = sshll.u32 [#allocation13], 4
      %s119 = int_to_ptr.vmem [resolvable:$true] %s118
      %124 = dma.hbm_to_vmem [thread:$0]  %s11, 2048, %s119, [#allocation14], 64, 64, 4
    $region49: #{custom_net_forward.1} parent=1 // pred_fallthru
      _
    // Predicated region
    $region50: #{custom_net_forward.1} parent=1 // pred_check
      _
    $region51: #{custom_net_forward.1} parent=1 // pred_check_branch
      %126 = sbr.rel (0) target = $region53
    $region52: #{custom_net_forward.1} parent=1 // pred_region
      _
    $region53: #{custom_net_forward.1} parent=1 // pred_fallthru
      _
    // Predicated region
    $region54: #{custom_net_forward.1} parent=1 // pred_check
      _
    $region55: #{custom_net_forward.1} parent=1 // pred_check_branch
      %128 = sbr.rel (0) target = $region57
    $region56: #{custom_net_forward.1} parent=1 // pred_region
      %s130 = ssub.s32 1024, 1024
      %131 = vsyncadd [#allocation14], %s130
      %s132 = sshll.u32 [#allocation15], 4
      %s133 = int_to_ptr.vmem [resolvable:$true] %s132
      %138 = dma.hbm_to_vmem [thread:$0]  %s13, 1024, %s133, [#allocation14], 64, 64, 4
    $region57: #{custom_net_forward.1} parent=1 // pred_fallthru
      _
    // Predicated region
    $region58: #{custom_net_forward.1} parent=1 // pred_check
      _
    $region59: #{custom_net_forward.1} parent=1 // pred_check_branch
      %140 = sbr.rel (0) target = $region61
    $region60: #{custom_net_forward.1} parent=1 // pred_region
      _
    $region61: #{custom_net_forward.1} parent=1 // pred_fallthru
      _
    // Predicated region
    $region62: #{custom_net_forward.1} parent=1 // pred_check
      _
    $region63: #{custom_net_forward.1} parent=1 // pred_check_branch
      %142 = sbr.rel (0) target = $region65
    $region64: #{custom_net_forward.1} parent=1 // pred_region
      %143 = dma.done [#allocation3], 128
    $region65: #{custom_net_forward.1} parent=1 // pred_fallthru
      _
    // Predicated region
    $region66: #{custom_net_forward.1} parent=1 // pred_check
      _
    $region67: #{custom_net_forward.1} parent=1 // pred_check_branch
      %145 = sbr.rel (0) target = $region69
    $region68: #{custom_net_forward.1} parent=1 // pred_region
      %146 = dma.done [#allocation5], 256
    $region69: #{custom_net_forward.1} parent=1 // pred_fallthru
      _
    // Predicated region
    $region70: #{custom_net_forward.1} parent=1 // pred_check
      _
    $region71: #{custom_net_forward.1} parent=1 // pred_check_branch
      %148 = sbr.rel (0) target = $region73
    $region72: #{custom_net_forward.1} parent=1 // pred_region
      %149 = dma.done [#allocation5], 16
    $region73: #{custom_net_forward.1} parent=1 // pred_fallthru
      _
    // Predicated region
    $region74: #{custom_net_forward.1} parent=1 // pred_check
      _
    $region75: #{custom_net_forward.1} parent=1 // pred_check_branch
      %151 = sbr.rel (0) target = $region77
    $region76: #{custom_net_forward.1} parent=1 // pred_region
      %152 = dma.done [#allocation8], 4096
    $region77: #{custom_net_forward.1} parent=1 // pred_fallthru
      _
    // Predicated region
    $region78: #{custom_net_forward.1} parent=1 // pred_check
      _
    $region79: #{custom_net_forward.1} parent=1 // pred_check_branch
      %154 = sbr.rel (0) target = $region81
    $region80: #{custom_net_forward.1} parent=1 // pred_region
      %155 = dma.done [#allocation8], 32768
    $region81: #{custom_net_forward.1} parent=1 // pred_fallthru
      _
    // Predicated region
    $region82: #{custom_net_forward.1} parent=1 // pred_check
      _
    $region83: #{custom_net_forward.1} parent=1 // pred_check_branch
      %157 = sbr.rel (0) target = $region85
    $region84: #{custom_net_forward.1} parent=1 // pred_region
      %158 = dma.done [#allocation11], 32768
    $region85: #{custom_net_forward.1} parent=1 // pred_fallthru
      _
    // Predicated region
    $region86: #{custom_net_forward.1} parent=1 // pred_check
      _
    $region87: #{custom_net_forward.1} parent=1 // pred_check_branch
      %160 = sbr.rel (0) target = $region89
    $region88: #{custom_net_forward.1} parent=1 // pred_region
      %161 = dma.done [#allocation11], 8192
    $region89: #{custom_net_forward.1} parent=1 // pred_fallthru
      _
    // Predicated region
    $region90: #{custom_net_forward.1} parent=1 // pred_check
      _
    $region91: #{custom_net_forward.1} parent=1 // pred_check_branch
      %163 = sbr.rel (0) target = $region93
    $region92: #{custom_net_forward.1} parent=1 // pred_region
      %164 = dma.done [#allocation14], 2048
    $region93: #{custom_net_forward.1} parent=1 // pred_fallthru
      _
    // Predicated region
    $region94: #{custom_net_forward.1} parent=1 // pred_check
      _
    $region95: #{custom_net_forward.1} parent=1 // pred_check_branch
      %166 = sbr.rel (0) target = $region97
    $region96: #{custom_net_forward.1} parent=1 // pred_region
      %167 = dma.done [#allocation14], 1024
    $region97: #{custom_net_forward.1} parent=1 // pred_fallthru
      _
    %v169 = vld [vmem:[#allocation2] sm:$0xff]
    %v170 = vpack.c.bf16 %v169, %v169
    %v171 = vld [vmem:[#allocation4] sm:$0xf]
    %v172 = vld [vmem:[#allocation4 + $0x4] sm:$0xf]
    %v173 = vld [vmem:[#allocation4 + $0x8] sm:$0xf]
    %v174 = vld [vmem:[#allocation4 + $0xc] sm:$0xf]
    %v175 = vld [vmem:[#allocation6] sm:$0x1]
    %v177 = vlaneseq
    %v178 = vshrl.u32 %v177, 7
    %v179 = vsub.s32 0, %v178
    %v180 = vrot.slane %v175, %v179
    %v186 = vunpack.c.l.b16 %v171
    %v187 = vunpack.c.l.b16 %v172
    %v188 = vunpack.c.l.b16 %v173
    %v189 = vunpack.c.l.b16 %v174
    %v190 = vpack.c.b16 %v187, %v186
    %v191 = vpack.c.b16 %v189, %v188
    %vm194 = vcmask 261120
    %v196 = vsel %vm194, %v170, 0
    %198 = vmatprep.subr.bf16.mxu0 0
    %199 = vmatpush1.bf16.msra.mxu0 %v190
    %200 = vmatprep.subr.bf16.mxu0 0
    %201 = vmatpush1.bf16.msra.mxu0 %v191
    %202 = vmatprep.subr.bf16.mxu0 0
    %203 = vmatpush1.bf16.msra.mxu0 0
    %204 = vmatprep.subr.bf16.mxu0 0
    %205 = vmatpush1.bf16.msra.mxu0 0
    %206 = vmatprep.subr.bf16.mxu0 0
    %207 = vmatpush1.bf16.msra.mxu0 0
    %208 = vmatprep.subr.bf16.mxu0 0
    %209 = vmatpush1.bf16.msra.mxu0 0
    %210 = vmatprep.subr.bf16.mxu0 0
    %211 = vmatpush1.bf16.msra.mxu0 0
    %212 = vmatprep.subr.bf16.mxu0 0
    %213 = vmatpush1.bf16.msra.mxu0 0
    %214 = vmatprep.subr.bf16.mxu0 0
    %215 = vmatpush1.bf16.msra.mxu0 0
    %216 = vmatprep.subr.bf16.mxu0 0
    %217 = vmatpush1.bf16.msra.mxu0 0
    %218 = vmatprep.subr.bf16.mxu0 0
    %219 = vmatpush1.bf16.msra.mxu0 0
    %220 = vmatprep.subr.bf16.mxu0 0
    %221 = vmatpush1.bf16.msra.mxu0 0
    %222 = vmatprep.subr.bf16.mxu0 0
    %223 = vmatpush1.bf16.msra.mxu0 0
    %224 = vmatprep.subr.bf16.mxu0 0
    %225 = vmatpush1.bf16.msra.mxu0 0
    %226 = vmatprep.subr.bf16.mxu0 0
    %227 = vmatpush1.bf16.msra.mxu0 0
    %228 = vmatprep.subr.bf16.mxu0 0
    %229 = vmatpush1.bf16.msra.mxu0 0
    %230 = vmatprep.mubr.bf16.mxu0 0
    %231 = vmatmul.mubr.bf16.gmra.mrb[0].mxu0 %v196
    %v232 = vpop.f32.mrb[0].mxu0
    %v233 = vadd.f32 %v180, %v232
    %v234 = vpop.f32.mrb[0].mxu0
    %v235 = vpop.f32.mrb[0].mxu0
    %v236 = vpop.f32.mrb[0].mxu0
    %237 = vdwg.mxu0
    %v238 = vmax.f32 %v233, 0.0
    %v239 = vpack.c.bf16 %v238, %v238
    %v240 = vld [vmem:[#allocation7] sm:$0xff]
    %v241 = vld [vmem:[#allocation7 + $0x8] sm:$0xff]
    %v242 = vld [vmem:[#allocation7 + $0x10] sm:$0xff]
    %v243 = vld [vmem:[#allocation7 + $0x18] sm:$0xff]
    %v244 = vld [vmem:[#allocation7 + $0x20] sm:$0xff]
    %v245 = vld [vmem:[#allocation7 + $0x28] sm:$0xff]
    %v246 = vld [vmem:[#allocation7 + $0x30] sm:$0xff]
    %v247 = vld [vmem:[#allocation7 + $0x38] sm:$0xff]
    %v248 = vld [vmem:[#allocation7 + $0x40] sm:$0xff]
    %v249 = vld [vmem:[#allocation7 + $0x48] sm:$0xff]
    %v250 = vld [vmem:[#allocation7 + $0x50] sm:$0xff]
    %v251 = vld [vmem:[#allocation7 + $0x58] sm:$0xff]
    %v252 = vld [vmem:[#allocation7 + $0x60] sm:$0xff]
    %v253 = vld [vmem:[#allocation7 + $0x68] sm:$0xff]
    %v254 = vld [vmem:[#allocation7 + $0x70] sm:$0xff]
    %v255 = vld [vmem:[#allocation7 + $0x78] sm:$0xff]
    %v256 = vld [vmem:[#allocation7 + $0x80] sm:$0xff]
    %v257 = vld [vmem:[#allocation7 + $0x88] sm:$0xff]
    %v258 = vld [vmem:[#allocation7 + $0x90] sm:$0xff]
    %v259 = vld [vmem:[#allocation7 + $0x98] sm:$0xff]
    %v260 = vld [vmem:[#allocation7 + $0xa0] sm:$0xff]
    %v261 = vld [vmem:[#allocation7 + $0xa8] sm:$0xff]
    %v262 = vld [vmem:[#allocation7 + $0xb0] sm:$0xff]
    %v263 = vld [vmem:[#allocation7 + $0xb8] sm:$0xff]
    %v264 = vld [vmem:[#allocation7 + $0xc0] sm:$0xff]
    %v265 = vld [vmem:[#allocation7 + $0xc8] sm:$0xff]
    %v266 = vld [vmem:[#allocation7 + $0xd0] sm:$0xff]
    %v267 = vld [vmem:[#allocation7 + $0xd8] sm:$0xff]
    %v268 = vld [vmem:[#allocation7 + $0xe0] sm:$0xff]
    %v269 = vld [vmem:[#allocation7 + $0xe8] sm:$0xff]
    %v270 = vld [vmem:[#allocation7 + $0xf0] sm:$0xff]
    %v271 = vld [vmem:[#allocation7 + $0xf8] sm:$0xff]
    %v272 = vld [vmem:[%s4] sm:$0xf]
    %v274 = vlaneseq
    %v275 = vshrl.u32 %v274, 7
    %v276 = vsub.s32 0, %v275
    %v277 = vrot.slane %v272, %v276
    %v278 = vlaneseq
    %v279 = vshrl.u32 %v278, 7
    %v280 = vsub.s32 1, %v279
    %v281 = vrot.slane %v272, %v280
    %v282 = vlaneseq
    %v283 = vshrl.u32 %v282, 7
    %v284 = vsub.s32 2, %v283
    %v285 = vrot.slane %v272, %v284
    %v286 = vlaneseq
    %v287 = vshrl.u32 %v286, 7
    %v288 = vsub.s32 3, %v287
    %v289 = vrot.slane %v272, %v288
    %v326 = vunpack.c.l.b16 %v240
    %v327 = vunpack.c.h.b16 %v240
    %v328 = vunpack.c.l.b16 %v241
    %v329 = vunpack.c.h.b16 %v241
    %v330 = vunpack.c.l.b16 %v242
    %v331 = vunpack.c.h.b16 %v242
    %v332 = vunpack.c.l.b16 %v243
    %v333 = vunpack.c.h.b16 %v243
    %v334 = vunpack.c.l.b16 %v244
    %v335 = vunpack.c.h.b16 %v244
    %v336 = vunpack.c.l.b16 %v245
    %v337 = vunpack.c.h.b16 %v245
    %v338 = vunpack.c.l.b16 %v246
    %v339 = vunpack.c.h.b16 %v246
    %v340 = vunpack.c.l.b16 %v247
    %v341 = vunpack.c.h.b16 %v247
    %v342 = vunpack.c.l.b16 %v248
    %v343 = vunpack.c.h.b16 %v248
    %v344 = vunpack.c.l.b16 %v249
    %v345 = vunpack.c.h.b16 %v249
    %v346 = vunpack.c.l.b16 %v250
    %v347 = vunpack.c.h.b16 %v250
    %v348 = vunpack.c.l.b16 %v251
    %v349 = vunpack.c.h.b16 %v251
    %v350 = vunpack.c.l.b16 %v252
    %v351 = vunpack.c.h.b16 %v252
    %v352 = vunpack.c.l.b16 %v253
    %v353 = vunpack.c.h.b16 %v253
    %v354 = vunpack.c.l.b16 %v254
    %v355 = vunpack.c.h.b16 %v254
    %v356 = vunpack.c.l.b16 %v255
    %v357 = vunpack.c.h.b16 %v255
    %v358 = vunpack.c.l.b16 %v256
    %v359 = vunpack.c.h.b16 %v256
    %v360 = vunpack.c.l.b16 %v257
    %v361 = vunpack.c.h.b16 %v257
    %v362 = vunpack.c.l.b16 %v258
    %v363 = vunpack.c.h.b16 %v258
    %v364 = vunpack.c.l.b16 %v259
    %v365 = vunpack.c.h.b16 %v259
    %v366 = vunpack.c.l.b16 %v260
    %v367 = vunpack.c.h.b16 %v260
    %v368 = vunpack.c.l.b16 %v261
    %v369 = vunpack.c.h.b16 %v261
    %v370 = vunpack.c.l.b16 %v262
    %v371 = vunpack.c.h.b16 %v262
    %v372 = vunpack.c.l.b16 %v263
    %v373 = vunpack.c.h.b16 %v263
    %v374 = vunpack.c.l.b16 %v264
    %v375 = vunpack.c.h.b16 %v264
    %v376 = vunpack.c.l.b16 %v265
    %v377 = vunpack.c.h.b16 %v265
    %v378 = vunpack.c.l.b16 %v266
    %v379 = vunpack.c.h.b16 %v266
    %v380 = vunpack.c.l.b16 %v267
    %v381 = vunpack.c.h.b16 %v267
    %v382 = vunpack.c.l.b16 %v268
    %v383 = vunpack.c.h.b16 %v268
    %v384 = vunpack.c.l.b16 %v269
    %v385 = vunpack.c.h.b16 %v269
    %v386 = vunpack.c.l.b16 %v270
    %v387 = vunpack.c.h.b16 %v270
    %v388 = vunpack.c.l.b16 %v271
    %v389 = vunpack.c.h.b16 %v271
    %v390 = vpack.c.b16 %v330, %v326
    %v391 = vpack.c.b16 %v331, %v327
    %v392 = vpack.c.b16 %v332, %v328
    %v393 = vpack.c.b16 %v333, %v329
    %v394 = vpack.c.b16 %v338, %v334
    %v395 = vpack.c.b16 %v339, %v335
    %v396 = vpack.c.b16 %v340, %v336
    %v397 = vpack.c.b16 %v341, %v337
    %v398 = vpack.c.b16 %v346, %v342
    %v399 = vpack.c.b16 %v347, %v343
    %v400 = vpack.c.b16 %v348, %v344
    %v401 = vpack.c.b16 %v349, %v345
    %v402 = vpack.c.b16 %v354, %v350
    %v403 = vpack.c.b16 %v355, %v351
    %v404 = vpack.c.b16 %v356, %v352
    %v405 = vpack.c.b16 %v357, %v353
    %v406 = vpack.c.b16 %v362, %v358
    %v407 = vpack.c.b16 %v363, %v359
    %v408 = vpack.c.b16 %v364, %v360
    %v409 = vpack.c.b16 %v365, %v361
    %v410 = vpack.c.b16 %v370, %v366
    %v411 = vpack.c.b16 %v371, %v367
    %v412 = vpack.c.b16 %v372, %v368
    %v413 = vpack.c.b16 %v373, %v369
    %v414 = vpack.c.b16 %v378, %v374
    %v415 = vpack.c.b16 %v379, %v375
    %v416 = vpack.c.b16 %v380, %v376
    %v417 = vpack.c.b16 %v381, %v377
    %v418 = vpack.c.b16 %v386, %v382
    %v419 = vpack.c.b16 %v387, %v383
    %v420 = vpack.c.b16 %v388, %v384
    %v421 = vpack.c.b16 %v389, %v385
    %454 = vmatprep.subr.bf16.mxu0 %v391
    %455 = vmatpush1.bf16.msra.mxu0 %v390
    %456 = vmatprep.subr.bf16.mxu0 %v395
    %457 = vmatpush1.bf16.msra.mxu0 %v394
    %458 = vmatprep.subr.bf16.mxu0 %v399
    %459 = vmatpush1.bf16.msra.mxu0 %v398
    %460 = vmatprep.subr.bf16.mxu0 %v403
    %461 = vmatpush1.bf16.msra.mxu0 %v402
    %462 = vmatprep.subr.bf16.mxu0 %v407
    %463 = vmatpush1.bf16.msra.mxu0 %v406
    %464 = vmatprep.subr.bf16.mxu0 %v411
    %465 = vmatpush1.bf16.msra.mxu0 %v410
    %466 = vmatprep.subr.bf16.mxu0 %v415
    %467 = vmatpush1.bf16.msra.mxu0 %v414
    %468 = vmatprep.subr.bf16.mxu0 %v419
    %469 = vmatpush1.bf16.msra.mxu0 %v418
    %470 = vmatprep.subr.bf16.mxu0 0
    %471 = vmatpush1.bf16.msra.mxu0 0
    %472 = vmatprep.subr.bf16.mxu0 0
    %473 = vmatpush1.bf16.msra.mxu0 0
    %474 = vmatprep.subr.bf16.mxu0 0
    %475 = vmatpush1.bf16.msra.mxu0 0
    %476 = vmatprep.subr.bf16.mxu0 0
    %477 = vmatpush1.bf16.msra.mxu0 0
    %478 = vmatprep.subr.bf16.mxu0 0
    %479 = vmatpush1.bf16.msra.mxu0 0
    %480 = vmatprep.subr.bf16.mxu0 0
    %481 = vmatpush1.bf16.msra.mxu0 0
    %482 = vmatprep.subr.bf16.mxu0 0
    %483 = vmatpush1.bf16.msra.mxu0 0
    %484 = vmatprep.subr.bf16.mxu0 0
    %485 = vmatpush1.bf16.msra.mxu0 0
    %486 = vmatprep.mubr.bf16.mxu0 0
    %487 = vmatmul.mubr.bf16.gmra.mrb[0].mxu0 %v239
    %v488 = vpop.f32.mrb[0].mxu0
    %v489 = vadd.f32 %v277, %v488
    %v490 = vpop.f32.mrb[0].mxu0
    %v491 = vadd.f32 %v281, %v490
    %v492 = vpop.f32.mrb[0].mxu0
    %v493 = vpop.f32.mrb[0].mxu0
    %494 = vdwg.mxu0
    %495 = vmatprep.subr.bf16.mxu0 %v393
    %496 = vmatpush1.bf16.msra.mxu0 %v392
    %497 = vmatprep.subr.bf16.mxu0 %v397
    %498 = vmatpush1.bf16.msra.mxu0 %v396
    %499 = vmatprep.subr.bf16.mxu0 %v401
    %500 = vmatpush1.bf16.msra.mxu0 %v400
    %501 = vmatprep.subr.bf16.mxu0 %v405
    %502 = vmatpush1.bf16.msra.mxu0 %v404
    %503 = vmatprep.subr.bf16.mxu0 %v409
    %504 = vmatpush1.bf16.msra.mxu0 %v408
    %505 = vmatprep.subr.bf16.mxu0 %v413
    %506 = vmatpush1.bf16.msra.mxu0 %v412
    %507 = vmatprep.subr.bf16.mxu0 %v417
    %508 = vmatpush1.bf16.msra.mxu0 %v416
    %509 = vmatprep.subr.bf16.mxu0 %v421
    %510 = vmatpush1.bf16.msra.mxu0 %v420
    %511 = vmatprep.subr.bf16.mxu0 0
    %512 = vmatpush1.bf16.msra.mxu0 0
    %513 = vmatprep.subr.bf16.mxu0 0
    %514 = vmatpush1.bf16.msra.mxu0 0
    %515 = vmatprep.subr.bf16.mxu0 0
    %516 = vmatpush1.bf16.msra.mxu0 0
    %517 = vmatprep.subr.bf16.mxu0 0
    %518 = vmatpush1.bf16.msra.mxu0 0
    %519 = vmatprep.subr.bf16.mxu0 0
    %520 = vmatpush1.bf16.msra.mxu0 0
    %521 = vmatprep.subr.bf16.mxu0 0
    %522 = vmatpush1.bf16.msra.mxu0 0
    %523 = vmatprep.subr.bf16.mxu0 0
    %524 = vmatpush1.bf16.msra.mxu0 0
    %525 = vmatprep.subr.bf16.mxu0 0
    %526 = vmatpush1.bf16.msra.mxu0 0
    %527 = vmatprep.mubr.bf16.mxu0 0
    %528 = vmatmul.mubr.bf16.gmra.mrb[0].mxu0 %v239
    %v529 = vpop.f32.mrb[0].mxu0
    %v530 = vadd.f32 %v285, %v529
    %v531 = vpop.f32.mrb[0].mxu0
    %v532 = vadd.f32 %v289, %v531
    %v533 = vpop.f32.mrb[0].mxu0
    %v534 = vpop.f32.mrb[0].mxu0
    %535 = vdwg.mxu0
    %v536 = vmax.f32 %v489, 0.0
    %v537 = vmax.f32 %v491, 0.0
    %v538 = vmax.f32 %v530, 0.0
    %v539 = vmax.f32 %v532, 0.0
    %v540 = vpack.c.bf16 %v536, %v536
    %v541 = vpack.c.bf16 %v537, %v537
    %v542 = vpack.c.bf16 %v538, %v538
    %v543 = vpack.c.bf16 %v539, %v539
    %v544 = vld [vmem:[#allocation9] sm:$0xff]
    %v545 = vld [vmem:[#allocation9 + $0x8] sm:$0xff]
    %v546 = vld [vmem:[#allocation9 + $0x10] sm:$0xff]
    %v547 = vld [vmem:[#allocation9 + $0x18] sm:$0xff]
    %v548 = vld [vmem:[#allocation9 + $0x20] sm:$0xff]
    %v549 = vld [vmem:[#allocation9 + $0x28] sm:$0xff]
    %v550 = vld [vmem:[#allocation9 + $0x30] sm:$0xff]
    %v551 = vld [vmem:[#allocation9 + $0x38] sm:$0xff]
    %v552 = vld [vmem:[#allocation9 + $0x40] sm:$0xff]
    %v553 = vld [vmem:[#allocation9 + $0x48] sm:$0xff]
    %v554 = vld [vmem:[#allocation9 + $0x50] sm:$0xff]
    %v555 = vld [vmem:[#allocation9 + $0x58] sm:$0xff]
    %v556 = vld [vmem:[#allocation9 + $0x60] sm:$0xff]
    %v557 = vld [vmem:[#allocation9 + $0x68] sm:$0xff]
    %v558 = vld [vmem:[#allocation9 + $0x70] sm:$0xff]
    %v559 = vld [vmem:[#allocation9 + $0x78] sm:$0xff]
    %v560 = vld [vmem:[#allocation9 + $0x80] sm:$0xff]
    %v561 = vld [vmem:[#allocation9 + $0x88] sm:$0xff]
    %v562 = vld [vmem:[#allocation9 + $0x90] sm:$0xff]
    %v563 = vld [vmem:[#allocation9 + $0x98] sm:$0xff]
    %v564 = vld [vmem:[#allocation9 + $0xa0] sm:$0xff]
    %v565 = vld [vmem:[#allocation9 + $0xa8] sm:$0xff]
    %v566 = vld [vmem:[#allocation9 + $0xb0] sm:$0xff]
    %v567 = vld [vmem:[#allocation9 + $0xb8] sm:$0xff]
    %v568 = vld [vmem:[#allocation9 + $0xc0] sm:$0xff]
    %v569 = vld [vmem:[#allocation9 + $0xc8] sm:$0xff]
    %v570 = vld [vmem:[#allocation9 + $0xd0] sm:$0xff]
    %v571 = vld [vmem:[#allocation9 + $0xd8] sm:$0xff]
    %v572 = vld [vmem:[#allocation9 + $0xe0] sm:$0xff]
    %v573 = vld [vmem:[#allocation9 + $0xe8] sm:$0xff]
    %v574 = vld [vmem:[#allocation9 + $0xf0] sm:$0xff]
    %v575 = vld [vmem:[#allocation9 + $0xf8] sm:$0xff]
    %v576 = vld [vmem:[#allocation9 + $0x100] sm:$0xff]
    %v577 = vld [vmem:[#allocation9 + $0x108] sm:$0xff]
    %v578 = vld [vmem:[#allocation9 + $0x110] sm:$0xff]
    %v579 = vld [vmem:[#allocation9 + $0x118] sm:$0xff]
    %v580 = vld [vmem:[#allocation9 + $0x120] sm:$0xff]
    %v581 = vld [vmem:[#allocation9 + $0x128] sm:$0xff]
    %v582 = vld [vmem:[#allocation9 + $0x130] sm:$0xff]
    %v583 = vld [vmem:[#allocation9 + $0x138] sm:$0xff]
    %v584 = vld [vmem:[#allocation9 + $0x140] sm:$0xff]
    %v585 = vld [vmem:[#allocation9 + $0x148] sm:$0xff]
    %v586 = vld [vmem:[#allocation9 + $0x150] sm:$0xff]
    %v587 = vld [vmem:[#allocation9 + $0x158] sm:$0xff]
    %v588 = vld [vmem:[#allocation9 + $0x160] sm:$0xff]
    %v589 = vld [vmem:[#allocation9 + $0x168] sm:$0xff]
    %v590 = vld [vmem:[#allocation9 + $0x170] sm:$0xff]
    %v591 = vld [vmem:[#allocation9 + $0x178] sm:$0xff]
    %v592 = vld [vmem:[#allocation9 + $0x180] sm:$0xff]
    %v593 = vld [vmem:[#allocation9 + $0x188] sm:$0xff]
    %v594 = vld [vmem:[#allocation9 + $0x190] sm:$0xff]
    %v595 = vld [vmem:[#allocation9 + $0x198] sm:$0xff]
    %v596 = vld [vmem:[#allocation9 + $0x1a0] sm:$0xff]
    %v597 = vld [vmem:[#allocation9 + $0x1a8] sm:$0xff]
    %v598 = vld [vmem:[#allocation9 + $0x1b0] sm:$0xff]
    %v599 = vld [vmem:[#allocation9 + $0x1b8] sm:$0xff]
    %v600 = vld [vmem:[#allocation9 + $0x1c0] sm:$0xff]
    %v601 = vld [vmem:[#allocation9 + $0x1c8] sm:$0xff]
    %v602 = vld [vmem:[#allocation9 + $0x1d0] sm:$0xff]
    %v603 = vld [vmem:[#allocation9 + $0x1d8] sm:$0xff]
    %v604 = vld [vmem:[#allocation9 + $0x1e0] sm:$0xff]
    %v605 = vld [vmem:[#allocation9 + $0x1e8] sm:$0xff]
    %v606 = vld [vmem:[#allocation9 + $0x1f0] sm:$0xff]
    %v607 = vld [vmem:[#allocation9 + $0x1f8] sm:$0xff]
    %v608 = vld [vmem:[#allocation9 + $0x200] sm:$0xff]
    %v609 = vld [vmem:[#allocation9 + $0x208] sm:$0xff]
    %v610 = vld [vmem:[#allocation9 + $0x210] sm:$0xff]
    %v611 = vld [vmem:[#allocation9 + $0x218] sm:$0xff]
    %v612 = vld [vmem:[#allocation9 + $0x220] sm:$0xff]
    %v613 = vld [vmem:[#allocation9 + $0x228] sm:$0xff]
    %v614 = vld [vmem:[#allocation9 + $0x230] sm:$0xff]
    %v615 = vld [vmem:[#allocation9 + $0x238] sm:$0xff]
    %v616 = vld [vmem:[#allocation9 + $0x240] sm:$0xff]
    %v617 = vld [vmem:[#allocation9 + $0x248] sm:$0xff]
    %v618 = vld [vmem:[#allocation9 + $0x250] sm:$0xff]
    %v619 = vld [vmem:[#allocation9 + $0x258] sm:$0xff]
    %v620 = vld [vmem:[#allocation9 + $0x260] sm:$0xff]
    %v621 = vld [vmem:[#allocation9 + $0x268] sm:$0xff]
    %v622 = vld [vmem:[#allocation9 + $0x270] sm:$0xff]
    %v623 = vld [vmem:[#allocation9 + $0x278] sm:$0xff]
    %v624 = vld [vmem:[#allocation9 + $0x280] sm:$0xff]
    %v625 = vld [vmem:[#allocation9 + $0x288] sm:$0xff]
    %v626 = vld [vmem:[#allocation9 + $0x290] sm:$0xff]
    %v627 = vld [vmem:[#allocation9 + $0x298] sm:$0xff]
    %v628 = vld [vmem:[#allocation9 + $0x2a0] sm:$0xff]
    %v629 = vld [vmem:[#allocation9 + $0x2a8] sm:$0xff]
    %v630 = vld [vmem:[#allocation9 + $0x2b0] sm:$0xff]
    %v631 = vld [vmem:[#allocation9 + $0x2b8] sm:$0xff]
    %v632 = vld [vmem:[#allocation9 + $0x2c0] sm:$0xff]
    %v633 = vld [vmem:[#allocation9 + $0x2c8] sm:$0xff]
    %v634 = vld [vmem:[#allocation9 + $0x2d0] sm:$0xff]
    %v635 = vld [vmem:[#allocation9 + $0x2d8] sm:$0xff]
    %v636 = vld [vmem:[#allocation9 + $0x2e0] sm:$0xff]
    %v637 = vld [vmem:[#allocation9 + $0x2e8] sm:$0xff]
    %v638 = vld [vmem:[#allocation9 + $0x2f0] sm:$0xff]
    %v639 = vld [vmem:[#allocation9 + $0x2f8] sm:$0xff]
    %v640 = vld [vmem:[#allocation9 + $0x300] sm:$0xff]
    %v641 = vld [vmem:[#allocation9 + $0x308] sm:$0xff]
    %v642 = vld [vmem:[#allocation9 + $0x310] sm:$0xff]
    %v643 = vld [vmem:[#allocation9 + $0x318] sm:$0xff]
    %v644 = vld [vmem:[#allocation9 + $0x320] sm:$0xff]
    %v645 = vld [vmem:[#allocation9 + $0x328] sm:$0xff]
    %v646 = vld [vmem:[#allocation9 + $0x330] sm:$0xff]
    %v647 = vld [vmem:[#allocation9 + $0x338] sm:$0xff]
    %v648 = vld [vmem:[#allocation9 + $0x340] sm:$0xff]
    %v649 = vld [vmem:[#allocation9 + $0x348] sm:$0xff]
    %v650 = vld [vmem:[#allocation9 + $0x350] sm:$0xff]
    %v651 = vld [vmem:[#allocation9 + $0x358] sm:$0xff]
    %v652 = vld [vmem:[#allocation9 + $0x360] sm:$0xff]
    %v653 = vld [vmem:[#allocation9 + $0x368] sm:$0xff]
    %v654 = vld [vmem:[#allocation9 + $0x370] sm:$0xff]
    %v655 = vld [vmem:[#allocation9 + $0x378] sm:$0xff]
    %v656 = vld [vmem:[#allocation9 + $0x380] sm:$0xff]
    %v657 = vld [vmem:[#allocation9 + $0x388] sm:$0xff]
    %v658 = vld [vmem:[#allocation9 + $0x390] sm:$0xff]
    %v659 = vld [vmem:[#allocation9 + $0x398] sm:$0xff]
    %v660 = vld [vmem:[#allocation9 + $0x3a0] sm:$0xff]
    %v661 = vld [vmem:[#allocation9 + $0x3a8] sm:$0xff]
    %v662 = vld [vmem:[#allocation9 + $0x3b0] sm:$0xff]
    %v663 = vld [vmem:[#allocation9 + $0x3b8] sm:$0xff]
    %v664 = vld [vmem:[#allocation9 + $0x3c0] sm:$0xff]
    %v665 = vld [vmem:[#allocation9 + $0x3c8] sm:$0xff]
    %v666 = vld [vmem:[#allocation9 + $0x3d0] sm:$0xff]
    %v667 = vld [vmem:[#allocation9 + $0x3d8] sm:$0xff]
    %v668 = vld [vmem:[#allocation9 + $0x3e0] sm:$0xff]
    %v669 = vld [vmem:[#allocation9 + $0x3e8] sm:$0xff]
    %v670 = vld [vmem:[#allocation9 + $0x3f0] sm:$0xff]
    %v671 = vld [vmem:[#allocation9 + $0x3f8] sm:$0xff]
    %v672 = vld [vmem:[#allocation9 + $0x400] sm:$0xff]
    %v673 = vld [vmem:[#allocation9 + $0x408] sm:$0xff]
    %v674 = vld [vmem:[#allocation9 + $0x410] sm:$0xff]
    %v675 = vld [vmem:[#allocation9 + $0x418] sm:$0xff]
    %v676 = vld [vmem:[#allocation9 + $0x420] sm:$0xff]
    %v677 = vld [vmem:[#allocation9 + $0x428] sm:$0xff]
    %v678 = vld [vmem:[#allocation9 + $0x430] sm:$0xff]
    %v679 = vld [vmem:[#allocation9 + $0x438] sm:$0xff]
    %v680 = vld [vmem:[#allocation9 + $0x440] sm:$0xff]
    %v681 = vld [vmem:[#allocation9 + $0x448] sm:$0xff]
    %v682 = vld [vmem:[#allocation9 + $0x450] sm:$0xff]
    %v683 = vld [vmem:[#allocation9 + $0x458] sm:$0xff]
    %v684 = vld [vmem:[#allocation9 + $0x460] sm:$0xff]
    %v685 = vld [vmem:[#allocation9 + $0x468] sm:$0xff]
    %v686 = vld [vmem:[#allocation9 + $0x470] sm:$0xff]
    %v687 = vld [vmem:[#allocation9 + $0x478] sm:$0xff]
    %v688 = vld [vmem:[#allocation9 + $0x480] sm:$0xff]
    %v689 = vld [vmem:[#allocation9 + $0x488] sm:$0xff]
    %v690 = vld [vmem:[#allocation9 + $0x490] sm:$0xff]
    %v691 = vld [vmem:[#allocation9 + $0x498] sm:$0xff]
    %v692 = vld [vmem:[#allocation9 + $0x4a0] sm:$0xff]
    %v693 = vld [vmem:[#allocation9 + $0x4a8] sm:$0xff]
    %v694 = vld [vmem:[#allocation9 + $0x4b0] sm:$0xff]
    %v695 = vld [vmem:[#allocation9 + $0x4b8] sm:$0xff]
    %v696 = vld [vmem:[#allocation9 + $0x4c0] sm:$0xff]
    %v697 = vld [vmem:[#allocation9 + $0x4c8] sm:$0xff]
    %v698 = vld [vmem:[#allocation9 + $0x4d0] sm:$0xff]
    %v699 = vld [vmem:[#allocation9 + $0x4d8] sm:$0xff]
    %v700 = vld [vmem:[#allocation9 + $0x4e0] sm:$0xff]
    %v701 = vld [vmem:[#allocation9 + $0x4e8] sm:$0xff]
    %v702 = vld [vmem:[#allocation9 + $0x4f0] sm:$0xff]
    %v703 = vld [vmem:[#allocation9 + $0x4f8] sm:$0xff]
    %v704 = vld [vmem:[#allocation9 + $0x500] sm:$0xff]
    %v705 = vld [vmem:[#allocation9 + $0x508] sm:$0xff]
    %v706 = vld [vmem:[#allocation9 + $0x510] sm:$0xff]
    %v707 = vld [vmem:[#allocation9 + $0x518] sm:$0xff]
    %v708 = vld [vmem:[#allocation9 + $0x520] sm:$0xff]
    %v709 = vld [vmem:[#allocation9 + $0x528] sm:$0xff]
    %v710 = vld [vmem:[#allocation9 + $0x530] sm:$0xff]
    %v711 = vld [vmem:[#allocation9 + $0x538] sm:$0xff]
    %v712 = vld [vmem:[#allocation9 + $0x540] sm:$0xff]
    %v713 = vld [vmem:[#allocation9 + $0x548] sm:$0xff]
    %v714 = vld [vmem:[#allocation9 + $0x550] sm:$0xff]
    %v715 = vld [vmem:[#allocation9 + $0x558] sm:$0xff]
    %v716 = vld [vmem:[#allocation9 + $0x560] sm:$0xff]
    %v717 = vld [vmem:[#allocation9 + $0x568] sm:$0xff]
    %v718 = vld [vmem:[#allocation9 + $0x570] sm:$0xff]
    %v719 = vld [vmem:[#allocation9 + $0x578] sm:$0xff]
    %v720 = vld [vmem:[#allocation9 + $0x580] sm:$0xff]
    %v721 = vld [vmem:[#allocation9 + $0x588] sm:$0xff]
    %v722 = vld [vmem:[#allocation9 + $0x590] sm:$0xff]
    %v723 = vld [vmem:[#allocation9 + $0x598] sm:$0xff]
    %v724 = vld [vmem:[#allocation9 + $0x5a0] sm:$0xff]
    %v725 = vld [vmem:[#allocation9 + $0x5a8] sm:$0xff]
    %v726 = vld [vmem:[#allocation9 + $0x5b0] sm:$0xff]
    %v727 = vld [vmem:[#allocation9 + $0x5b8] sm:$0xff]
    %v728 = vld [vmem:[#allocation9 + $0x5c0] sm:$0xff]
    %v729 = vld [vmem:[#allocation9 + $0x5c8] sm:$0xff]
    %v730 = vld [vmem:[#allocation9 + $0x5d0] sm:$0xff]
    %v731 = vld [vmem:[#allocation9 + $0x5d8] sm:$0xff]
    %v732 = vld [vmem:[#allocation9 + $0x5e0] sm:$0xff]
    %v733 = vld [vmem:[#allocation9 + $0x5e8] sm:$0xff]
    %v734 = vld [vmem:[#allocation9 + $0x5f0] sm:$0xff]
    %v735 = vld [vmem:[#allocation9 + $0x5f8] sm:$0xff]
    %v736 = vld [vmem:[#allocation9 + $0x600] sm:$0xff]
    %v737 = vld [vmem:[#allocation9 + $0x608] sm:$0xff]
    %v738 = vld [vmem:[#allocation9 + $0x610] sm:$0xff]
    %v739 = vld [vmem:[#allocation9 + $0x618] sm:$0xff]
    %v740 = vld [vmem:[#allocation9 + $0x620] sm:$0xff]
    %v741 = vld [vmem:[#allocation9 + $0x628] sm:$0xff]
    %v742 = vld [vmem:[#allocation9 + $0x630] sm:$0xff]
    %v743 = vld [vmem:[#allocation9 + $0x638] sm:$0xff]
    %v744 = vld [vmem:[#allocation9 + $0x640] sm:$0xff]
    %v745 = vld [vmem:[#allocation9 + $0x648] sm:$0xff]
    %v746 = vld [vmem:[#allocation9 + $0x650] sm:$0xff]
    %v747 = vld [vmem:[#allocation9 + $0x658] sm:$0xff]
    %v748 = vld [vmem:[#allocation9 + $0x660] sm:$0xff]
    %v749 = vld [vmem:[#allocation9 + $0x668] sm:$0xff]
    %v750 = vld [vmem:[#allocation9 + $0x670] sm:$0xff]
    %v751 = vld [vmem:[#allocation9 + $0x678] sm:$0xff]
    %v752 = vld [vmem:[#allocation9 + $0x680] sm:$0xff]
    %v753 = vld [vmem:[#allocation9 + $0x688] sm:$0xff]
    %v754 = vld [vmem:[#allocation9 + $0x690] sm:$0xff]
    %v755 = vld [vmem:[#allocation9 + $0x698] sm:$0xff]
    %v756 = vld [vmem:[#allocation9 + $0x6a0] sm:$0xff]
    %v757 = vld [vmem:[#allocation9 + $0x6a8] sm:$0xff]
    %v758 = vld [vmem:[#allocation9 + $0x6b0] sm:$0xff]
    %v759 = vld [vmem:[#allocation9 + $0x6b8] sm:$0xff]
    %v760 = vld [vmem:[#allocation9 + $0x6c0] sm:$0xff]
    %v761 = vld [vmem:[#allocation9 + $0x6c8] sm:$0xff]
    %v762 = vld [vmem:[#allocation9 + $0x6d0] sm:$0xff]
    %v763 = vld [vmem:[#allocation9 + $0x6d8] sm:$0xff]
    %v764 = vld [vmem:[#allocation9 + $0x6e0] sm:$0xff]
    %v765 = vld [vmem:[#allocation9 + $0x6e8] sm:$0xff]
    %v766 = vld [vmem:[#allocation9 + $0x6f0] sm:$0xff]
    %v767 = vld [vmem:[#allocation9 + $0x6f8] sm:$0xff]
    %v768 = vld [vmem:[#allocation9 + $0x700] sm:$0xff]
    %v769 = vld [vmem:[#allocation9 + $0x708] sm:$0xff]
    %v770 = vld [vmem:[#allocation9 + $0x710] sm:$0xff]
    %v771 = vld [vmem:[#allocation9 + $0x718] sm:$0xff]
    %v772 = vld [vmem:[#allocation9 + $0x720] sm:$0xff]
    %v773 = vld [vmem:[#allocation9 + $0x728] sm:$0xff]
    %v774 = vld [vmem:[#allocation9 + $0x730] sm:$0xff]
    %v775 = vld [vmem:[#allocation9 + $0x738] sm:$0xff]
    %v776 = vld [vmem:[#allocation9 + $0x740] sm:$0xff]
    %v777 = vld [vmem:[#allocation9 + $0x748] sm:$0xff]
    %v778 = vld [vmem:[#allocation9 + $0x750] sm:$0xff]
    %v779 = vld [vmem:[#allocation9 + $0x758] sm:$0xff]
    %v780 = vld [vmem:[#allocation9 + $0x760] sm:$0xff]
    %v781 = vld [vmem:[#allocation9 + $0x768] sm:$0xff]
    %v782 = vld [vmem:[#allocation9 + $0x770] sm:$0xff]
    %v783 = vld [vmem:[#allocation9 + $0x778] sm:$0xff]
    %v784 = vld [vmem:[#allocation9 + $0x780] sm:$0xff]
    %v785 = vld [vmem:[#allocation9 + $0x788] sm:$0xff]
    %v786 = vld [vmem:[#allocation9 + $0x790] sm:$0xff]
    %v787 = vld [vmem:[#allocation9 + $0x798] sm:$0xff]
    %v788 = vld [vmem:[#allocation9 + $0x7a0] sm:$0xff]
    %v789 = vld [vmem:[#allocation9 + $0x7a8] sm:$0xff]
    %v790 = vld [vmem:[#allocation9 + $0x7b0] sm:$0xff]
    %v791 = vld [vmem:[#allocation9 + $0x7b8] sm:$0xff]
    %v792 = vld [vmem:[#allocation9 + $0x7c0] sm:$0xff]
    %v793 = vld [vmem:[#allocation9 + $0x7c8] sm:$0xff]
    %v794 = vld [vmem:[#allocation9 + $0x7d0] sm:$0xff]
    %v795 = vld [vmem:[#allocation9 + $0x7d8] sm:$0xff]
    %v796 = vld [vmem:[#allocation9 + $0x7e0] sm:$0xff]
    %v797 = vld [vmem:[#allocation9 + $0x7e8] sm:$0xff]
    %v798 = vld [vmem:[#allocation9 + $0x7f0] sm:$0xff]
    %v799 = vld [vmem:[#allocation9 + $0x7f8] sm:$0xff]
    %v800 = vld [vmem:[%s6] sm:$0xff]
    %v802 = vlaneseq
    %v803 = vshrl.u32 %v802, 7
    %v804 = vsub.s32 0, %v803
    %v805 = vrot.slane %v800, %v804
    %v806 = vlaneseq
    %v807 = vshrl.u32 %v806, 7
    %v808 = vsub.s32 1, %v807
    %v809 = vrot.slane %v800, %v808
    %v810 = vlaneseq
    %v811 = vshrl.u32 %v810, 7
    %v812 = vsub.s32 2, %v811
    %v813 = vrot.slane %v800, %v812
    %v814 = vlaneseq
    %v815 = vshrl.u32 %v814, 7
    %v816 = vsub.s32 3, %v815
    %v817 = vrot.slane %v800, %v816
    %v818 = vlaneseq
    %v819 = vshrl.u32 %v818, 7
    %v820 = vsub.s32 4, %v819
    %v821 = vrot.slane %v800, %v820
    %v822 = vlaneseq
    %v823 = vshrl.u32 %v822, 7
    %v824 = vsub.s32 5, %v823
    %v825 = vrot.slane %v800, %v824
    %v826 = vlaneseq
    %v827 = vshrl.u32 %v826, 7
    %v828 = vsub.s32 6, %v827
    %v829 = vrot.slane %v800, %v828
    %v830 = vlaneseq
    %v831 = vshrl.u32 %v830, 7
    %v832 = vsub.s32 7, %v831
    %v833 = vrot.slane %v800, %v832
    %v1098 = vunpack.c.l.b16 %v544
    %v1099 = vunpack.c.h.b16 %v544
    %v1100 = vunpack.c.l.b16 %v545
    %v1101 = vunpack.c.h.b16 %v545
    %v1102 = vunpack.c.l.b16 %v546
    %v1103 = vunpack.c.h.b16 %v546
    %v1104 = vunpack.c.l.b16 %v547
    %v1105 = vunpack.c.h.b16 %v547
    %v1106 = vunpack.c.l.b16 %v548
    %v1107 = vunpack.c.h.b16 %v548
    %v1108 = vunpack.c.l.b16 %v549
    %v1109 = vunpack.c.h.b16 %v549
    %v1110 = vunpack.c.l.b16 %v550
    %v1111 = vunpack.c.h.b16 %v550
    %v1112 = vunpack.c.l.b16 %v551
    %v1113 = vunpack.c.h.b16 %v551
    %v1114 = vunpack.c.l.b16 %v552
    %v1115 = vunpack.c.h.b16 %v552
    %v1116 = vunpack.c.l.b16 %v553
    %v1117 = vunpack.c.h.b16 %v553
    %v1118 = vunpack.c.l.b16 %v554
    %v1119 = vunpack.c.h.b16 %v554
    %v1120 = vunpack.c.l.b16 %v555
    %v1121 = vunpack.c.h.b16 %v555
    %v1122 = vunpack.c.l.b16 %v556
    %v1123 = vunpack.c.h.b16 %v556
    %v1124 = vunpack.c.l.b16 %v557
    %v1125 = vunpack.c.h.b16 %v557
    %v1126 = vunpack.c.l.b16 %v558
    %v1127 = vunpack.c.h.b16 %v558
    %v1128 = vunpack.c.l.b16 %v559
    %v1129 = vunpack.c.h.b16 %v559
    %v1130 = vunpack.c.l.b16 %v560
    %v1131 = vunpack.c.h.b16 %v560
    %v1132 = vunpack.c.l.b16 %v561
    %v1133 = vunpack.c.h.b16 %v561
    %v1134 = vunpack.c.l.b16 %v562
    %v1135 = vunpack.c.h.b16 %v562
    %v1136 = vunpack.c.l.b16 %v563
    %v1137 = vunpack.c.h.b16 %v563
    %v1138 = vunpack.c.l.b16 %v564
    %v1139 = vunpack.c.h.b16 %v564
    %v1140 = vunpack.c.l.b16 %v565
    %v1141 = vunpack.c.h.b16 %v565
    %v1142 = vunpack.c.l.b16 %v566
    %v1143 = vunpack.c.h.b16 %v566
    %v1144 = vunpack.c.l.b16 %v567
    %v1145 = vunpack.c.h.b16 %v567
    %v1146 = vunpack.c.l.b16 %v568
    %v1147 = vunpack.c.h.b16 %v568
    %v1148 = vunpack.c.l.b16 %v569
    %v1149 = vunpack.c.h.b16 %v569
    %v1150 = vunpack.c.l.b16 %v570
    %v1151 = vunpack.c.h.b16 %v570
    %v1152 = vunpack.c.l.b16 %v571
    %v1153 = vunpack.c.h.b16 %v571
    %v1154 = vunpack.c.l.b16 %v572
    %v1155 = vunpack.c.h.b16 %v572
    %v1156 = vunpack.c.l.b16 %v573
    %v1157 = vunpack.c.h.b16 %v573
    %v1158 = vunpack.c.l.b16 %v574
    %v1159 = vunpack.c.h.b16 %v574
    %v1160 = vunpack.c.l.b16 %v575
    %v1161 = vunpack.c.h.b16 %v575
    %v1162 = vunpack.c.l.b16 %v576
    %v1163 = vunpack.c.h.b16 %v576
    %v1164 = vunpack.c.l.b16 %v577
    %v1165 = vunpack.c.h.b16 %v577
    %v1166 = vunpack.c.l.b16 %v578
    %v1167 = vunpack.c.h.b16 %v578
    %v1168 = vunpack.c.l.b16 %v579
    %v1169 = vunpack.c.h.b16 %v579
    %v1170 = vunpack.c.l.b16 %v580
    %v1171 = vunpack.c.h.b16 %v580
    %v1172 = vunpack.c.l.b16 %v581
    %v1173 = vunpack.c.h.b16 %v581
    %v1174 = vunpack.c.l.b16 %v582
    %v1175 = vunpack.c.h.b16 %v582
    %v1176 = vunpack.c.l.b16 %v583
    %v1177 = vunpack.c.h.b16 %v583
    %v1178 = vunpack.c.l.b16 %v584
    %v1179 = vunpack.c.h.b16 %v584
    %v1180 = vunpack.c.l.b16 %v585
    %v1181 = vunpack.c.h.b16 %v585
    %v1182 = vunpack.c.l.b16 %v586
    %v1183 = vunpack.c.h.b16 %v586
    %v1184 = vunpack.c.l.b16 %v587
    %v1185 = vunpack.c.h.b16 %v587
    %v1186 = vunpack.c.l.b16 %v588
    %v1187 = vunpack.c.h.b16 %v588
    %v1188 = vunpack.c.l.b16 %v589
    %v1189 = vunpack.c.h.b16 %v589
    %v1190 = vunpack.c.l.b16 %v590
    %v1191 = vunpack.c.h.b16 %v590
    %v1192 = vunpack.c.l.b16 %v591
    %v1193 = vunpack.c.h.b16 %v591
    %v1194 = vunpack.c.l.b16 %v592
    %v1195 = vunpack.c.h.b16 %v592
    %v1196 = vunpack.c.l.b16 %v593
    %v1197 = vunpack.c.h.b16 %v593
    %v1198 = vunpack.c.l.b16 %v594
    %v1199 = vunpack.c.h.b16 %v594
    %v1200 = vunpack.c.l.b16 %v595
    %v1201 = vunpack.c.h.b16 %v595
    %v1202 = vunpack.c.l.b16 %v596
    %v1203 = vunpack.c.h.b16 %v596
    %v1204 = vunpack.c.l.b16 %v597
    %v1205 = vunpack.c.h.b16 %v597
    %v1206 = vunpack.c.l.b16 %v598
    %v1207 = vunpack.c.h.b16 %v598
    %v1208 = vunpack.c.l.b16 %v599
    %v1209 = vunpack.c.h.b16 %v599
    %v1210 = vunpack.c.l.b16 %v600
    %v1211 = vunpack.c.h.b16 %v600
    %v1212 = vunpack.c.l.b16 %v601
    %v1213 = vunpack.c.h.b16 %v601
    %v1214 = vunpack.c.l.b16 %v602
    %v1215 = vunpack.c.h.b16 %v602
    %v1216 = vunpack.c.l.b16 %v603
    %v1217 = vunpack.c.h.b16 %v603
    %v1218 = vunpack.c.l.b16 %v604
    %v1219 = vunpack.c.h.b16 %v604
    %v1220 = vunpack.c.l.b16 %v605
    %v1221 = vunpack.c.h.b16 %v605
    %v1222 = vunpack.c.l.b16 %v606
    %v1223 = vunpack.c.h.b16 %v606
    %v1224 = vunpack.c.l.b16 %v607
    %v1225 = vunpack.c.h.b16 %v607
    %v1226 = vunpack.c.l.b16 %v608
    %v1227 = vunpack.c.h.b16 %v608
    %v1228 = vunpack.c.l.b16 %v609
    %v1229 = vunpack.c.h.b16 %v609
    %v1230 = vunpack.c.l.b16 %v610
    %v1231 = vunpack.c.h.b16 %v610
    %v1232 = vunpack.c.l.b16 %v611
    %v1233 = vunpack.c.h.b16 %v611
    %v1234 = vunpack.c.l.b16 %v612
    %v1235 = vunpack.c.h.b16 %v612
    %v1236 = vunpack.c.l.b16 %v613
    %v1237 = vunpack.c.h.b16 %v613
    %v1238 = vunpack.c.l.b16 %v614
    %v1239 = vunpack.c.h.b16 %v614
    %v1240 = vunpack.c.l.b16 %v615
    %v1241 = vunpack.c.h.b16 %v615
    %v1242 = vunpack.c.l.b16 %v616
    %v1243 = vunpack.c.h.b16 %v616
    %v1244 = vunpack.c.l.b16 %v617
    %v1245 = vunpack.c.h.b16 %v617
    %v1246 = vunpack.c.l.b16 %v618
    %v1247 = vunpack.c.h.b16 %v618
    %v1248 = vunpack.c.l.b16 %v619
    %v1249 = vunpack.c.h.b16 %v619
    %v1250 = vunpack.c.l.b16 %v620
    %v1251 = vunpack.c.h.b16 %v620
    %v1252 = vunpack.c.l.b16 %v621
    %v1253 = vunpack.c.h.b16 %v621
    %v1254 = vunpack.c.l.b16 %v622
    %v1255 = vunpack.c.h.b16 %v622
    %v1256 = vunpack.c.l.b16 %v623
    %v1257 = vunpack.c.h.b16 %v623
    %v1258 = vunpack.c.l.b16 %v624
    %v1259 = vunpack.c.h.b16 %v624
    %v1260 = vunpack.c.l.b16 %v625
    %v1261 = vunpack.c.h.b16 %v625
    %v1262 = vunpack.c.l.b16 %v626
    %v1263 = vunpack.c.h.b16 %v626
    %v1264 = vunpack.c.l.b16 %v627
    %v1265 = vunpack.c.h.b16 %v627
    %v1266 = vunpack.c.l.b16 %v628
    %v1267 = vunpack.c.h.b16 %v628
    %v1268 = vunpack.c.l.b16 %v629
    %v1269 = vunpack.c.h.b16 %v629
    %v1270 = vunpack.c.l.b16 %v630
    %v1271 = vunpack.c.h.b16 %v630
    %v1272 = vunpack.c.l.b16 %v631
    %v1273 = vunpack.c.h.b16 %v631
    %v1274 = vunpack.c.l.b16 %v632
    %v1275 = vunpack.c.h.b16 %v632
    %v1276 = vunpack.c.l.b16 %v633
    %v1277 = vunpack.c.h.b16 %v633
    %v1278 = vunpack.c.l.b16 %v634
    %v1279 = vunpack.c.h.b16 %v634
    %v1280 = vunpack.c.l.b16 %v635
    %v1281 = vunpack.c.h.b16 %v635
    %v1282 = vunpack.c.l.b16 %v636
    %v1283 = vunpack.c.h.b16 %v636
    %v1284 = vunpack.c.l.b16 %v637
    %v1285 = vunpack.c.h.b16 %v637
    %v1286 = vunpack.c.l.b16 %v638
    %v1287 = vunpack.c.h.b16 %v638
    %v1288 = vunpack.c.l.b16 %v639
    %v1289 = vunpack.c.h.b16 %v639
    %v1290 = vunpack.c.l.b16 %v640
    %v1291 = vunpack.c.h.b16 %v640
    %v1292 = vunpack.c.l.b16 %v641
    %v1293 = vunpack.c.h.b16 %v641
    %v1294 = vunpack.c.l.b16 %v642
    %v1295 = vunpack.c.h.b16 %v642
    %v1296 = vunpack.c.l.b16 %v643
    %v1297 = vunpack.c.h.b16 %v643
    %v1298 = vunpack.c.l.b16 %v644
    %v1299 = vunpack.c.h.b16 %v644
    %v1300 = vunpack.c.l.b16 %v645
    %v1301 = vunpack.c.h.b16 %v645
    %v1302 = vunpack.c.l.b16 %v646
    %v1303 = vunpack.c.h.b16 %v646
    %v1304 = vunpack.c.l.b16 %v647
    %v1305 = vunpack.c.h.b16 %v647
    %v1306 = vunpack.c.l.b16 %v648
    %v1307 = vunpack.c.h.b16 %v648
    %v1308 = vunpack.c.l.b16 %v649
    %v1309 = vunpack.c.h.b16 %v649
    %v1310 = vunpack.c.l.b16 %v650
    %v1311 = vunpack.c.h.b16 %v650
    %v1312 = vunpack.c.l.b16 %v651
    %v1313 = vunpack.c.h.b16 %v651
    %v1314 = vunpack.c.l.b16 %v652
    %v1315 = vunpack.c.h.b16 %v652
    %v1316 = vunpack.c.l.b16 %v653
    %v1317 = vunpack.c.h.b16 %v653
    %v1318 = vunpack.c.l.b16 %v654
    %v1319 = vunpack.c.h.b16 %v654
    %v1320 = vunpack.c.l.b16 %v655
    %v1321 = vunpack.c.h.b16 %v655
    %v1322 = vunpack.c.l.b16 %v656
    %v1323 = vunpack.c.h.b16 %v656
    %v1324 = vunpack.c.l.b16 %v657
    %v1325 = vunpack.c.h.b16 %v657
    %v1326 = vunpack.c.l.b16 %v658
    %v1327 = vunpack.c.h.b16 %v658
    %v1328 = vunpack.c.l.b16 %v659
    %v1329 = vunpack.c.h.b16 %v659
    %v1330 = vunpack.c.l.b16 %v660
    %v1331 = vunpack.c.h.b16 %v660
    %v1332 = vunpack.c.l.b16 %v661
    %v1333 = vunpack.c.h.b16 %v661
    %v1334 = vunpack.c.l.b16 %v662
    %v1335 = vunpack.c.h.b16 %v662
    %v1336 = vunpack.c.l.b16 %v663
    %v1337 = vunpack.c.h.b16 %v663
    %v1338 = vunpack.c.l.b16 %v664
    %v1339 = vunpack.c.h.b16 %v664
    %v1340 = vunpack.c.l.b16 %v665
    %v1341 = vunpack.c.h.b16 %v665
    %v1342 = vunpack.c.l.b16 %v666
    %v1343 = vunpack.c.h.b16 %v666
    %v1344 = vunpack.c.l.b16 %v667
    %v1345 = vunpack.c.h.b16 %v667
    %v1346 = vunpack.c.l.b16 %v668
    %v1347 = vunpack.c.h.b16 %v668
    %v1348 = vunpack.c.l.b16 %v669
    %v1349 = vunpack.c.h.b16 %v669
    %v1350 = vunpack.c.l.b16 %v670
    %v1351 = vunpack.c.h.b16 %v670
    %v1352 = vunpack.c.l.b16 %v671
    %v1353 = vunpack.c.h.b16 %v671
    %v1354 = vunpack.c.l.b16 %v672
    %v1355 = vunpack.c.h.b16 %v672
    %v1356 = vunpack.c.l.b16 %v673
    %v1357 = vunpack.c.h.b16 %v673
    %v1358 = vunpack.c.l.b16 %v674
    %v1359 = vunpack.c.h.b16 %v674
    %v1360 = vunpack.c.l.b16 %v675
    %v1361 = vunpack.c.h.b16 %v675
    %v1362 = vunpack.c.l.b16 %v676
    %v1363 = vunpack.c.h.b16 %v676
    %v1364 = vunpack.c.l.b16 %v677
    %v1365 = vunpack.c.h.b16 %v677
    %v1366 = vunpack.c.l.b16 %v678
    %v1367 = vunpack.c.h.b16 %v678
    %v1368 = vunpack.c.l.b16 %v679
    %v1369 = vunpack.c.h.b16 %v679
    %v1370 = vunpack.c.l.b16 %v680
    %v1371 = vunpack.c.h.b16 %v680
    %v1372 = vunpack.c.l.b16 %v681
    %v1373 = vunpack.c.h.b16 %v681
    %v1374 = vunpack.c.l.b16 %v682
    %v1375 = vunpack.c.h.b16 %v682
    %v1376 = vunpack.c.l.b16 %v683
    %v1377 = vunpack.c.h.b16 %v683
    %v1378 = vunpack.c.l.b16 %v684
    %v1379 = vunpack.c.h.b16 %v684
    %v1380 = vunpack.c.l.b16 %v685
    %v1381 = vunpack.c.h.b16 %v685
    %v1382 = vunpack.c.l.b16 %v686
    %v1383 = vunpack.c.h.b16 %v686
    %v1384 = vunpack.c.l.b16 %v687
    %v1385 = vunpack.c.h.b16 %v687
    %v1386 = vunpack.c.l.b16 %v688
    %v1387 = vunpack.c.h.b16 %v688
    %v1388 = vunpack.c.l.b16 %v689
    %v1389 = vunpack.c.h.b16 %v689
    %v1390 = vunpack.c.l.b16 %v690
    %v1391 = vunpack.c.h.b16 %v690
    %v1392 = vunpack.c.l.b16 %v691
    %v1393 = vunpack.c.h.b16 %v691
    %v1394 = vunpack.c.l.b16 %v692
    %v1395 = vunpack.c.h.b16 %v692
    %v1396 = vunpack.c.l.b16 %v693
    %v1397 = vunpack.c.h.b16 %v693
    %v1398 = vunpack.c.l.b16 %v694
    %v1399 = vunpack.c.h.b16 %v694
    %v1400 = vunpack.c.l.b16 %v695
    %v1401 = vunpack.c.h.b16 %v695
    %v1402 = vunpack.c.l.b16 %v696
    %v1403 = vunpack.c.h.b16 %v696
    %v1404 = vunpack.c.l.b16 %v697
    %v1405 = vunpack.c.h.b16 %v697
    %v1406 = vunpack.c.l.b16 %v698
    %v1407 = vunpack.c.h.b16 %v698
    %v1408 = vunpack.c.l.b16 %v699
    %v1409 = vunpack.c.h.b16 %v699
    %v1410 = vunpack.c.l.b16 %v700
    %v1411 = vunpack.c.h.b16 %v700
    %v1412 = vunpack.c.l.b16 %v701
    %v1413 = vunpack.c.h.b16 %v701
    %v1414 = vunpack.c.l.b16 %v702
    %v1415 = vunpack.c.h.b16 %v702
    %v1416 = vunpack.c.l.b16 %v703
    %v1417 = vunpack.c.h.b16 %v703
    %v1418 = vunpack.c.l.b16 %v704
    %v1419 = vunpack.c.h.b16 %v704
    %v1420 = vunpack.c.l.b16 %v705
    %v1421 = vunpack.c.h.b16 %v705
    %v1422 = vunpack.c.l.b16 %v706
    %v1423 = vunpack.c.h.b16 %v706
    %v1424 = vunpack.c.l.b16 %v707
    %v1425 = vunpack.c.h.b16 %v707
    %v1426 = vunpack.c.l.b16 %v708
    %v1427 = vunpack.c.h.b16 %v708
    %v1428 = vunpack.c.l.b16 %v709
    %v1429 = vunpack.c.h.b16 %v709
    %v1430 = vunpack.c.l.b16 %v710
    %v1431 = vunpack.c.h.b16 %v710
    %v1432 = vunpack.c.l.b16 %v711
    %v1433 = vunpack.c.h.b16 %v711
    %v1434 = vunpack.c.l.b16 %v712
    %v1435 = vunpack.c.h.b16 %v712
    %v1436 = vunpack.c.l.b16 %v713
    %v1437 = vunpack.c.h.b16 %v713
    %v1438 = vunpack.c.l.b16 %v714
    %v1439 = vunpack.c.h.b16 %v714
    %v1440 = vunpack.c.l.b16 %v715
    %v1441 = vunpack.c.h.b16 %v715
    %v1442 = vunpack.c.l.b16 %v716
    %v1443 = vunpack.c.h.b16 %v716
    %v1444 = vunpack.c.l.b16 %v717
    %v1445 = vunpack.c.h.b16 %v717
    %v1446 = vunpack.c.l.b16 %v718
    %v1447 = vunpack.c.h.b16 %v718
    %v1448 = vunpack.c.l.b16 %v719
    %v1449 = vunpack.c.h.b16 %v719
    %v1450 = vunpack.c.l.b16 %v720
    %v1451 = vunpack.c.h.b16 %v720
    %v1452 = vunpack.c.l.b16 %v721
    %v1453 = vunpack.c.h.b16 %v721
    %v1454 = vunpack.c.l.b16 %v722
    %v1455 = vunpack.c.h.b16 %v722
    %v1456 = vunpack.c.l.b16 %v723
    %v1457 = vunpack.c.h.b16 %v723
    %v1458 = vunpack.c.l.b16 %v724
    %v1459 = vunpack.c.h.b16 %v724
    %v1460 = vunpack.c.l.b16 %v725
    %v1461 = vunpack.c.h.b16 %v725
    %v1462 = vunpack.c.l.b16 %v726
    %v1463 = vunpack.c.h.b16 %v726
    %v1464 = vunpack.c.l.b16 %v727
    %v1465 = vunpack.c.h.b16 %v727
    %v1466 = vunpack.c.l.b16 %v728
    %v1467 = vunpack.c.h.b16 %v728
    %v1468 = vunpack.c.l.b16 %v729
    %v1469 = vunpack.c.h.b16 %v729
    %v1470 = vunpack.c.l.b16 %v730
    %v1471 = vunpack.c.h.b16 %v730
    %v1472 = vunpack.c.l.b16 %v731
    %v1473 = vunpack.c.h.b16 %v731
    %v1474 = vunpack.c.l.b16 %v732
    %v1475 = vunpack.c.h.b16 %v732
    %v1476 = vunpack.c.l.b16 %v733
    %v1477 = vunpack.c.h.b16 %v733
    %v1478 = vunpack.c.l.b16 %v734
    %v1479 = vunpack.c.h.b16 %v734
    %v1480 = vunpack.c.l.b16 %v735
    %v1481 = vunpack.c.h.b16 %v735
    %v1482 = vunpack.c.l.b16 %v736
    %v1483 = vunpack.c.h.b16 %v736
    %v1484 = vunpack.c.l.b16 %v737
    %v1485 = vunpack.c.h.b16 %v737
    %v1486 = vunpack.c.l.b16 %v738
    %v1487 = vunpack.c.h.b16 %v738
    %v1488 = vunpack.c.l.b16 %v739
    %v1489 = vunpack.c.h.b16 %v739
    %v1490 = vunpack.c.l.b16 %v740
    %v1491 = vunpack.c.h.b16 %v740
    %v1492 = vunpack.c.l.b16 %v741
    %v1493 = vunpack.c.h.b16 %v741
    %v1494 = vunpack.c.l.b16 %v742
    %v1495 = vunpack.c.h.b16 %v742
    %v1496 = vunpack.c.l.b16 %v743
    %v1497 = vunpack.c.h.b16 %v743
    %v1498 = vunpack.c.l.b16 %v744
    %v1499 = vunpack.c.h.b16 %v744
    %v1500 = vunpack.c.l.b16 %v745
    %v1501 = vunpack.c.h.b16 %v745
    %v1502 = vunpack.c.l.b16 %v746
    %v1503 = vunpack.c.h.b16 %v746
    %v1504 = vunpack.c.l.b16 %v747
    %v1505 = vunpack.c.h.b16 %v747
    %v1506 = vunpack.c.l.b16 %v748
    %v1507 = vunpack.c.h.b16 %v748
    %v1508 = vunpack.c.l.b16 %v749
    %v1509 = vunpack.c.h.b16 %v749
    %v1510 = vunpack.c.l.b16 %v750
    %v1511 = vunpack.c.h.b16 %v750
    %v1512 = vunpack.c.l.b16 %v751
    %v1513 = vunpack.c.h.b16 %v751
    %v1514 = vunpack.c.l.b16 %v752
    %v1515 = vunpack.c.h.b16 %v752
    %v1516 = vunpack.c.l.b16 %v753
    %v1517 = vunpack.c.h.b16 %v753
    %v1518 = vunpack.c.l.b16 %v754
    %v1519 = vunpack.c.h.b16 %v754
    %v1520 = vunpack.c.l.b16 %v755
    %v1521 = vunpack.c.h.b16 %v755
    %v1522 = vunpack.c.l.b16 %v756
    %v1523 = vunpack.c.h.b16 %v756
    %v1524 = vunpack.c.l.b16 %v757
    %v1525 = vunpack.c.h.b16 %v757
    %v1526 = vunpack.c.l.b16 %v758
    %v1527 = vunpack.c.h.b16 %v758
    %v1528 = vunpack.c.l.b16 %v759
    %v1529 = vunpack.c.h.b16 %v759
    %v1530 = vunpack.c.l.b16 %v760
    %v1531 = vunpack.c.h.b16 %v760
    %v1532 = vunpack.c.l.b16 %v761
    %v1533 = vunpack.c.h.b16 %v761
    %v1534 = vunpack.c.l.b16 %v762
    %v1535 = vunpack.c.h.b16 %v762
    %v1536 = vunpack.c.l.b16 %v763
    %v1537 = vunpack.c.h.b16 %v763
    %v1538 = vunpack.c.l.b16 %v764
    %v1539 = vunpack.c.h.b16 %v764
    %v1540 = vunpack.c.l.b16 %v765
    %v1541 = vunpack.c.h.b16 %v765
    %v1542 = vunpack.c.l.b16 %v766
    %v1543 = vunpack.c.h.b16 %v766
    %v1544 = vunpack.c.l.b16 %v767
    %v1545 = vunpack.c.h.b16 %v767
    %v1546 = vunpack.c.l.b16 %v768
    %v1547 = vunpack.c.h.b16 %v768
    %v1548 = vunpack.c.l.b16 %v769
    %v1549 = vunpack.c.h.b16 %v769
    %v1550 = vunpack.c.l.b16 %v770
    %v1551 = vunpack.c.h.b16 %v770
    %v1552 = vunpack.c.l.b16 %v771
    %v1553 = vunpack.c.h.b16 %v771
    %v1554 = vunpack.c.l.b16 %v772
    %v1555 = vunpack.c.h.b16 %v772
    %v1556 = vunpack.c.l.b16 %v773
    %v1557 = vunpack.c.h.b16 %v773
    %v1558 = vunpack.c.l.b16 %v774
    %v1559 = vunpack.c.h.b16 %v774
    %v1560 = vunpack.c.l.b16 %v775
    %v1561 = vunpack.c.h.b16 %v775
    %v1562 = vunpack.c.l.b16 %v776
    %v1563 = vunpack.c.h.b16 %v776
    %v1564 = vunpack.c.l.b16 %v777
    %v1565 = vunpack.c.h.b16 %v777
    %v1566 = vunpack.c.l.b16 %v778
    %v1567 = vunpack.c.h.b16 %v778
    %v1568 = vunpack.c.l.b16 %v779
    %v1569 = vunpack.c.h.b16 %v779
    %v1570 = vunpack.c.l.b16 %v780
    %v1571 = vunpack.c.h.b16 %v780
    %v1572 = vunpack.c.l.b16 %v781
    %v1573 = vunpack.c.h.b16 %v781
    %v1574 = vunpack.c.l.b16 %v782
    %v1575 = vunpack.c.h.b16 %v782
    %v1576 = vunpack.c.l.b16 %v783
    %v1577 = vunpack.c.h.b16 %v783
    %v1578 = vunpack.c.l.b16 %v784
    %v1579 = vunpack.c.h.b16 %v784
    %v1580 = vunpack.c.l.b16 %v785
    %v1581 = vunpack.c.h.b16 %v785
    %v1582 = vunpack.c.l.b16 %v786
    %v1583 = vunpack.c.h.b16 %v786
    %v1584 = vunpack.c.l.b16 %v787
    %v1585 = vunpack.c.h.b16 %v787
    %v1586 = vunpack.c.l.b16 %v788
    %v1587 = vunpack.c.h.b16 %v788
    %v1588 = vunpack.c.l.b16 %v789
    %v1589 = vunpack.c.h.b16 %v789
    %v1590 = vunpack.c.l.b16 %v790
    %v1591 = vunpack.c.h.b16 %v790
    %v1592 = vunpack.c.l.b16 %v791
    %v1593 = vunpack.c.h.b16 %v791
    %v1594 = vunpack.c.l.b16 %v792
    %v1595 = vunpack.c.h.b16 %v792
    %v1596 = vunpack.c.l.b16 %v793
    %v1597 = vunpack.c.h.b16 %v793
    %v1598 = vunpack.c.l.b16 %v794
    %v1599 = vunpack.c.h.b16 %v794
    %v1600 = vunpack.c.l.b16 %v795
    %v1601 = vunpack.c.h.b16 %v795
    %v1602 = vunpack.c.l.b16 %v796
    %v1603 = vunpack.c.h.b16 %v796
    %v1604 = vunpack.c.l.b16 %v797
    %v1605 = vunpack.c.h.b16 %v797
    %v1606 = vunpack.c.l.b16 %v798
    %v1607 = vunpack.c.h.b16 %v798
    %v1608 = vunpack.c.l.b16 %v799
    %v1609 = vunpack.c.h.b16 %v799
    %v1610 = vpack.c.b16 %v1106, %v1098
    %v1611 = vpack.c.b16 %v1107, %v1099
    %v1612 = vpack.c.b16 %v1108, %v1100
    %v1613 = vpack.c.b16 %v1109, %v1101
    %v1614 = vpack.c.b16 %v1110, %v1102
    %v1615 = vpack.c.b16 %v1111, %v1103
    %v1616 = vpack.c.b16 %v1112, %v1104
    %v1617 = vpack.c.b16 %v1113, %v1105
    %v1618 = vpack.c.b16 %v1122, %v1114
    %v1619 = vpack.c.b16 %v1123, %v1115
    %v1620 = vpack.c.b16 %v1124, %v1116
    %v1621 = vpack.c.b16 %v1125, %v1117
    %v1622 = vpack.c.b16 %v1126, %v1118
    %v1623 = vpack.c.b16 %v1127, %v1119
    %v1624 = vpack.c.b16 %v1128, %v1120
    %v1625 = vpack.c.b16 %v1129, %v1121
    %v1626 = vpack.c.b16 %v1138, %v1130
    %v1627 = vpack.c.b16 %v1139, %v1131
    %v1628 = vpack.c.b16 %v1140, %v1132
    %v1629 = vpack.c.b16 %v1141, %v1133
    %v1630 = vpack.c.b16 %v1142, %v1134
    %v1631 = vpack.c.b16 %v1143, %v1135
    %v1632 = vpack.c.b16 %v1144, %v1136
    %v1633 = vpack.c.b16 %v1145, %v1137
    %v1634 = vpack.c.b16 %v1154, %v1146
    %v1635 = vpack.c.b16 %v1155, %v1147
    %v1636 = vpack.c.b16 %v1156, %v1148
    %v1637 = vpack.c.b16 %v1157, %v1149
    %v1638 = vpack.c.b16 %v1158, %v1150
    %v1639 = vpack.c.b16 %v1159, %v1151
    %v1640 = vpack.c.b16 %v1160, %v1152
    %v1641 = vpack.c.b16 %v1161, %v1153
    %v1642 = vpack.c.b16 %v1170, %v1162
    %v1643 = vpack.c.b16 %v1171, %v1163
    %v1644 = vpack.c.b16 %v1172, %v1164
    %v1645 = vpack.c.b16 %v1173, %v1165
    %v1646 = vpack.c.b16 %v1174, %v1166
    %v1647 = vpack.c.b16 %v1175, %v1167
    %v1648 = vpack.c.b16 %v1176, %v1168
    %v1649 = vpack.c.b16 %v1177, %v1169
    %v1650 = vpack.c.b16 %v1186, %v1178
    %v1651 = vpack.c.b16 %v1187, %v1179
    %v1652 = vpack.c.b16 %v1188, %v1180
    %v1653 = vpack.c.b16 %v1189, %v1181
    %v1654 = vpack.c.b16 %v1190, %v1182
    %v1655 = vpack.c.b16 %v1191, %v1183
    %v1656 = vpack.c.b16 %v1192, %v1184
    %v1657 = vpack.c.b16 %v1193, %v1185
    %v1658 = vpack.c.b16 %v1202, %v1194
    %v1659 = vpack.c.b16 %v1203, %v1195
    %v1660 = vpack.c.b16 %v1204, %v1196
    %v1661 = vpack.c.b16 %v1205, %v1197
    %v1662 = vpack.c.b16 %v1206, %v1198
    %v1663 = vpack.c.b16 %v1207, %v1199
    %v1664 = vpack.c.b16 %v1208, %v1200
    %v1665 = vpack.c.b16 %v1209, %v1201
    %v1666 = vpack.c.b16 %v1218, %v1210
    %v1667 = vpack.c.b16 %v1219, %v1211
    %v1668 = vpack.c.b16 %v1220, %v1212
    %v1669 = vpack.c.b16 %v1221, %v1213
    %v1670 = vpack.c.b16 %v1222, %v1214
    %v1671 = vpack.c.b16 %v1223, %v1215
    %v1672 = vpack.c.b16 %v1224, %v1216
    %v1673 = vpack.c.b16 %v1225, %v1217
    %v1674 = vpack.c.b16 %v1234, %v1226
    %v1675 = vpack.c.b16 %v1235, %v1227
    %v1676 = vpack.c.b16 %v1236, %v1228
    %v1677 = vpack.c.b16 %v1237, %v1229
    %v1678 = vpack.c.b16 %v1238, %v1230
    %v1679 = vpack.c.b16 %v1239, %v1231
    %v1680 = vpack.c.b16 %v1240, %v1232
    %v1681 = vpack.c.b16 %v1241, %v1233
    %v1682 = vpack.c.b16 %v1250, %v1242
    %v1683 = vpack.c.b16 %v1251, %v1243
    %v1684 = vpack.c.b16 %v1252, %v1244
    %v1685 = vpack.c.b16 %v1253, %v1245
    %v1686 = vpack.c.b16 %v1254, %v1246
    %v1687 = vpack.c.b16 %v1255, %v1247
    %v1688 = vpack.c.b16 %v1256, %v1248
    %v1689 = vpack.c.b16 %v1257, %v1249
    %v1690 = vpack.c.b16 %v1266, %v1258
    %v1691 = vpack.c.b16 %v1267, %v1259
    %v1692 = vpack.c.b16 %v1268, %v1260
    %v1693 = vpack.c.b16 %v1269, %v1261
    %v1694 = vpack.c.b16 %v1270, %v1262
    %v1695 = vpack.c.b16 %v1271, %v1263
    %v1696 = vpack.c.b16 %v1272, %v1264
    %v1697 = vpack.c.b16 %v1273, %v1265
    %v1698 = vpack.c.b16 %v1282, %v1274
    %v1699 = vpack.c.b16 %v1283, %v1275
    %v1700 = vpack.c.b16 %v1284, %v1276
    %v1701 = vpack.c.b16 %v1285, %v1277
    %v1702 = vpack.c.b16 %v1286, %v1278
    %v1703 = vpack.c.b16 %v1287, %v1279
    %v1704 = vpack.c.b16 %v1288, %v1280
    %v1705 = vpack.c.b16 %v1289, %v1281
    %v1706 = vpack.c.b16 %v1298, %v1290
    %v1707 = vpack.c.b16 %v1299, %v1291
    %v1708 = vpack.c.b16 %v1300, %v1292
    %v1709 = vpack.c.b16 %v1301, %v1293
    %v1710 = vpack.c.b16 %v1302, %v1294
    %v1711 = vpack.c.b16 %v1303, %v1295
    %v1712 = vpack.c.b16 %v1304, %v1296
    %v1713 = vpack.c.b16 %v1305, %v1297
    %v1714 = vpack.c.b16 %v1314, %v1306
    %v1715 = vpack.c.b16 %v1315, %v1307
    %v1716 = vpack.c.b16 %v1316, %v1308
    %v1717 = vpack.c.b16 %v1317, %v1309
    %v1718 = vpack.c.b16 %v1318, %v1310
    %v1719 = vpack.c.b16 %v1319, %v1311
    %v1720 = vpack.c.b16 %v1320, %v1312
    %v1721 = vpack.c.b16 %v1321, %v1313
    %v1722 = vpack.c.b16 %v1330, %v1322
    %v1723 = vpack.c.b16 %v1331, %v1323
    %v1724 = vpack.c.b16 %v1332, %v1324
    %v1725 = vpack.c.b16 %v1333, %v1325
    %v1726 = vpack.c.b16 %v1334, %v1326
    %v1727 = vpack.c.b16 %v1335, %v1327
    %v1728 = vpack.c.b16 %v1336, %v1328
    %v1729 = vpack.c.b16 %v1337, %v1329
    %v1730 = vpack.c.b16 %v1346, %v1338
    %v1731 = vpack.c.b16 %v1347, %v1339
    %v1732 = vpack.c.b16 %v1348, %v1340
    %v1733 = vpack.c.b16 %v1349, %v1341
    %v1734 = vpack.c.b16 %v1350, %v1342
    %v1735 = vpack.c.b16 %v1351, %v1343
    %v1736 = vpack.c.b16 %v1352, %v1344
    %v1737 = vpack.c.b16 %v1353, %v1345
    %v1738 = vpack.c.b16 %v1362, %v1354
    %v1739 = vpack.c.b16 %v1363, %v1355
    %v1740 = vpack.c.b16 %v1364, %v1356
    %v1741 = vpack.c.b16 %v1365, %v1357
    %v1742 = vpack.c.b16 %v1366, %v1358
    %v1743 = vpack.c.b16 %v1367, %v1359
    %v1744 = vpack.c.b16 %v1368, %v1360
    %v1745 = vpack.c.b16 %v1369, %v1361
    %v1746 = vpack.c.b16 %v1378, %v1370
    %v1747 = vpack.c.b16 %v1379, %v1371
    %v1748 = vpack.c.b16 %v1380, %v1372
    %v1749 = vpack.c.b16 %v1381, %v1373
    %v1750 = vpack.c.b16 %v1382, %v1374
    %v1751 = vpack.c.b16 %v1383, %v1375
    %v1752 = vpack.c.b16 %v1384, %v1376
    %v1753 = vpack.c.b16 %v1385, %v1377
    %v1754 = vpack.c.b16 %v1394, %v1386
    %v1755 = vpack.c.b16 %v1395, %v1387
    %v1756 = vpack.c.b16 %v1396, %v1388
    %v1757 = vpack.c.b16 %v1397, %v1389
    %v1758 = vpack.c.b16 %v1398, %v1390
    %v1759 = vpack.c.b16 %v1399, %v1391
    %v1760 = vpack.c.b16 %v1400, %v1392
    %v1761 = vpack.c.b16 %v1401, %v1393
    %v1762 = vpack.c.b16 %v1410, %v1402
    %v1763 = vpack.c.b16 %v1411, %v1403
    %v1764 = vpack.c.b16 %v1412, %v1404
    %v1765 = vpack.c.b16 %v1413, %v1405
    %v1766 = vpack.c.b16 %v1414, %v1406
    %v1767 = vpack.c.b16 %v1415, %v1407
    %v1768 = vpack.c.b16 %v1416, %v1408
    %v1769 = vpack.c.b16 %v1417, %v1409
    %v1770 = vpack.c.b16 %v1426, %v1418
    %v1771 = vpack.c.b16 %v1427, %v1419
    %v1772 = vpack.c.b16 %v1428, %v1420
    %v1773 = vpack.c.b16 %v1429, %v1421
    %v1774 = vpack.c.b16 %v1430, %v1422
    %v1775 = vpack.c.b16 %v1431, %v1423
    %v1776 = vpack.c.b16 %v1432, %v1424
    %v1777 = vpack.c.b16 %v1433, %v1425
    %v1778 = vpack.c.b16 %v1442, %v1434
    %v1779 = vpack.c.b16 %v1443, %v1435
    %v1780 = vpack.c.b16 %v1444, %v1436
    %v1781 = vpack.c.b16 %v1445, %v1437
    %v1782 = vpack.c.b16 %v1446, %v1438
    %v1783 = vpack.c.b16 %v1447, %v1439
    %v1784 = vpack.c.b16 %v1448, %v1440
    %v1785 = vpack.c.b16 %v1449, %v1441
    %v1786 = vpack.c.b16 %v1458, %v1450
    %v1787 = vpack.c.b16 %v1459, %v1451
    %v1788 = vpack.c.b16 %v1460, %v1452
    %v1789 = vpack.c.b16 %v1461, %v1453
    %v1790 = vpack.c.b16 %v1462, %v1454
    %v1791 = vpack.c.b16 %v1463, %v1455
    %v1792 = vpack.c.b16 %v1464, %v1456
    %v1793 = vpack.c.b16 %v1465, %v1457
    %v1794 = vpack.c.b16 %v1474, %v1466
    %v1795 = vpack.c.b16 %v1475, %v1467
    %v1796 = vpack.c.b16 %v1476, %v1468
    %v1797 = vpack.c.b16 %v1477, %v1469
    %v1798 = vpack.c.b16 %v1478, %v1470
    %v1799 = vpack.c.b16 %v1479, %v1471
    %v1800 = vpack.c.b16 %v1480, %v1472
    %v1801 = vpack.c.b16 %v1481, %v1473
    %v1802 = vpack.c.b16 %v1490, %v1482
    %v1803 = vpack.c.b16 %v1491, %v1483
    %v1804 = vpack.c.b16 %v1492, %v1484
    %v1805 = vpack.c.b16 %v1493, %v1485
    %v1806 = vpack.c.b16 %v1494, %v1486
    %v1807 = vpack.c.b16 %v1495, %v1487
    %v1808 = vpack.c.b16 %v1496, %v1488
    %v1809 = vpack.c.b16 %v1497, %v1489
    %v1810 = vpack.c.b16 %v1506, %v1498
    %v1811 = vpack.c.b16 %v1507, %v1499
    %v1812 = vpack.c.b16 %v1508, %v1500
    %v1813 = vpack.c.b16 %v1509, %v1501
    %v1814 = vpack.c.b16 %v1510, %v1502
    %v1815 = vpack.c.b16 %v1511, %v1503
    %v1816 = vpack.c.b16 %v1512, %v1504
    %v1817 = vpack.c.b16 %v1513, %v1505
    %v1818 = vpack.c.b16 %v1522, %v1514
    %v1819 = vpack.c.b16 %v1523, %v1515
    %v1820 = vpack.c.b16 %v1524, %v1516
    %v1821 = vpack.c.b16 %v1525, %v1517
    %v1822 = vpack.c.b16 %v1526, %v1518
    %v1823 = vpack.c.b16 %v1527, %v1519
    %v1824 = vpack.c.b16 %v1528, %v1520
    %v1825 = vpack.c.b16 %v1529, %v1521
    %v1826 = vpack.c.b16 %v1538, %v1530
    %v1827 = vpack.c.b16 %v1539, %v1531
    %v1828 = vpack.c.b16 %v1540, %v1532
    %v1829 = vpack.c.b16 %v1541, %v1533
    %v1830 = vpack.c.b16 %v1542, %v1534
    %v1831 = vpack.c.b16 %v1543, %v1535
    %v1832 = vpack.c.b16 %v1544, %v1536
    %v1833 = vpack.c.b16 %v1545, %v1537
    %v1834 = vpack.c.b16 %v1554, %v1546
    %v1835 = vpack.c.b16 %v1555, %v1547
    %v1836 = vpack.c.b16 %v1556, %v1548
    %v1837 = vpack.c.b16 %v1557, %v1549
    %v1838 = vpack.c.b16 %v1558, %v1550
    %v1839 = vpack.c.b16 %v1559, %v1551
    %v1840 = vpack.c.b16 %v1560, %v1552
    %v1841 = vpack.c.b16 %v1561, %v1553
    %v1842 = vpack.c.b16 %v1570, %v1562
    %v1843 = vpack.c.b16 %v1571, %v1563
    %v1844 = vpack.c.b16 %v1572, %v1564
    %v1845 = vpack.c.b16 %v1573, %v1565
    %v1846 = vpack.c.b16 %v1574, %v1566
    %v1847 = vpack.c.b16 %v1575, %v1567
    %v1848 = vpack.c.b16 %v1576, %v1568
    %v1849 = vpack.c.b16 %v1577, %v1569
    %v1850 = vpack.c.b16 %v1586, %v1578
    %v1851 = vpack.c.b16 %v1587, %v1579
    %v1852 = vpack.c.b16 %v1588, %v1580
    %v1853 = vpack.c.b16 %v1589, %v1581
    %v1854 = vpack.c.b16 %v1590, %v1582
    %v1855 = vpack.c.b16 %v1591, %v1583
    %v1856 = vpack.c.b16 %v1592, %v1584
    %v1857 = vpack.c.b16 %v1593, %v1585
    %v1858 = vpack.c.b16 %v1602, %v1594
    %v1859 = vpack.c.b16 %v1603, %v1595
    %v1860 = vpack.c.b16 %v1604, %v1596
    %v1861 = vpack.c.b16 %v1605, %v1597
    %v1862 = vpack.c.b16 %v1606, %v1598
    %v1863 = vpack.c.b16 %v1607, %v1599
    %v1864 = vpack.c.b16 %v1608, %v1600
    %v1865 = vpack.c.b16 %v1609, %v1601
    %2122 = vmatprep.subr.bf16.mxu0 %v1611
    %2123 = vmatpush1.bf16.msra.mxu0 %v1610
    %2124 = vmatprep.subr.bf16.mxu0 %v1619
    %2125 = vmatpush1.bf16.msra.mxu0 %v1618
    %2126 = vmatprep.subr.bf16.mxu0 %v1627
    %2127 = vmatpush1.bf16.msra.mxu0 %v1626
    %2128 = vmatprep.subr.bf16.mxu0 %v1635
    %2129 = vmatpush1.bf16.msra.mxu0 %v1634
    %2130 = vmatprep.subr.bf16.mxu0 %v1643
    %2131 = vmatpush1.bf16.msra.mxu0 %v1642
    %2132 = vmatprep.subr.bf16.mxu0 %v1651
    %2133 = vmatpush1.bf16.msra.mxu0 %v1650
    %2134 = vmatprep.subr.bf16.mxu0 %v1659
    %2135 = vmatpush1.bf16.msra.mxu0 %v1658
    %2136 = vmatprep.subr.bf16.mxu0 %v1667
    %2137 = vmatpush1.bf16.msra.mxu0 %v1666
    %2138 = vmatprep.subr.bf16.mxu0 %v1675
    %2139 = vmatpush1.bf16.msra.mxu0 %v1674
    %2140 = vmatprep.subr.bf16.mxu0 %v1683
    %2141 = vmatpush1.bf16.msra.mxu0 %v1682
    %2142 = vmatprep.subr.bf16.mxu0 %v1691
    %2143 = vmatpush1.bf16.msra.mxu0 %v1690
    %2144 = vmatprep.subr.bf16.mxu0 %v1699
    %2145 = vmatpush1.bf16.msra.mxu0 %v1698
    %2146 = vmatprep.subr.bf16.mxu0 %v1707
    %2147 = vmatpush1.bf16.msra.mxu0 %v1706
    %2148 = vmatprep.subr.bf16.mxu0 %v1715
    %2149 = vmatpush1.bf16.msra.mxu0 %v1714
    %2150 = vmatprep.subr.bf16.mxu0 %v1723
    %2151 = vmatpush1.bf16.msra.mxu0 %v1722
    %2152 = vmatprep.subr.bf16.mxu0 %v1731
    %2153 = vmatpush1.bf16.msra.mxu0 %v1730
    %2154 = vmatprep.mubr.bf16.mxu0 %v541
    %2155 = vmatmul.mubr.bf16.gmra.mrb[0].mxu0 %v540
    %v2156 = vpop.f32.mrb[0].mxu0
    %v2157 = vadd.f32 %v805, %v2156
    %v2158 = vpop.f32.mrb[0].mxu0
    %v2159 = vadd.f32 %v809, %v2158
    %v2160 = vpop.f32.mrb[0].mxu0
    %v2161 = vpop.f32.mrb[0].mxu0
    %2162 = vdwg.mxu0
    %2163 = vmatprep.subr.bf16.mxu0 %v1739
    %2164 = vmatpush1.bf16.msra.mxu0 %v1738
    %2165 = vmatprep.subr.bf16.mxu0 %v1747
    %2166 = vmatpush1.bf16.msra.mxu0 %v1746
    %2167 = vmatprep.subr.bf16.mxu0 %v1755
    %2168 = vmatpush1.bf16.msra.mxu0 %v1754
    %2169 = vmatprep.subr.bf16.mxu0 %v1763
    %2170 = vmatpush1.bf16.msra.mxu0 %v1762
    %2171 = vmatprep.subr.bf16.mxu0 %v1771
    %2172 = vmatpush1.bf16.msra.mxu0 %v1770
    %2173 = vmatprep.subr.bf16.mxu0 %v1779
    %2174 = vmatpush1.bf16.msra.mxu0 %v1778
    %2175 = vmatprep.subr.bf16.mxu0 %v1787
    %2176 = vmatpush1.bf16.msra.mxu0 %v1786
    %2177 = vmatprep.subr.bf16.mxu0 %v1795
    %2178 = vmatpush1.bf16.msra.mxu0 %v1794
    %2179 = vmatprep.subr.bf16.mxu0 %v1803
    %2180 = vmatpush1.bf16.msra.mxu0 %v1802
    %2181 = vmatprep.subr.bf16.mxu0 %v1811
    %2182 = vmatpush1.bf16.msra.mxu0 %v1810
    %2183 = vmatprep.subr.bf16.mxu0 %v1819
    %2184 = vmatpush1.bf16.msra.mxu0 %v1818
    %2185 = vmatprep.subr.bf16.mxu0 %v1827
    %2186 = vmatpush1.bf16.msra.mxu0 %v1826
    %2187 = vmatprep.subr.bf16.mxu0 %v1835
    %2188 = vmatpush1.bf16.msra.mxu0 %v1834
    %2189 = vmatprep.subr.bf16.mxu0 %v1843
    %2190 = vmatpush1.bf16.msra.mxu0 %v1842
    %2191 = vmatprep.subr.bf16.mxu0 %v1851
    %2192 = vmatpush1.bf16.msra.mxu0 %v1850
    %2193 = vmatprep.subr.bf16.mxu0 %v1859
    %2194 = vmatpush1.bf16.msra.mxu0 %v1858
    %2195 = vmatprep.mubr.bf16.mxu0 %v543
    %2196 = vmatmul.mubr.bf16.gmra.mrb[0].mxu0 %v542
    %v2197 = vpop.f32.mrb[0].mxu0
    %v2198 = vadd.f32 %v2157, %v2197
    %v2199 = vpop.f32.mrb[0].mxu0
    %v2200 = vadd.f32 %v2159, %v2199
    %v2201 = vpop.f32.mrb[0].mxu0
    %v2202 = vpop.f32.mrb[0].mxu0
    %2203 = vdwg.mxu0
    %2204 = vmatprep.subr.bf16.mxu0 %v1613
    %2205 = vmatpush1.bf16.msra.mxu0 %v1612
    %2206 = vmatprep.subr.bf16.mxu0 %v1621
    %2207 = vmatpush1.bf16.msra.mxu0 %v1620
    %2208 = vmatprep.subr.bf16.mxu0 %v1629
    %2209 = vmatpush1.bf16.msra.mxu0 %v1628
    %2210 = vmatprep.subr.bf16.mxu0 %v1637
    %2211 = vmatpush1.bf16.msra.mxu0 %v1636
    %2212 = vmatprep.subr.bf16.mxu0 %v1645
    %2213 = vmatpush1.bf16.msra.mxu0 %v1644
    %2214 = vmatprep.subr.bf16.mxu0 %v1653
    %2215 = vmatpush1.bf16.msra.mxu0 %v1652
    %2216 = vmatprep.subr.bf16.mxu0 %v1661
    %2217 = vmatpush1.bf16.msra.mxu0 %v1660
    %2218 = vmatprep.subr.bf16.mxu0 %v1669
    %2219 = vmatpush1.bf16.msra.mxu0 %v1668
    %2220 = vmatprep.subr.bf16.mxu0 %v1677
    %2221 = vmatpush1.bf16.msra.mxu0 %v1676
    %2222 = vmatprep.subr.bf16.mxu0 %v1685
    %2223 = vmatpush1.bf16.msra.mxu0 %v1684
    %2224 = vmatprep.subr.bf16.mxu0 %v1693
    %2225 = vmatpush1.bf16.msra.mxu0 %v1692
    %2226 = vmatprep.subr.bf16.mxu0 %v1701
    %2227 = vmatpush1.bf16.msra.mxu0 %v1700
    %2228 = vmatprep.subr.bf16.mxu0 %v1709
    %2229 = vmatpush1.bf16.msra.mxu0 %v1708
    %2230 = vmatprep.subr.bf16.mxu0 %v1717
    %2231 = vmatpush1.bf16.msra.mxu0 %v1716
    %2232 = vmatprep.subr.bf16.mxu0 %v1725
    %2233 = vmatpush1.bf16.msra.mxu0 %v1724
    %2234 = vmatprep.subr.bf16.mxu0 %v1733
    %2235 = vmatpush1.bf16.msra.mxu0 %v1732
    %2236 = vmatprep.mubr.bf16.mxu0 %v541
    %2237 = vmatmul.mubr.bf16.gmra.mrb[0].mxu0 %v540
    %v2238 = vpop.f32.mrb[0].mxu0
    %v2239 = vadd.f32 %v813, %v2238
    %v2240 = vpop.f32.mrb[0].mxu0
    %v2241 = vadd.f32 %v817, %v2240
    %v2242 = vpop.f32.mrb[0].mxu0
    %v2243 = vpop.f32.mrb[0].mxu0
    %2244 = vdwg.mxu0
    %2245 = vmatprep.subr.bf16.mxu0 %v1741
    %2246 = vmatpush1.bf16.msra.mxu0 %v1740
    %2247 = vmatprep.subr.bf16.mxu0 %v1749
    %2248 = vmatpush1.bf16.msra.mxu0 %v1748
    %2249 = vmatprep.subr.bf16.mxu0 %v1757
    %2250 = vmatpush1.bf16.msra.mxu0 %v1756
    %2251 = vmatprep.subr.bf16.mxu0 %v1765
    %2252 = vmatpush1.bf16.msra.mxu0 %v1764
    %2253 = vmatprep.subr.bf16.mxu0 %v1773
    %2254 = vmatpush1.bf16.msra.mxu0 %v1772
    %2255 = vmatprep.subr.bf16.mxu0 %v1781
    %2256 = vmatpush1.bf16.msra.mxu0 %v1780
    %2257 = vmatprep.subr.bf16.mxu0 %v1789
    %2258 = vmatpush1.bf16.msra.mxu0 %v1788
    %2259 = vmatprep.subr.bf16.mxu0 %v1797
    %2260 = vmatpush1.bf16.msra.mxu0 %v1796
    %2261 = vmatprep.subr.bf16.mxu0 %v1805
    %2262 = vmatpush1.bf16.msra.mxu0 %v1804
    %2263 = vmatprep.subr.bf16.mxu0 %v1813
    %2264 = vmatpush1.bf16.msra.mxu0 %v1812
    %2265 = vmatprep.subr.bf16.mxu0 %v1821
    %2266 = vmatpush1.bf16.msra.mxu0 %v1820
    %2267 = vmatprep.subr.bf16.mxu0 %v1829
    %2268 = vmatpush1.bf16.msra.mxu0 %v1828
    %2269 = vmatprep.subr.bf16.mxu0 %v1837
    %2270 = vmatpush1.bf16.msra.mxu0 %v1836
    %2271 = vmatprep.subr.bf16.mxu0 %v1845
    %2272 = vmatpush1.bf16.msra.mxu0 %v1844
    %2273 = vmatprep.subr.bf16.mxu0 %v1853
    %2274 = vmatpush1.bf16.msra.mxu0 %v1852
    %2275 = vmatprep.subr.bf16.mxu0 %v1861
    %2276 = vmatpush1.bf16.msra.mxu0 %v1860
    %2277 = vmatprep.mubr.bf16.mxu0 %v543
    %2278 = vmatmul.mubr.bf16.gmra.mrb[0].mxu0 %v542
    %v2279 = vpop.f32.mrb[0].mxu0
    %v2280 = vadd.f32 %v2239, %v2279
    %v2281 = vpop.f32.mrb[0].mxu0
    %v2282 = vadd.f32 %v2241, %v2281
    %v2283 = vpop.f32.mrb[0].mxu0
    %v2284 = vpop.f32.mrb[0].mxu0
    %2285 = vdwg.mxu0
    %2286 = vmatprep.subr.bf16.mxu0 %v1615
    %2287 = vmatpush1.bf16.msra.mxu0 %v1614
    %2288 = vmatprep.subr.bf16.mxu0 %v1623
    %2289 = vmatpush1.bf16.msra.mxu0 %v1622
    %2290 = vmatprep.subr.bf16.mxu0 %v1631
    %2291 = vmatpush1.bf16.msra.mxu0 %v1630
    %2292 = vmatprep.subr.bf16.mxu0 %v1639
    %2293 = vmatpush1.bf16.msra.mxu0 %v1638
    %2294 = vmatprep.subr.bf16.mxu0 %v1647
    %2295 = vmatpush1.bf16.msra.mxu0 %v1646
    %2296 = vmatprep.subr.bf16.mxu0 %v1655
    %2297 = vmatpush1.bf16.msra.mxu0 %v1654
    %2298 = vmatprep.subr.bf16.mxu0 %v1663
    %2299 = vmatpush1.bf16.msra.mxu0 %v1662
    %2300 = vmatprep.subr.bf16.mxu0 %v1671
    %2301 = vmatpush1.bf16.msra.mxu0 %v1670
    %2302 = vmatprep.subr.bf16.mxu0 %v1679
    %2303 = vmatpush1.bf16.msra.mxu0 %v1678
    %2304 = vmatprep.subr.bf16.mxu0 %v1687
    %2305 = vmatpush1.bf16.msra.mxu0 %v1686
    %2306 = vmatprep.subr.bf16.mxu0 %v1695
    %2307 = vmatpush1.bf16.msra.mxu0 %v1694
    %2308 = vmatprep.subr.bf16.mxu0 %v1703
    %2309 = vmatpush1.bf16.msra.mxu0 %v1702
    %2310 = vmatprep.subr.bf16.mxu0 %v1711
    %2311 = vmatpush1.bf16.msra.mxu0 %v1710
    %2312 = vmatprep.subr.bf16.mxu0 %v1719
    %2313 = vmatpush1.bf16.msra.mxu0 %v1718
    %2314 = vmatprep.subr.bf16.mxu0 %v1727
    %2315 = vmatpush1.bf16.msra.mxu0 %v1726
    %2316 = vmatprep.subr.bf16.mxu0 %v1735
    %2317 = vmatpush1.bf16.msra.mxu0 %v1734
    %2318 = vmatprep.mubr.bf16.mxu0 %v541
    %2319 = vmatmul.mubr.bf16.gmra.mrb[0].mxu0 %v540
    %v2320 = vpop.f32.mrb[0].mxu0
    %v2321 = vadd.f32 %v821, %v2320
    %v2322 = vpop.f32.mrb[0].mxu0
    %v2323 = vadd.f32 %v825, %v2322
    %v2324 = vpop.f32.mrb[0].mxu0
    %v2325 = vpop.f32.mrb[0].mxu0
    %2326 = vdwg.mxu0
    %2327 = vmatprep.subr.bf16.mxu0 %v1743
    %2328 = vmatpush1.bf16.msra.mxu0 %v1742
    %2329 = vmatprep.subr.bf16.mxu0 %v1751
    %2330 = vmatpush1.bf16.msra.mxu0 %v1750
    %2331 = vmatprep.subr.bf16.mxu0 %v1759
    %2332 = vmatpush1.bf16.msra.mxu0 %v1758
    %2333 = vmatprep.subr.bf16.mxu0 %v1767
    %2334 = vmatpush1.bf16.msra.mxu0 %v1766
    %2335 = vmatprep.subr.bf16.mxu0 %v1775
    %2336 = vmatpush1.bf16.msra.mxu0 %v1774
    %2337 = vmatprep.subr.bf16.mxu0 %v1783
    %2338 = vmatpush1.bf16.msra.mxu0 %v1782
    %2339 = vmatprep.subr.bf16.mxu0 %v1791
    %2340 = vmatpush1.bf16.msra.mxu0 %v1790
    %2341 = vmatprep.subr.bf16.mxu0 %v1799
    %2342 = vmatpush1.bf16.msra.mxu0 %v1798
    %2343 = vmatprep.subr.bf16.mxu0 %v1807
    %2344 = vmatpush1.bf16.msra.mxu0 %v1806
    %2345 = vmatprep.subr.bf16.mxu0 %v1815
    %2346 = vmatpush1.bf16.msra.mxu0 %v1814
    %2347 = vmatprep.subr.bf16.mxu0 %v1823
    %2348 = vmatpush1.bf16.msra.mxu0 %v1822
    %2349 = vmatprep.subr.bf16.mxu0 %v1831
    %2350 = vmatpush1.bf16.msra.mxu0 %v1830
    %2351 = vmatprep.subr.bf16.mxu0 %v1839
    %2352 = vmatpush1.bf16.msra.mxu0 %v1838
    %2353 = vmatprep.subr.bf16.mxu0 %v1847
    %2354 = vmatpush1.bf16.msra.mxu0 %v1846
    %2355 = vmatprep.subr.bf16.mxu0 %v1855
    %2356 = vmatpush1.bf16.msra.mxu0 %v1854
    %2357 = vmatprep.subr.bf16.mxu0 %v1863
    %2358 = vmatpush1.bf16.msra.mxu0 %v1862
    %2359 = vmatprep.mubr.bf16.mxu0 %v543
    %2360 = vmatmul.mubr.bf16.gmra.mrb[0].mxu0 %v542
    %v2361 = vpop.f32.mrb[0].mxu0
    %v2362 = vadd.f32 %v2321, %v2361
    %v2363 = vpop.f32.mrb[0].mxu0
    %v2364 = vadd.f32 %v2323, %v2363
    %v2365 = vpop.f32.mrb[0].mxu0
    %v2366 = vpop.f32.mrb[0].mxu0
    %2367 = vdwg.mxu0
    %2368 = vmatprep.subr.bf16.mxu0 %v1617
    %2369 = vmatpush1.bf16.msra.mxu0 %v1616
    %2370 = vmatprep.subr.bf16.mxu0 %v1625
    %2371 = vmatpush1.bf16.msra.mxu0 %v1624
    %2372 = vmatprep.subr.bf16.mxu0 %v1633
    %2373 = vmatpush1.bf16.msra.mxu0 %v1632
    %2374 = vmatprep.subr.bf16.mxu0 %v1641
    %2375 = vmatpush1.bf16.msra.mxu0 %v1640
    %2376 = vmatprep.subr.bf16.mxu0 %v1649
    %2377 = vmatpush1.bf16.msra.mxu0 %v1648
    %2378 = vmatprep.subr.bf16.mxu0 %v1657
    %2379 = vmatpush1.bf16.msra.mxu0 %v1656
    %2380 = vmatprep.subr.bf16.mxu0 %v1665
    %2381 = vmatpush1.bf16.msra.mxu0 %v1664
    %2382 = vmatprep.subr.bf16.mxu0 %v1673
    %2383 = vmatpush1.bf16.msra.mxu0 %v1672
    %2384 = vmatprep.subr.bf16.mxu0 %v1681
    %2385 = vmatpush1.bf16.msra.mxu0 %v1680
    %2386 = vmatprep.subr.bf16.mxu0 %v1689
    %2387 = vmatpush1.bf16.msra.mxu0 %v1688
    %2388 = vmatprep.subr.bf16.mxu0 %v1697
    %2389 = vmatpush1.bf16.msra.mxu0 %v1696
    %2390 = vmatprep.subr.bf16.mxu0 %v1705
    %2391 = vmatpush1.bf16.msra.mxu0 %v1704
    %2392 = vmatprep.subr.bf16.mxu0 %v1713
    %2393 = vmatpush1.bf16.msra.mxu0 %v1712
    %2394 = vmatprep.subr.bf16.mxu0 %v1721
    %2395 = vmatpush1.bf16.msra.mxu0 %v1720
    %2396 = vmatprep.subr.bf16.mxu0 %v1729
    %2397 = vmatpush1.bf16.msra.mxu0 %v1728
    %2398 = vmatprep.subr.bf16.mxu0 %v1737
    %2399 = vmatpush1.bf16.msra.mxu0 %v1736
    %2400 = vmatprep.mubr.bf16.mxu0 %v541
    %2401 = vmatmul.mubr.bf16.gmra.mrb[0].mxu0 %v540
    %v2402 = vpop.f32.mrb[0].mxu0
    %v2403 = vadd.f32 %v829, %v2402
    %v2404 = vpop.f32.mrb[0].mxu0
    %v2405 = vadd.f32 %v833, %v2404
    %v2406 = vpop.f32.mrb[0].mxu0
    %v2407 = vpop.f32.mrb[0].mxu0
    %2408 = vdwg.mxu0
    %2409 = vmatprep.subr.bf16.mxu0 %v1745
    %2410 = vmatpush1.bf16.msra.mxu0 %v1744
    %2411 = vmatprep.subr.bf16.mxu0 %v1753
    %2412 = vmatpush1.bf16.msra.mxu0 %v1752
    %2413 = vmatprep.subr.bf16.mxu0 %v1761
    %2414 = vmatpush1.bf16.msra.mxu0 %v1760
    %2415 = vmatprep.subr.bf16.mxu0 %v1769
    %2416 = vmatpush1.bf16.msra.mxu0 %v1768
    %2417 = vmatprep.subr.bf16.mxu0 %v1777
    %2418 = vmatpush1.bf16.msra.mxu0 %v1776
    %2419 = vmatprep.subr.bf16.mxu0 %v1785
    %2420 = vmatpush1.bf16.msra.mxu0 %v1784
    %2421 = vmatprep.subr.bf16.mxu0 %v1793
    %2422 = vmatpush1.bf16.msra.mxu0 %v1792
    %2423 = vmatprep.subr.bf16.mxu0 %v1801
    %2424 = vmatpush1.bf16.msra.mxu0 %v1800
    %2425 = vmatprep.subr.bf16.mxu0 %v1809
    %2426 = vmatpush1.bf16.msra.mxu0 %v1808
    %2427 = vmatprep.subr.bf16.mxu0 %v1817
    %2428 = vmatpush1.bf16.msra.mxu0 %v1816
    %2429 = vmatprep.subr.bf16.mxu0 %v1825
    %2430 = vmatpush1.bf16.msra.mxu0 %v1824
    %2431 = vmatprep.subr.bf16.mxu0 %v1833
    %2432 = vmatpush1.bf16.msra.mxu0 %v1832
    %2433 = vmatprep.subr.bf16.mxu0 %v1841
    %2434 = vmatpush1.bf16.msra.mxu0 %v1840
    %2435 = vmatprep.subr.bf16.mxu0 %v1849
    %2436 = vmatpush1.bf16.msra.mxu0 %v1848
    %2437 = vmatprep.subr.bf16.mxu0 %v1857
    %2438 = vmatpush1.bf16.msra.mxu0 %v1856
    %2439 = vmatprep.subr.bf16.mxu0 %v1865
    %2440 = vmatpush1.bf16.msra.mxu0 %v1864
    %2441 = vmatprep.mubr.bf16.mxu0 %v543
    %2442 = vmatmul.mubr.bf16.gmra.mrb[0].mxu0 %v542
    %v2443 = vpop.f32.mrb[0].mxu0
    %v2444 = vadd.f32 %v2403, %v2443
    %v2445 = vpop.f32.mrb[0].mxu0
    %v2446 = vadd.f32 %v2405, %v2445
    %v2447 = vpop.f32.mrb[0].mxu0
    %v2448 = vpop.f32.mrb[0].mxu0
    %2449 = vdwg.mxu0
    %v2450 = vmax.f32 %v2198, 0.0
    %v2451 = vmax.f32 %v2200, 0.0
    %v2452 = vmax.f32 %v2280, 0.0
    %v2453 = vmax.f32 %v2282, 0.0
    %v2454 = vmax.f32 %v2362, 0.0
    %v2455 = vmax.f32 %v2364, 0.0
    %v2456 = vmax.f32 %v2444, 0.0
    %v2457 = vmax.f32 %v2446, 0.0
    %v2458 = vpack.c.bf16 %v2450, %v2450
    %v2459 = vpack.c.bf16 %v2451, %v2451
    %v2460 = vpack.c.bf16 %v2452, %v2452
    %v2461 = vpack.c.bf16 %v2453, %v2453
    %v2462 = vpack.c.bf16 %v2454, %v2454
    %v2463 = vpack.c.bf16 %v2455, %v2455
    %v2464 = vpack.c.bf16 %v2456, %v2456
    %v2465 = vpack.c.bf16 %v2457, %v2457
    %v2466 = vld [vmem:[#allocation10] sm:$0xff]
    %v2467 = vld [vmem:[#allocation10 + $0x8] sm:$0xff]
    %v2468 = vld [vmem:[#allocation10 + $0x10] sm:$0xff]
    %v2469 = vld [vmem:[#allocation10 + $0x18] sm:$0xff]
    %v2470 = vld [vmem:[#allocation10 + $0x20] sm:$0xff]
    %v2471 = vld [vmem:[#allocation10 + $0x28] sm:$0xff]
    %v2472 = vld [vmem:[#allocation10 + $0x30] sm:$0xff]
    %v2473 = vld [vmem:[#allocation10 + $0x38] sm:$0xff]
    %v2474 = vld [vmem:[#allocation10 + $0x40] sm:$0xff]
    %v2475 = vld [vmem:[#allocation10 + $0x48] sm:$0xff]
    %v2476 = vld [vmem:[#allocation10 + $0x50] sm:$0xff]
    %v2477 = vld [vmem:[#allocation10 + $0x58] sm:$0xff]
    %v2478 = vld [vmem:[#allocation10 + $0x60] sm:$0xff]
    %v2479 = vld [vmem:[#allocation10 + $0x68] sm:$0xff]
    %v2480 = vld [vmem:[#allocation10 + $0x70] sm:$0xff]
    %v2481 = vld [vmem:[#allocation10 + $0x78] sm:$0xff]
    %v2482 = vld [vmem:[#allocation10 + $0x80] sm:$0xff]
    %v2483 = vld [vmem:[#allocation10 + $0x88] sm:$0xff]
    %v2484 = vld [vmem:[#allocation10 + $0x90] sm:$0xff]
    %v2485 = vld [vmem:[#allocation10 + $0x98] sm:$0xff]
    %v2486 = vld [vmem:[#allocation10 + $0xa0] sm:$0xff]
    %v2487 = vld [vmem:[#allocation10 + $0xa8] sm:$0xff]
    %v2488 = vld [vmem:[#allocation10 + $0xb0] sm:$0xff]
    %v2489 = vld [vmem:[#allocation10 + $0xb8] sm:$0xff]
    %v2490 = vld [vmem:[#allocation10 + $0xc0] sm:$0xff]
    %v2491 = vld [vmem:[#allocation10 + $0xc8] sm:$0xff]
    %v2492 = vld [vmem:[#allocation10 + $0xd0] sm:$0xff]
    %v2493 = vld [vmem:[#allocation10 + $0xd8] sm:$0xff]
    %v2494 = vld [vmem:[#allocation10 + $0xe0] sm:$0xff]
    %v2495 = vld [vmem:[#allocation10 + $0xe8] sm:$0xff]
    %v2496 = vld [vmem:[#allocation10 + $0xf0] sm:$0xff]
    %v2497 = vld [vmem:[#allocation10 + $0xf8] sm:$0xff]
    %v2498 = vld [vmem:[#allocation10 + $0x100] sm:$0xff]
    %v2499 = vld [vmem:[#allocation10 + $0x108] sm:$0xff]
    %v2500 = vld [vmem:[#allocation10 + $0x110] sm:$0xff]
    %v2501 = vld [vmem:[#allocation10 + $0x118] sm:$0xff]
    %v2502 = vld [vmem:[#allocation10 + $0x120] sm:$0xff]
    %v2503 = vld [vmem:[#allocation10 + $0x128] sm:$0xff]
    %v2504 = vld [vmem:[#allocation10 + $0x130] sm:$0xff]
    %v2505 = vld [vmem:[#allocation10 + $0x138] sm:$0xff]
    %v2506 = vld [vmem:[#allocation10 + $0x140] sm:$0xff]
    %v2507 = vld [vmem:[#allocation10 + $0x148] sm:$0xff]
    %v2508 = vld [vmem:[#allocation10 + $0x150] sm:$0xff]
    %v2509 = vld [vmem:[#allocation10 + $0x158] sm:$0xff]
    %v2510 = vld [vmem:[#allocation10 + $0x160] sm:$0xff]
    %v2511 = vld [vmem:[#allocation10 + $0x168] sm:$0xff]
    %v2512 = vld [vmem:[#allocation10 + $0x170] sm:$0xff]
    %v2513 = vld [vmem:[#allocation10 + $0x178] sm:$0xff]
    %v2514 = vld [vmem:[#allocation10 + $0x180] sm:$0xff]
    %v2515 = vld [vmem:[#allocation10 + $0x188] sm:$0xff]
    %v2516 = vld [vmem:[#allocation10 + $0x190] sm:$0xff]
    %v2517 = vld [vmem:[#allocation10 + $0x198] sm:$0xff]
    %v2518 = vld [vmem:[#allocation10 + $0x1a0] sm:$0xff]
    %v2519 = vld [vmem:[#allocation10 + $0x1a8] sm:$0xff]
    %v2520 = vld [vmem:[#allocation10 + $0x1b0] sm:$0xff]
    %v2521 = vld [vmem:[#allocation10 + $0x1b8] sm:$0xff]
    %v2522 = vld [vmem:[#allocation10 + $0x1c0] sm:$0xff]
    %v2523 = vld [vmem:[#allocation10 + $0x1c8] sm:$0xff]
    %v2524 = vld [vmem:[#allocation10 + $0x1d0] sm:$0xff]
    %v2525 = vld [vmem:[#allocation10 + $0x1d8] sm:$0xff]
    %v2526 = vld [vmem:[#allocation10 + $0x1e0] sm:$0xff]
    %v2527 = vld [vmem:[#allocation10 + $0x1e8] sm:$0xff]
    %v2528 = vld [vmem:[#allocation10 + $0x1f0] sm:$0xff]
    %v2529 = vld [vmem:[#allocation10 + $0x1f8] sm:$0xff]
    %v2530 = vld [vmem:[#allocation10 + $0x200] sm:$0xff]
    %v2531 = vld [vmem:[#allocation10 + $0x208] sm:$0xff]
    %v2532 = vld [vmem:[#allocation10 + $0x210] sm:$0xff]
    %v2533 = vld [vmem:[#allocation10 + $0x218] sm:$0xff]
    %v2534 = vld [vmem:[#allocation10 + $0x220] sm:$0xff]
    %v2535 = vld [vmem:[#allocation10 + $0x228] sm:$0xff]
    %v2536 = vld [vmem:[#allocation10 + $0x230] sm:$0xff]
    %v2537 = vld [vmem:[#allocation10 + $0x238] sm:$0xff]
    %v2538 = vld [vmem:[#allocation10 + $0x240] sm:$0xff]
    %v2539 = vld [vmem:[#allocation10 + $0x248] sm:$0xff]
    %v2540 = vld [vmem:[#allocation10 + $0x250] sm:$0xff]
    %v2541 = vld [vmem:[#allocation10 + $0x258] sm:$0xff]
    %v2542 = vld [vmem:[#allocation10 + $0x260] sm:$0xff]
    %v2543 = vld [vmem:[#allocation10 + $0x268] sm:$0xff]
    %v2544 = vld [vmem:[#allocation10 + $0x270] sm:$0xff]
    %v2545 = vld [vmem:[#allocation10 + $0x278] sm:$0xff]
    %v2546 = vld [vmem:[#allocation10 + $0x280] sm:$0xff]
    %v2547 = vld [vmem:[#allocation10 + $0x288] sm:$0xff]
    %v2548 = vld [vmem:[#allocation10 + $0x290] sm:$0xff]
    %v2549 = vld [vmem:[#allocation10 + $0x298] sm:$0xff]
    %v2550 = vld [vmem:[#allocation10 + $0x2a0] sm:$0xff]
    %v2551 = vld [vmem:[#allocation10 + $0x2a8] sm:$0xff]
    %v2552 = vld [vmem:[#allocation10 + $0x2b0] sm:$0xff]
    %v2553 = vld [vmem:[#allocation10 + $0x2b8] sm:$0xff]
    %v2554 = vld [vmem:[#allocation10 + $0x2c0] sm:$0xff]
    %v2555 = vld [vmem:[#allocation10 + $0x2c8] sm:$0xff]
    %v2556 = vld [vmem:[#allocation10 + $0x2d0] sm:$0xff]
    %v2557 = vld [vmem:[#allocation10 + $0x2d8] sm:$0xff]
    %v2558 = vld [vmem:[#allocation10 + $0x2e0] sm:$0xff]
    %v2559 = vld [vmem:[#allocation10 + $0x2e8] sm:$0xff]
    %v2560 = vld [vmem:[#allocation10 + $0x2f0] sm:$0xff]
    %v2561 = vld [vmem:[#allocation10 + $0x2f8] sm:$0xff]
    %v2562 = vld [vmem:[#allocation10 + $0x300] sm:$0xff]
    %v2563 = vld [vmem:[#allocation10 + $0x308] sm:$0xff]
    %v2564 = vld [vmem:[#allocation10 + $0x310] sm:$0xff]
    %v2565 = vld [vmem:[#allocation10 + $0x318] sm:$0xff]
    %v2566 = vld [vmem:[#allocation10 + $0x320] sm:$0xff]
    %v2567 = vld [vmem:[#allocation10 + $0x328] sm:$0xff]
    %v2568 = vld [vmem:[#allocation10 + $0x330] sm:$0xff]
    %v2569 = vld [vmem:[#allocation10 + $0x338] sm:$0xff]
    %v2570 = vld [vmem:[#allocation10 + $0x340] sm:$0xff]
    %v2571 = vld [vmem:[#allocation10 + $0x348] sm:$0xff]
    %v2572 = vld [vmem:[#allocation10 + $0x350] sm:$0xff]
    %v2573 = vld [vmem:[#allocation10 + $0x358] sm:$0xff]
    %v2574 = vld [vmem:[#allocation10 + $0x360] sm:$0xff]
    %v2575 = vld [vmem:[#allocation10 + $0x368] sm:$0xff]
    %v2576 = vld [vmem:[#allocation10 + $0x370] sm:$0xff]
    %v2577 = vld [vmem:[#allocation10 + $0x378] sm:$0xff]
    %v2578 = vld [vmem:[#allocation10 + $0x380] sm:$0xff]
    %v2579 = vld [vmem:[#allocation10 + $0x388] sm:$0xff]
    %v2580 = vld [vmem:[#allocation10 + $0x390] sm:$0xff]
    %v2581 = vld [vmem:[#allocation10 + $0x398] sm:$0xff]
    %v2582 = vld [vmem:[#allocation10 + $0x3a0] sm:$0xff]
    %v2583 = vld [vmem:[#allocation10 + $0x3a8] sm:$0xff]
    %v2584 = vld [vmem:[#allocation10 + $0x3b0] sm:$0xff]
    %v2585 = vld [vmem:[#allocation10 + $0x3b8] sm:$0xff]
    %v2586 = vld [vmem:[#allocation10 + $0x3c0] sm:$0xff]
    %v2587 = vld [vmem:[#allocation10 + $0x3c8] sm:$0xff]
    %v2588 = vld [vmem:[#allocation10 + $0x3d0] sm:$0xff]
    %v2589 = vld [vmem:[#allocation10 + $0x3d8] sm:$0xff]
    %v2590 = vld [vmem:[#allocation10 + $0x3e0] sm:$0xff]
    %v2591 = vld [vmem:[#allocation10 + $0x3e8] sm:$0xff]
    %v2592 = vld [vmem:[#allocation10 + $0x3f0] sm:$0xff]
    %v2593 = vld [vmem:[#allocation10 + $0x3f8] sm:$0xff]
    %v2594 = vld [vmem:[#allocation10 + $0x400] sm:$0xff]
    %v2595 = vld [vmem:[#allocation10 + $0x408] sm:$0xff]
    %v2596 = vld [vmem:[#allocation10 + $0x410] sm:$0xff]
    %v2597 = vld [vmem:[#allocation10 + $0x418] sm:$0xff]
    %v2598 = vld [vmem:[#allocation10 + $0x420] sm:$0xff]
    %v2599 = vld [vmem:[#allocation10 + $0x428] sm:$0xff]
    %v2600 = vld [vmem:[#allocation10 + $0x430] sm:$0xff]
    %v2601 = vld [vmem:[#allocation10 + $0x438] sm:$0xff]
    %v2602 = vld [vmem:[#allocation10 + $0x440] sm:$0xff]
    %v2603 = vld [vmem:[#allocation10 + $0x448] sm:$0xff]
    %v2604 = vld [vmem:[#allocation10 + $0x450] sm:$0xff]
    %v2605 = vld [vmem:[#allocation10 + $0x458] sm:$0xff]
    %v2606 = vld [vmem:[#allocation10 + $0x460] sm:$0xff]
    %v2607 = vld [vmem:[#allocation10 + $0x468] sm:$0xff]
    %v2608 = vld [vmem:[#allocation10 + $0x470] sm:$0xff]
    %v2609 = vld [vmem:[#allocation10 + $0x478] sm:$0xff]
    %v2610 = vld [vmem:[#allocation10 + $0x480] sm:$0xff]
    %v2611 = vld [vmem:[#allocation10 + $0x488] sm:$0xff]
    %v2612 = vld [vmem:[#allocation10 + $0x490] sm:$0xff]
    %v2613 = vld [vmem:[#allocation10 + $0x498] sm:$0xff]
    %v2614 = vld [vmem:[#allocation10 + $0x4a0] sm:$0xff]
    %v2615 = vld [vmem:[#allocation10 + $0x4a8] sm:$0xff]
    %v2616 = vld [vmem:[#allocation10 + $0x4b0] sm:$0xff]
    %v2617 = vld [vmem:[#allocation10 + $0x4b8] sm:$0xff]
    %v2618 = vld [vmem:[#allocation10 + $0x4c0] sm:$0xff]
    %v2619 = vld [vmem:[#allocation10 + $0x4c8] sm:$0xff]
    %v2620 = vld [vmem:[#allocation10 + $0x4d0] sm:$0xff]
    %v2621 = vld [vmem:[#allocation10 + $0x4d8] sm:$0xff]
    %v2622 = vld [vmem:[#allocation10 + $0x4e0] sm:$0xff]
    %v2623 = vld [vmem:[#allocation10 + $0x4e8] sm:$0xff]
    %v2624 = vld [vmem:[#allocation10 + $0x4f0] sm:$0xff]
    %v2625 = vld [vmem:[#allocation10 + $0x4f8] sm:$0xff]
    %v2626 = vld [vmem:[#allocation10 + $0x500] sm:$0xff]
    %v2627 = vld [vmem:[#allocation10 + $0x508] sm:$0xff]
    %v2628 = vld [vmem:[#allocation10 + $0x510] sm:$0xff]
    %v2629 = vld [vmem:[#allocation10 + $0x518] sm:$0xff]
    %v2630 = vld [vmem:[#allocation10 + $0x520] sm:$0xff]
    %v2631 = vld [vmem:[#allocation10 + $0x528] sm:$0xff]
    %v2632 = vld [vmem:[#allocation10 + $0x530] sm:$0xff]
    %v2633 = vld [vmem:[#allocation10 + $0x538] sm:$0xff]
    %v2634 = vld [vmem:[#allocation10 + $0x540] sm:$0xff]
    %v2635 = vld [vmem:[#allocation10 + $0x548] sm:$0xff]
    %v2636 = vld [vmem:[#allocation10 + $0x550] sm:$0xff]
    %v2637 = vld [vmem:[#allocation10 + $0x558] sm:$0xff]
    %v2638 = vld [vmem:[#allocation10 + $0x560] sm:$0xff]
    %v2639 = vld [vmem:[#allocation10 + $0x568] sm:$0xff]
    %v2640 = vld [vmem:[#allocation10 + $0x570] sm:$0xff]
    %v2641 = vld [vmem:[#allocation10 + $0x578] sm:$0xff]
    %v2642 = vld [vmem:[#allocation10 + $0x580] sm:$0xff]
    %v2643 = vld [vmem:[#allocation10 + $0x588] sm:$0xff]
    %v2644 = vld [vmem:[#allocation10 + $0x590] sm:$0xff]
    %v2645 = vld [vmem:[#allocation10 + $0x598] sm:$0xff]
    %v2646 = vld [vmem:[#allocation10 + $0x5a0] sm:$0xff]
    %v2647 = vld [vmem:[#allocation10 + $0x5a8] sm:$0xff]
    %v2648 = vld [vmem:[#allocation10 + $0x5b0] sm:$0xff]
    %v2649 = vld [vmem:[#allocation10 + $0x5b8] sm:$0xff]
    %v2650 = vld [vmem:[#allocation10 + $0x5c0] sm:$0xff]
    %v2651 = vld [vmem:[#allocation10 + $0x5c8] sm:$0xff]
    %v2652 = vld [vmem:[#allocation10 + $0x5d0] sm:$0xff]
    %v2653 = vld [vmem:[#allocation10 + $0x5d8] sm:$0xff]
    %v2654 = vld [vmem:[#allocation10 + $0x5e0] sm:$0xff]
    %v2655 = vld [vmem:[#allocation10 + $0x5e8] sm:$0xff]
    %v2656 = vld [vmem:[#allocation10 + $0x5f0] sm:$0xff]
    %v2657 = vld [vmem:[#allocation10 + $0x5f8] sm:$0xff]
    %v2658 = vld [vmem:[#allocation10 + $0x600] sm:$0xff]
    %v2659 = vld [vmem:[#allocation10 + $0x608] sm:$0xff]
    %v2660 = vld [vmem:[#allocation10 + $0x610] sm:$0xff]
    %v2661 = vld [vmem:[#allocation10 + $0x618] sm:$0xff]
    %v2662 = vld [vmem:[#allocation10 + $0x620] sm:$0xff]
    %v2663 = vld [vmem:[#allocation10 + $0x628] sm:$0xff]
    %v2664 = vld [vmem:[#allocation10 + $0x630] sm:$0xff]
    %v2665 = vld [vmem:[#allocation10 + $0x638] sm:$0xff]
    %v2666 = vld [vmem:[#allocation10 + $0x640] sm:$0xff]
    %v2667 = vld [vmem:[#allocation10 + $0x648] sm:$0xff]
    %v2668 = vld [vmem:[#allocation10 + $0x650] sm:$0xff]
    %v2669 = vld [vmem:[#allocation10 + $0x658] sm:$0xff]
    %v2670 = vld [vmem:[#allocation10 + $0x660] sm:$0xff]
    %v2671 = vld [vmem:[#allocation10 + $0x668] sm:$0xff]
    %v2672 = vld [vmem:[#allocation10 + $0x670] sm:$0xff]
    %v2673 = vld [vmem:[#allocation10 + $0x678] sm:$0xff]
    %v2674 = vld [vmem:[#allocation10 + $0x680] sm:$0xff]
    %v2675 = vld [vmem:[#allocation10 + $0x688] sm:$0xff]
    %v2676 = vld [vmem:[#allocation10 + $0x690] sm:$0xff]
    %v2677 = vld [vmem:[#allocation10 + $0x698] sm:$0xff]
    %v2678 = vld [vmem:[#allocation10 + $0x6a0] sm:$0xff]
    %v2679 = vld [vmem:[#allocation10 + $0x6a8] sm:$0xff]
    %v2680 = vld [vmem:[#allocation10 + $0x6b0] sm:$0xff]
    %v2681 = vld [vmem:[#allocation10 + $0x6b8] sm:$0xff]
    %v2682 = vld [vmem:[#allocation10 + $0x6c0] sm:$0xff]
    %v2683 = vld [vmem:[#allocation10 + $0x6c8] sm:$0xff]
    %v2684 = vld [vmem:[#allocation10 + $0x6d0] sm:$0xff]
    %v2685 = vld [vmem:[#allocation10 + $0x6d8] sm:$0xff]
    %v2686 = vld [vmem:[#allocation10 + $0x6e0] sm:$0xff]
    %v2687 = vld [vmem:[#allocation10 + $0x6e8] sm:$0xff]
    %v2688 = vld [vmem:[#allocation10 + $0x6f0] sm:$0xff]
    %v2689 = vld [vmem:[#allocation10 + $0x6f8] sm:$0xff]
    %v2690 = vld [vmem:[#allocation10 + $0x700] sm:$0xff]
    %v2691 = vld [vmem:[#allocation10 + $0x708] sm:$0xff]
    %v2692 = vld [vmem:[#allocation10 + $0x710] sm:$0xff]
    %v2693 = vld [vmem:[#allocation10 + $0x718] sm:$0xff]
    %v2694 = vld [vmem:[#allocation10 + $0x720] sm:$0xff]
    %v2695 = vld [vmem:[#allocation10 + $0x728] sm:$0xff]
    %v2696 = vld [vmem:[#allocation10 + $0x730] sm:$0xff]
    %v2697 = vld [vmem:[#allocation10 + $0x738] sm:$0xff]
    %v2698 = vld [vmem:[#allocation10 + $0x740] sm:$0xff]
    %v2699 = vld [vmem:[#allocation10 + $0x748] sm:$0xff]
    %v2700 = vld [vmem:[#allocation10 + $0x750] sm:$0xff]
    %v2701 = vld [vmem:[#allocation10 + $0x758] sm:$0xff]
    %v2702 = vld [vmem:[#allocation10 + $0x760] sm:$0xff]
    %v2703 = vld [vmem:[#allocation10 + $0x768] sm:$0xff]
    %v2704 = vld [vmem:[#allocation10 + $0x770] sm:$0xff]
    %v2705 = vld [vmem:[#allocation10 + $0x778] sm:$0xff]
    %v2706 = vld [vmem:[#allocation10 + $0x780] sm:$0xff]
    %v2707 = vld [vmem:[#allocation10 + $0x788] sm:$0xff]
    %v2708 = vld [vmem:[#allocation10 + $0x790] sm:$0xff]
    %v2709 = vld [vmem:[#allocation10 + $0x798] sm:$0xff]
    %v2710 = vld [vmem:[#allocation10 + $0x7a0] sm:$0xff]
    %v2711 = vld [vmem:[#allocation10 + $0x7a8] sm:$0xff]
    %v2712 = vld [vmem:[#allocation10 + $0x7b0] sm:$0xff]
    %v2713 = vld [vmem:[#allocation10 + $0x7b8] sm:$0xff]
    %v2714 = vld [vmem:[#allocation10 + $0x7c0] sm:$0xff]
    %v2715 = vld [vmem:[#allocation10 + $0x7c8] sm:$0xff]
    %v2716 = vld [vmem:[#allocation10 + $0x7d0] sm:$0xff]
    %v2717 = vld [vmem:[#allocation10 + $0x7d8] sm:$0xff]
    %v2718 = vld [vmem:[#allocation10 + $0x7e0] sm:$0xff]
    %v2719 = vld [vmem:[#allocation10 + $0x7e8] sm:$0xff]
    %v2720 = vld [vmem:[#allocation10 + $0x7f0] sm:$0xff]
    %v2721 = vld [vmem:[#allocation10 + $0x7f8] sm:$0xff]
    %v2722 = vld [vmem:[%s8] sm:$0xf]
    %v2724 = vlaneseq
    %v2725 = vshrl.u32 %v2724, 7
    %v2726 = vsub.s32 0, %v2725
    %v2727 = vrot.slane %v2722, %v2726
    %v2728 = vlaneseq
    %v2729 = vshrl.u32 %v2728, 7
    %v2730 = vsub.s32 1, %v2729
    %v2731 = vrot.slane %v2722, %v2730
    %v2732 = vlaneseq
    %v2733 = vshrl.u32 %v2732, 7
    %v2734 = vsub.s32 2, %v2733
    %v2735 = vrot.slane %v2722, %v2734
    %v2736 = vlaneseq
    %v2737 = vshrl.u32 %v2736, 7
    %v2738 = vsub.s32 3, %v2737
    %v2739 = vrot.slane %v2722, %v2738
    %v3000 = vunpack.c.l.b16 %v2466
    %v3001 = vunpack.c.h.b16 %v2466
    %v3002 = vunpack.c.l.b16 %v2467
    %v3003 = vunpack.c.h.b16 %v2467
    %v3004 = vunpack.c.l.b16 %v2468
    %v3005 = vunpack.c.h.b16 %v2468
    %v3006 = vunpack.c.l.b16 %v2469
    %v3007 = vunpack.c.h.b16 %v2469
    %v3008 = vunpack.c.l.b16 %v2470
    %v3009 = vunpack.c.h.b16 %v2470
    %v3010 = vunpack.c.l.b16 %v2471
    %v3011 = vunpack.c.h.b16 %v2471
    %v3012 = vunpack.c.l.b16 %v2472
    %v3013 = vunpack.c.h.b16 %v2472
    %v3014 = vunpack.c.l.b16 %v2473
    %v3015 = vunpack.c.h.b16 %v2473
    %v3016 = vunpack.c.l.b16 %v2474
    %v3017 = vunpack.c.h.b16 %v2474
    %v3018 = vunpack.c.l.b16 %v2475
    %v3019 = vunpack.c.h.b16 %v2475
    %v3020 = vunpack.c.l.b16 %v2476
    %v3021 = vunpack.c.h.b16 %v2476
    %v3022 = vunpack.c.l.b16 %v2477
    %v3023 = vunpack.c.h.b16 %v2477
    %v3024 = vunpack.c.l.b16 %v2478
    %v3025 = vunpack.c.h.b16 %v2478
    %v3026 = vunpack.c.l.b16 %v2479
    %v3027 = vunpack.c.h.b16 %v2479
    %v3028 = vunpack.c.l.b16 %v2480
    %v3029 = vunpack.c.h.b16 %v2480
    %v3030 = vunpack.c.l.b16 %v2481
    %v3031 = vunpack.c.h.b16 %v2481
    %v3032 = vunpack.c.l.b16 %v2482
    %v3033 = vunpack.c.h.b16 %v2482
    %v3034 = vunpack.c.l.b16 %v2483
    %v3035 = vunpack.c.h.b16 %v2483
    %v3036 = vunpack.c.l.b16 %v2484
    %v3037 = vunpack.c.h.b16 %v2484
    %v3038 = vunpack.c.l.b16 %v2485
    %v3039 = vunpack.c.h.b16 %v2485
    %v3040 = vunpack.c.l.b16 %v2486
    %v3041 = vunpack.c.h.b16 %v2486
    %v3042 = vunpack.c.l.b16 %v2487
    %v3043 = vunpack.c.h.b16 %v2487
    %v3044 = vunpack.c.l.b16 %v2488
    %v3045 = vunpack.c.h.b16 %v2488
    %v3046 = vunpack.c.l.b16 %v2489
    %v3047 = vunpack.c.h.b16 %v2489
    %v3048 = vunpack.c.l.b16 %v2490
    %v3049 = vunpack.c.h.b16 %v2490
    %v3050 = vunpack.c.l.b16 %v2491
    %v3051 = vunpack.c.h.b16 %v2491
    %v3052 = vunpack.c.l.b16 %v2492
    %v3053 = vunpack.c.h.b16 %v2492
    %v3054 = vunpack.c.l.b16 %v2493
    %v3055 = vunpack.c.h.b16 %v2493
    %v3056 = vunpack.c.l.b16 %v2494
    %v3057 = vunpack.c.h.b16 %v2494
    %v3058 = vunpack.c.l.b16 %v2495
    %v3059 = vunpack.c.h.b16 %v2495
    %v3060 = vunpack.c.l.b16 %v2496
    %v3061 = vunpack.c.h.b16 %v2496
    %v3062 = vunpack.c.l.b16 %v2497
    %v3063 = vunpack.c.h.b16 %v2497
    %v3064 = vunpack.c.l.b16 %v2498
    %v3065 = vunpack.c.h.b16 %v2498
    %v3066 = vunpack.c.l.b16 %v2499
    %v3067 = vunpack.c.h.b16 %v2499
    %v3068 = vunpack.c.l.b16 %v2500
    %v3069 = vunpack.c.h.b16 %v2500
    %v3070 = vunpack.c.l.b16 %v2501
    %v3071 = vunpack.c.h.b16 %v2501
    %v3072 = vunpack.c.l.b16 %v2502
    %v3073 = vunpack.c.h.b16 %v2502
    %v3074 = vunpack.c.l.b16 %v2503
    %v3075 = vunpack.c.h.b16 %v2503
    %v3076 = vunpack.c.l.b16 %v2504
    %v3077 = vunpack.c.h.b16 %v2504
    %v3078 = vunpack.c.l.b16 %v2505
    %v3079 = vunpack.c.h.b16 %v2505
    %v3080 = vunpack.c.l.b16 %v2506
    %v3081 = vunpack.c.h.b16 %v2506
    %v3082 = vunpack.c.l.b16 %v2507
    %v3083 = vunpack.c.h.b16 %v2507
    %v3084 = vunpack.c.l.b16 %v2508
    %v3085 = vunpack.c.h.b16 %v2508
    %v3086 = vunpack.c.l.b16 %v2509
    %v3087 = vunpack.c.h.b16 %v2509
    %v3088 = vunpack.c.l.b16 %v2510
    %v3089 = vunpack.c.h.b16 %v2510
    %v3090 = vunpack.c.l.b16 %v2511
    %v3091 = vunpack.c.h.b16 %v2511
    %v3092 = vunpack.c.l.b16 %v2512
    %v3093 = vunpack.c.h.b16 %v2512
    %v3094 = vunpack.c.l.b16 %v2513
    %v3095 = vunpack.c.h.b16 %v2513
    %v3096 = vunpack.c.l.b16 %v2514
    %v3097 = vunpack.c.h.b16 %v2514
    %v3098 = vunpack.c.l.b16 %v2515
    %v3099 = vunpack.c.h.b16 %v2515
    %v3100 = vunpack.c.l.b16 %v2516
    %v3101 = vunpack.c.h.b16 %v2516
    %v3102 = vunpack.c.l.b16 %v2517
    %v3103 = vunpack.c.h.b16 %v2517
    %v3104 = vunpack.c.l.b16 %v2518
    %v3105 = vunpack.c.h.b16 %v2518
    %v3106 = vunpack.c.l.b16 %v2519
    %v3107 = vunpack.c.h.b16 %v2519
    %v3108 = vunpack.c.l.b16 %v2520
    %v3109 = vunpack.c.h.b16 %v2520
    %v3110 = vunpack.c.l.b16 %v2521
    %v3111 = vunpack.c.h.b16 %v2521
    %v3112 = vunpack.c.l.b16 %v2522
    %v3113 = vunpack.c.h.b16 %v2522
    %v3114 = vunpack.c.l.b16 %v2523
    %v3115 = vunpack.c.h.b16 %v2523
    %v3116 = vunpack.c.l.b16 %v2524
    %v3117 = vunpack.c.h.b16 %v2524
    %v3118 = vunpack.c.l.b16 %v2525
    %v3119 = vunpack.c.h.b16 %v2525
    %v3120 = vunpack.c.l.b16 %v2526
    %v3121 = vunpack.c.h.b16 %v2526
    %v3122 = vunpack.c.l.b16 %v2527
    %v3123 = vunpack.c.h.b16 %v2527
    %v3124 = vunpack.c.l.b16 %v2528
    %v3125 = vunpack.c.h.b16 %v2528
    %v3126 = vunpack.c.l.b16 %v2529
    %v3127 = vunpack.c.h.b16 %v2529
    %v3128 = vunpack.c.l.b16 %v2530
    %v3129 = vunpack.c.h.b16 %v2530
    %v3130 = vunpack.c.l.b16 %v2531
    %v3131 = vunpack.c.h.b16 %v2531
    %v3132 = vunpack.c.l.b16 %v2532
    %v3133 = vunpack.c.h.b16 %v2532
    %v3134 = vunpack.c.l.b16 %v2533
    %v3135 = vunpack.c.h.b16 %v2533
    %v3136 = vunpack.c.l.b16 %v2534
    %v3137 = vunpack.c.h.b16 %v2534
    %v3138 = vunpack.c.l.b16 %v2535
    %v3139 = vunpack.c.h.b16 %v2535
    %v3140 = vunpack.c.l.b16 %v2536
    %v3141 = vunpack.c.h.b16 %v2536
    %v3142 = vunpack.c.l.b16 %v2537
    %v3143 = vunpack.c.h.b16 %v2537
    %v3144 = vunpack.c.l.b16 %v2538
    %v3145 = vunpack.c.h.b16 %v2538
    %v3146 = vunpack.c.l.b16 %v2539
    %v3147 = vunpack.c.h.b16 %v2539
    %v3148 = vunpack.c.l.b16 %v2540
    %v3149 = vunpack.c.h.b16 %v2540
    %v3150 = vunpack.c.l.b16 %v2541
    %v3151 = vunpack.c.h.b16 %v2541
    %v3152 = vunpack.c.l.b16 %v2542
    %v3153 = vunpack.c.h.b16 %v2542
    %v3154 = vunpack.c.l.b16 %v2543
    %v3155 = vunpack.c.h.b16 %v2543
    %v3156 = vunpack.c.l.b16 %v2544
    %v3157 = vunpack.c.h.b16 %v2544
    %v3158 = vunpack.c.l.b16 %v2545
    %v3159 = vunpack.c.h.b16 %v2545
    %v3160 = vunpack.c.l.b16 %v2546
    %v3161 = vunpack.c.h.b16 %v2546
    %v3162 = vunpack.c.l.b16 %v2547
    %v3163 = vunpack.c.h.b16 %v2547
    %v3164 = vunpack.c.l.b16 %v2548
    %v3165 = vunpack.c.h.b16 %v2548
    %v3166 = vunpack.c.l.b16 %v2549
    %v3167 = vunpack.c.h.b16 %v2549
    %v3168 = vunpack.c.l.b16 %v2550
    %v3169 = vunpack.c.h.b16 %v2550
    %v3170 = vunpack.c.l.b16 %v2551
    %v3171 = vunpack.c.h.b16 %v2551
    %v3172 = vunpack.c.l.b16 %v2552
    %v3173 = vunpack.c.h.b16 %v2552
    %v3174 = vunpack.c.l.b16 %v2553
    %v3175 = vunpack.c.h.b16 %v2553
    %v3176 = vunpack.c.l.b16 %v2554
    %v3177 = vunpack.c.h.b16 %v2554
    %v3178 = vunpack.c.l.b16 %v2555
    %v3179 = vunpack.c.h.b16 %v2555
    %v3180 = vunpack.c.l.b16 %v2556
    %v3181 = vunpack.c.h.b16 %v2556
    %v3182 = vunpack.c.l.b16 %v2557
    %v3183 = vunpack.c.h.b16 %v2557
    %v3184 = vunpack.c.l.b16 %v2558
    %v3185 = vunpack.c.h.b16 %v2558
    %v3186 = vunpack.c.l.b16 %v2559
    %v3187 = vunpack.c.h.b16 %v2559
    %v3188 = vunpack.c.l.b16 %v2560
    %v3189 = vunpack.c.h.b16 %v2560
    %v3190 = vunpack.c.l.b16 %v2561
    %v3191 = vunpack.c.h.b16 %v2561
    %v3192 = vunpack.c.l.b16 %v2562
    %v3193 = vunpack.c.h.b16 %v2562
    %v3194 = vunpack.c.l.b16 %v2563
    %v3195 = vunpack.c.h.b16 %v2563
    %v3196 = vunpack.c.l.b16 %v2564
    %v3197 = vunpack.c.h.b16 %v2564
    %v3198 = vunpack.c.l.b16 %v2565
    %v3199 = vunpack.c.h.b16 %v2565
    %v3200 = vunpack.c.l.b16 %v2566
    %v3201 = vunpack.c.h.b16 %v2566
    %v3202 = vunpack.c.l.b16 %v2567
    %v3203 = vunpack.c.h.b16 %v2567
    %v3204 = vunpack.c.l.b16 %v2568
    %v3205 = vunpack.c.h.b16 %v2568
    %v3206 = vunpack.c.l.b16 %v2569
    %v3207 = vunpack.c.h.b16 %v2569
    %v3208 = vunpack.c.l.b16 %v2570
    %v3209 = vunpack.c.h.b16 %v2570
    %v3210 = vunpack.c.l.b16 %v2571
    %v3211 = vunpack.c.h.b16 %v2571
    %v3212 = vunpack.c.l.b16 %v2572
    %v3213 = vunpack.c.h.b16 %v2572
    %v3214 = vunpack.c.l.b16 %v2573
    %v3215 = vunpack.c.h.b16 %v2573
    %v3216 = vunpack.c.l.b16 %v2574
    %v3217 = vunpack.c.h.b16 %v2574
    %v3218 = vunpack.c.l.b16 %v2575
    %v3219 = vunpack.c.h.b16 %v2575
    %v3220 = vunpack.c.l.b16 %v2576
    %v3221 = vunpack.c.h.b16 %v2576
    %v3222 = vunpack.c.l.b16 %v2577
    %v3223 = vunpack.c.h.b16 %v2577
    %v3224 = vunpack.c.l.b16 %v2578
    %v3225 = vunpack.c.h.b16 %v2578
    %v3226 = vunpack.c.l.b16 %v2579
    %v3227 = vunpack.c.h.b16 %v2579
    %v3228 = vunpack.c.l.b16 %v2580
    %v3229 = vunpack.c.h.b16 %v2580
    %v3230 = vunpack.c.l.b16 %v2581
    %v3231 = vunpack.c.h.b16 %v2581
    %v3232 = vunpack.c.l.b16 %v2582
    %v3233 = vunpack.c.h.b16 %v2582
    %v3234 = vunpack.c.l.b16 %v2583
    %v3235 = vunpack.c.h.b16 %v2583
    %v3236 = vunpack.c.l.b16 %v2584
    %v3237 = vunpack.c.h.b16 %v2584
    %v3238 = vunpack.c.l.b16 %v2585
    %v3239 = vunpack.c.h.b16 %v2585
    %v3240 = vunpack.c.l.b16 %v2586
    %v3241 = vunpack.c.h.b16 %v2586
    %v3242 = vunpack.c.l.b16 %v2587
    %v3243 = vunpack.c.h.b16 %v2587
    %v3244 = vunpack.c.l.b16 %v2588
    %v3245 = vunpack.c.h.b16 %v2588
    %v3246 = vunpack.c.l.b16 %v2589
    %v3247 = vunpack.c.h.b16 %v2589
    %v3248 = vunpack.c.l.b16 %v2590
    %v3249 = vunpack.c.h.b16 %v2590
    %v3250 = vunpack.c.l.b16 %v2591
    %v3251 = vunpack.c.h.b16 %v2591
    %v3252 = vunpack.c.l.b16 %v2592
    %v3253 = vunpack.c.h.b16 %v2592
    %v3254 = vunpack.c.l.b16 %v2593
    %v3255 = vunpack.c.h.b16 %v2593
    %v3256 = vunpack.c.l.b16 %v2594
    %v3257 = vunpack.c.h.b16 %v2594
    %v3258 = vunpack.c.l.b16 %v2595
    %v3259 = vunpack.c.h.b16 %v2595
    %v3260 = vunpack.c.l.b16 %v2596
    %v3261 = vunpack.c.h.b16 %v2596
    %v3262 = vunpack.c.l.b16 %v2597
    %v3263 = vunpack.c.h.b16 %v2597
    %v3264 = vunpack.c.l.b16 %v2598
    %v3265 = vunpack.c.h.b16 %v2598
    %v3266 = vunpack.c.l.b16 %v2599
    %v3267 = vunpack.c.h.b16 %v2599
    %v3268 = vunpack.c.l.b16 %v2600
    %v3269 = vunpack.c.h.b16 %v2600
    %v3270 = vunpack.c.l.b16 %v2601
    %v3271 = vunpack.c.h.b16 %v2601
    %v3272 = vunpack.c.l.b16 %v2602
    %v3273 = vunpack.c.h.b16 %v2602
    %v3274 = vunpack.c.l.b16 %v2603
    %v3275 = vunpack.c.h.b16 %v2603
    %v3276 = vunpack.c.l.b16 %v2604
    %v3277 = vunpack.c.h.b16 %v2604
    %v3278 = vunpack.c.l.b16 %v2605
    %v3279 = vunpack.c.h.b16 %v2605
    %v3280 = vunpack.c.l.b16 %v2606
    %v3281 = vunpack.c.h.b16 %v2606
    %v3282 = vunpack.c.l.b16 %v2607
    %v3283 = vunpack.c.h.b16 %v2607
    %v3284 = vunpack.c.l.b16 %v2608
    %v3285 = vunpack.c.h.b16 %v2608
    %v3286 = vunpack.c.l.b16 %v2609
    %v3287 = vunpack.c.h.b16 %v2609
    %v3288 = vunpack.c.l.b16 %v2610
    %v3289 = vunpack.c.h.b16 %v2610
    %v3290 = vunpack.c.l.b16 %v2611
    %v3291 = vunpack.c.h.b16 %v2611
    %v3292 = vunpack.c.l.b16 %v2612
    %v3293 = vunpack.c.h.b16 %v2612
    %v3294 = vunpack.c.l.b16 %v2613
    %v3295 = vunpack.c.h.b16 %v2613
    %v3296 = vunpack.c.l.b16 %v2614
    %v3297 = vunpack.c.h.b16 %v2614
    %v3298 = vunpack.c.l.b16 %v2615
    %v3299 = vunpack.c.h.b16 %v2615
    %v3300 = vunpack.c.l.b16 %v2616
    %v3301 = vunpack.c.h.b16 %v2616
    %v3302 = vunpack.c.l.b16 %v2617
    %v3303 = vunpack.c.h.b16 %v2617
    %v3304 = vunpack.c.l.b16 %v2618
    %v3305 = vunpack.c.h.b16 %v2618
    %v3306 = vunpack.c.l.b16 %v2619
    %v3307 = vunpack.c.h.b16 %v2619
    %v3308 = vunpack.c.l.b16 %v2620
    %v3309 = vunpack.c.h.b16 %v2620
    %v3310 = vunpack.c.l.b16 %v2621
    %v3311 = vunpack.c.h.b16 %v2621
    %v3312 = vunpack.c.l.b16 %v2622
    %v3313 = vunpack.c.h.b16 %v2622
    %v3314 = vunpack.c.l.b16 %v2623
    %v3315 = vunpack.c.h.b16 %v2623
    %v3316 = vunpack.c.l.b16 %v2624
    %v3317 = vunpack.c.h.b16 %v2624
    %v3318 = vunpack.c.l.b16 %v2625
    %v3319 = vunpack.c.h.b16 %v2625
    %v3320 = vunpack.c.l.b16 %v2626
    %v3321 = vunpack.c.h.b16 %v2626
    %v3322 = vunpack.c.l.b16 %v2627
    %v3323 = vunpack.c.h.b16 %v2627
    %v3324 = vunpack.c.l.b16 %v2628
    %v3325 = vunpack.c.h.b16 %v2628
    %v3326 = vunpack.c.l.b16 %v2629
    %v3327 = vunpack.c.h.b16 %v2629
    %v3328 = vunpack.c.l.b16 %v2630
    %v3329 = vunpack.c.h.b16 %v2630
    %v3330 = vunpack.c.l.b16 %v2631
    %v3331 = vunpack.c.h.b16 %v2631
    %v3332 = vunpack.c.l.b16 %v2632
    %v3333 = vunpack.c.h.b16 %v2632
    %v3334 = vunpack.c.l.b16 %v2633
    %v3335 = vunpack.c.h.b16 %v2633
    %v3336 = vunpack.c.l.b16 %v2634
    %v3337 = vunpack.c.h.b16 %v2634
    %v3338 = vunpack.c.l.b16 %v2635
    %v3339 = vunpack.c.h.b16 %v2635
    %v3340 = vunpack.c.l.b16 %v2636
    %v3341 = vunpack.c.h.b16 %v2636
    %v3342 = vunpack.c.l.b16 %v2637
    %v3343 = vunpack.c.h.b16 %v2637
    %v3344 = vunpack.c.l.b16 %v2638
    %v3345 = vunpack.c.h.b16 %v2638
    %v3346 = vunpack.c.l.b16 %v2639
    %v3347 = vunpack.c.h.b16 %v2639
    %v3348 = vunpack.c.l.b16 %v2640
    %v3349 = vunpack.c.h.b16 %v2640
    %v3350 = vunpack.c.l.b16 %v2641
    %v3351 = vunpack.c.h.b16 %v2641
    %v3352 = vunpack.c.l.b16 %v2642
    %v3353 = vunpack.c.h.b16 %v2642
    %v3354 = vunpack.c.l.b16 %v2643
    %v3355 = vunpack.c.h.b16 %v2643
    %v3356 = vunpack.c.l.b16 %v2644
    %v3357 = vunpack.c.h.b16 %v2644
    %v3358 = vunpack.c.l.b16 %v2645
    %v3359 = vunpack.c.h.b16 %v2645
    %v3360 = vunpack.c.l.b16 %v2646
    %v3361 = vunpack.c.h.b16 %v2646
    %v3362 = vunpack.c.l.b16 %v2647
    %v3363 = vunpack.c.h.b16 %v2647
    %v3364 = vunpack.c.l.b16 %v2648
    %v3365 = vunpack.c.h.b16 %v2648
    %v3366 = vunpack.c.l.b16 %v2649
    %v3367 = vunpack.c.h.b16 %v2649
    %v3368 = vunpack.c.l.b16 %v2650
    %v3369 = vunpack.c.h.b16 %v2650
    %v3370 = vunpack.c.l.b16 %v2651
    %v3371 = vunpack.c.h.b16 %v2651
    %v3372 = vunpack.c.l.b16 %v2652
    %v3373 = vunpack.c.h.b16 %v2652
    %v3374 = vunpack.c.l.b16 %v2653
    %v3375 = vunpack.c.h.b16 %v2653
    %v3376 = vunpack.c.l.b16 %v2654
    %v3377 = vunpack.c.h.b16 %v2654
    %v3378 = vunpack.c.l.b16 %v2655
    %v3379 = vunpack.c.h.b16 %v2655
    %v3380 = vunpack.c.l.b16 %v2656
    %v3381 = vunpack.c.h.b16 %v2656
    %v3382 = vunpack.c.l.b16 %v2657
    %v3383 = vunpack.c.h.b16 %v2657
    %v3384 = vunpack.c.l.b16 %v2658
    %v3385 = vunpack.c.h.b16 %v2658
    %v3386 = vunpack.c.l.b16 %v2659
    %v3387 = vunpack.c.h.b16 %v2659
    %v3388 = vunpack.c.l.b16 %v2660
    %v3389 = vunpack.c.h.b16 %v2660
    %v3390 = vunpack.c.l.b16 %v2661
    %v3391 = vunpack.c.h.b16 %v2661
    %v3392 = vunpack.c.l.b16 %v2662
    %v3393 = vunpack.c.h.b16 %v2662
    %v3394 = vunpack.c.l.b16 %v2663
    %v3395 = vunpack.c.h.b16 %v2663
    %v3396 = vunpack.c.l.b16 %v2664
    %v3397 = vunpack.c.h.b16 %v2664
    %v3398 = vunpack.c.l.b16 %v2665
    %v3399 = vunpack.c.h.b16 %v2665
    %v3400 = vunpack.c.l.b16 %v2666
    %v3401 = vunpack.c.h.b16 %v2666
    %v3402 = vunpack.c.l.b16 %v2667
    %v3403 = vunpack.c.h.b16 %v2667
    %v3404 = vunpack.c.l.b16 %v2668
    %v3405 = vunpack.c.h.b16 %v2668
    %v3406 = vunpack.c.l.b16 %v2669
    %v3407 = vunpack.c.h.b16 %v2669
    %v3408 = vunpack.c.l.b16 %v2670
    %v3409 = vunpack.c.h.b16 %v2670
    %v3410 = vunpack.c.l.b16 %v2671
    %v3411 = vunpack.c.h.b16 %v2671
    %v3412 = vunpack.c.l.b16 %v2672
    %v3413 = vunpack.c.h.b16 %v2672
    %v3414 = vunpack.c.l.b16 %v2673
    %v3415 = vunpack.c.h.b16 %v2673
    %v3416 = vunpack.c.l.b16 %v2674
    %v3417 = vunpack.c.h.b16 %v2674
    %v3418 = vunpack.c.l.b16 %v2675
    %v3419 = vunpack.c.h.b16 %v2675
    %v3420 = vunpack.c.l.b16 %v2676
    %v3421 = vunpack.c.h.b16 %v2676
    %v3422 = vunpack.c.l.b16 %v2677
    %v3423 = vunpack.c.h.b16 %v2677
    %v3424 = vunpack.c.l.b16 %v2678
    %v3425 = vunpack.c.h.b16 %v2678
    %v3426 = vunpack.c.l.b16 %v2679
    %v3427 = vunpack.c.h.b16 %v2679
    %v3428 = vunpack.c.l.b16 %v2680
    %v3429 = vunpack.c.h.b16 %v2680
    %v3430 = vunpack.c.l.b16 %v2681
    %v3431 = vunpack.c.h.b16 %v2681
    %v3432 = vunpack.c.l.b16 %v2682
    %v3433 = vunpack.c.h.b16 %v2682
    %v3434 = vunpack.c.l.b16 %v2683
    %v3435 = vunpack.c.h.b16 %v2683
    %v3436 = vunpack.c.l.b16 %v2684
    %v3437 = vunpack.c.h.b16 %v2684
    %v3438 = vunpack.c.l.b16 %v2685
    %v3439 = vunpack.c.h.b16 %v2685
    %v3440 = vunpack.c.l.b16 %v2686
    %v3441 = vunpack.c.h.b16 %v2686
    %v3442 = vunpack.c.l.b16 %v2687
    %v3443 = vunpack.c.h.b16 %v2687
    %v3444 = vunpack.c.l.b16 %v2688
    %v3445 = vunpack.c.h.b16 %v2688
    %v3446 = vunpack.c.l.b16 %v2689
    %v3447 = vunpack.c.h.b16 %v2689
    %v3448 = vunpack.c.l.b16 %v2690
    %v3449 = vunpack.c.h.b16 %v2690
    %v3450 = vunpack.c.l.b16 %v2691
    %v3451 = vunpack.c.h.b16 %v2691
    %v3452 = vunpack.c.l.b16 %v2692
    %v3453 = vunpack.c.h.b16 %v2692
    %v3454 = vunpack.c.l.b16 %v2693
    %v3455 = vunpack.c.h.b16 %v2693
    %v3456 = vunpack.c.l.b16 %v2694
    %v3457 = vunpack.c.h.b16 %v2694
    %v3458 = vunpack.c.l.b16 %v2695
    %v3459 = vunpack.c.h.b16 %v2695
    %v3460 = vunpack.c.l.b16 %v2696
    %v3461 = vunpack.c.h.b16 %v2696
    %v3462 = vunpack.c.l.b16 %v2697
    %v3463 = vunpack.c.h.b16 %v2697
    %v3464 = vunpack.c.l.b16 %v2698
    %v3465 = vunpack.c.h.b16 %v2698
    %v3466 = vunpack.c.l.b16 %v2699
    %v3467 = vunpack.c.h.b16 %v2699
    %v3468 = vunpack.c.l.b16 %v2700
    %v3469 = vunpack.c.h.b16 %v2700
    %v3470 = vunpack.c.l.b16 %v2701
    %v3471 = vunpack.c.h.b16 %v2701
    %v3472 = vunpack.c.l.b16 %v2702
    %v3473 = vunpack.c.h.b16 %v2702
    %v3474 = vunpack.c.l.b16 %v2703
    %v3475 = vunpack.c.h.b16 %v2703
    %v3476 = vunpack.c.l.b16 %v2704
    %v3477 = vunpack.c.h.b16 %v2704
    %v3478 = vunpack.c.l.b16 %v2705
    %v3479 = vunpack.c.h.b16 %v2705
    %v3480 = vunpack.c.l.b16 %v2706
    %v3481 = vunpack.c.h.b16 %v2706
    %v3482 = vunpack.c.l.b16 %v2707
    %v3483 = vunpack.c.h.b16 %v2707
    %v3484 = vunpack.c.l.b16 %v2708
    %v3485 = vunpack.c.h.b16 %v2708
    %v3486 = vunpack.c.l.b16 %v2709
    %v3487 = vunpack.c.h.b16 %v2709
    %v3488 = vunpack.c.l.b16 %v2710
    %v3489 = vunpack.c.h.b16 %v2710
    %v3490 = vunpack.c.l.b16 %v2711
    %v3491 = vunpack.c.h.b16 %v2711
    %v3492 = vunpack.c.l.b16 %v2712
    %v3493 = vunpack.c.h.b16 %v2712
    %v3494 = vunpack.c.l.b16 %v2713
    %v3495 = vunpack.c.h.b16 %v2713
    %v3496 = vunpack.c.l.b16 %v2714
    %v3497 = vunpack.c.h.b16 %v2714
    %v3498 = vunpack.c.l.b16 %v2715
    %v3499 = vunpack.c.h.b16 %v2715
    %v3500 = vunpack.c.l.b16 %v2716
    %v3501 = vunpack.c.h.b16 %v2716
    %v3502 = vunpack.c.l.b16 %v2717
    %v3503 = vunpack.c.h.b16 %v2717
    %v3504 = vunpack.c.l.b16 %v2718
    %v3505 = vunpack.c.h.b16 %v2718
    %v3506 = vunpack.c.l.b16 %v2719
    %v3507 = vunpack.c.h.b16 %v2719
    %v3508 = vunpack.c.l.b16 %v2720
    %v3509 = vunpack.c.h.b16 %v2720
    %v3510 = vunpack.c.l.b16 %v2721
    %v3511 = vunpack.c.h.b16 %v2721
    %v3512 = vpack.c.b16 %v3004, %v3000
    %v3513 = vpack.c.b16 %v3005, %v3001
    %v3514 = vpack.c.b16 %v3006, %v3002
    %v3515 = vpack.c.b16 %v3007, %v3003
    %v3516 = vpack.c.b16 %v3012, %v3008
    %v3517 = vpack.c.b16 %v3013, %v3009
    %v3518 = vpack.c.b16 %v3014, %v3010
    %v3519 = vpack.c.b16 %v3015, %v3011
    %v3520 = vpack.c.b16 %v3020, %v3016
    %v3521 = vpack.c.b16 %v3021, %v3017
    %v3522 = vpack.c.b16 %v3022, %v3018
    %v3523 = vpack.c.b16 %v3023, %v3019
    %v3524 = vpack.c.b16 %v3028, %v3024
    %v3525 = vpack.c.b16 %v3029, %v3025
    %v3526 = vpack.c.b16 %v3030, %v3026
    %v3527 = vpack.c.b16 %v3031, %v3027
    %v3528 = vpack.c.b16 %v3036, %v3032
    %v3529 = vpack.c.b16 %v3037, %v3033
    %v3530 = vpack.c.b16 %v3038, %v3034
    %v3531 = vpack.c.b16 %v3039, %v3035
    %v3532 = vpack.c.b16 %v3044, %v3040
    %v3533 = vpack.c.b16 %v3045, %v3041
    %v3534 = vpack.c.b16 %v3046, %v3042
    %v3535 = vpack.c.b16 %v3047, %v3043
    %v3536 = vpack.c.b16 %v3052, %v3048
    %v3537 = vpack.c.b16 %v3053, %v3049
    %v3538 = vpack.c.b16 %v3054, %v3050
    %v3539 = vpack.c.b16 %v3055, %v3051
    %v3540 = vpack.c.b16 %v3060, %v3056
    %v3541 = vpack.c.b16 %v3061, %v3057
    %v3542 = vpack.c.b16 %v3062, %v3058
    %v3543 = vpack.c.b16 %v3063, %v3059
    %v3544 = vpack.c.b16 %v3068, %v3064
    %v3545 = vpack.c.b16 %v3069, %v3065
    %v3546 = vpack.c.b16 %v3070, %v3066
    %v3547 = vpack.c.b16 %v3071, %v3067
    %v3548 = vpack.c.b16 %v3076, %v3072
    %v3549 = vpack.c.b16 %v3077, %v3073
    %v3550 = vpack.c.b16 %v3078, %v3074
    %v3551 = vpack.c.b16 %v3079, %v3075
    %v3552 = vpack.c.b16 %v3084, %v3080
    %v3553 = vpack.c.b16 %v3085, %v3081
    %v3554 = vpack.c.b16 %v3086, %v3082
    %v3555 = vpack.c.b16 %v3087, %v3083
    %v3556 = vpack.c.b16 %v3092, %v3088
    %v3557 = vpack.c.b16 %v3093, %v3089
    %v3558 = vpack.c.b16 %v3094, %v3090
    %v3559 = vpack.c.b16 %v3095, %v3091
    %v3560 = vpack.c.b16 %v3100, %v3096
    %v3561 = vpack.c.b16 %v3101, %v3097
    %v3562 = vpack.c.b16 %v3102, %v3098
    %v3563 = vpack.c.b16 %v3103, %v3099
    %v3564 = vpack.c.b16 %v3108, %v3104
    %v3565 = vpack.c.b16 %v3109, %v3105
    %v3566 = vpack.c.b16 %v3110, %v3106
    %v3567 = vpack.c.b16 %v3111, %v3107
    %v3568 = vpack.c.b16 %v3116, %v3112
    %v3569 = vpack.c.b16 %v3117, %v3113
    %v3570 = vpack.c.b16 %v3118, %v3114
    %v3571 = vpack.c.b16 %v3119, %v3115
    %v3572 = vpack.c.b16 %v3124, %v3120
    %v3573 = vpack.c.b16 %v3125, %v3121
    %v3574 = vpack.c.b16 %v3126, %v3122
    %v3575 = vpack.c.b16 %v3127, %v3123
    %v3576 = vpack.c.b16 %v3132, %v3128
    %v3577 = vpack.c.b16 %v3133, %v3129
    %v3578 = vpack.c.b16 %v3134, %v3130
    %v3579 = vpack.c.b16 %v3135, %v3131
    %v3580 = vpack.c.b16 %v3140, %v3136
    %v3581 = vpack.c.b16 %v3141, %v3137
    %v3582 = vpack.c.b16 %v3142, %v3138
    %v3583 = vpack.c.b16 %v3143, %v3139
    %v3584 = vpack.c.b16 %v3148, %v3144
    %v3585 = vpack.c.b16 %v3149, %v3145
    %v3586 = vpack.c.b16 %v3150, %v3146
    %v3587 = vpack.c.b16 %v3151, %v3147
    %v3588 = vpack.c.b16 %v3156, %v3152
    %v3589 = vpack.c.b16 %v3157, %v3153
    %v3590 = vpack.c.b16 %v3158, %v3154
    %v3591 = vpack.c.b16 %v3159, %v3155
    %v3592 = vpack.c.b16 %v3164, %v3160
    %v3593 = vpack.c.b16 %v3165, %v3161
    %v3594 = vpack.c.b16 %v3166, %v3162
    %v3595 = vpack.c.b16 %v3167, %v3163
    %v3596 = vpack.c.b16 %v3172, %v3168
    %v3597 = vpack.c.b16 %v3173, %v3169
    %v3598 = vpack.c.b16 %v3174, %v3170
    %v3599 = vpack.c.b16 %v3175, %v3171
    %v3600 = vpack.c.b16 %v3180, %v3176
    %v3601 = vpack.c.b16 %v3181, %v3177
    %v3602 = vpack.c.b16 %v3182, %v3178
    %v3603 = vpack.c.b16 %v3183, %v3179
    %v3604 = vpack.c.b16 %v3188, %v3184
    %v3605 = vpack.c.b16 %v3189, %v3185
    %v3606 = vpack.c.b16 %v3190, %v3186
    %v3607 = vpack.c.b16 %v3191, %v3187
    %v3608 = vpack.c.b16 %v3196, %v3192
    %v3609 = vpack.c.b16 %v3197, %v3193
    %v3610 = vpack.c.b16 %v3198, %v3194
    %v3611 = vpack.c.b16 %v3199, %v3195
    %v3612 = vpack.c.b16 %v3204, %v3200
    %v3613 = vpack.c.b16 %v3205, %v3201
    %v3614 = vpack.c.b16 %v3206, %v3202
    %v3615 = vpack.c.b16 %v3207, %v3203
    %v3616 = vpack.c.b16 %v3212, %v3208
    %v3617 = vpack.c.b16 %v3213, %v3209
    %v3618 = vpack.c.b16 %v3214, %v3210
    %v3619 = vpack.c.b16 %v3215, %v3211
    %v3620 = vpack.c.b16 %v3220, %v3216
    %v3621 = vpack.c.b16 %v3221, %v3217
    %v3622 = vpack.c.b16 %v3222, %v3218
    %v3623 = vpack.c.b16 %v3223, %v3219
    %v3624 = vpack.c.b16 %v3228, %v3224
    %v3625 = vpack.c.b16 %v3229, %v3225
    %v3626 = vpack.c.b16 %v3230, %v3226
    %v3627 = vpack.c.b16 %v3231, %v3227
    %v3628 = vpack.c.b16 %v3236, %v3232
    %v3629 = vpack.c.b16 %v3237, %v3233
    %v3630 = vpack.c.b16 %v3238, %v3234
    %v3631 = vpack.c.b16 %v3239, %v3235
    %v3632 = vpack.c.b16 %v3244, %v3240
    %v3633 = vpack.c.b16 %v3245, %v3241
    %v3634 = vpack.c.b16 %v3246, %v3242
    %v3635 = vpack.c.b16 %v3247, %v3243
    %v3636 = vpack.c.b16 %v3252, %v3248
    %v3637 = vpack.c.b16 %v3253, %v3249
    %v3638 = vpack.c.b16 %v3254, %v3250
    %v3639 = vpack.c.b16 %v3255, %v3251
    %v3640 = vpack.c.b16 %v3260, %v3256
    %v3641 = vpack.c.b16 %v3261, %v3257
    %v3642 = vpack.c.b16 %v3262, %v3258
    %v3643 = vpack.c.b16 %v3263, %v3259
    %v3644 = vpack.c.b16 %v3268, %v3264
    %v3645 = vpack.c.b16 %v3269, %v3265
    %v3646 = vpack.c.b16 %v3270, %v3266
    %v3647 = vpack.c.b16 %v3271, %v3267
    %v3648 = vpack.c.b16 %v3276, %v3272
    %v3649 = vpack.c.b16 %v3277, %v3273
    %v3650 = vpack.c.b16 %v3278, %v3274
    %v3651 = vpack.c.b16 %v3279, %v3275
    %v3652 = vpack.c.b16 %v3284, %v3280
    %v3653 = vpack.c.b16 %v3285, %v3281
    %v3654 = vpack.c.b16 %v3286, %v3282
    %v3655 = vpack.c.b16 %v3287, %v3283
    %v3656 = vpack.c.b16 %v3292, %v3288
    %v3657 = vpack.c.b16 %v3293, %v3289
    %v3658 = vpack.c.b16 %v3294, %v3290
    %v3659 = vpack.c.b16 %v3295, %v3291
    %v3660 = vpack.c.b16 %v3300, %v3296
    %v3661 = vpack.c.b16 %v3301, %v3297
    %v3662 = vpack.c.b16 %v3302, %v3298
    %v3663 = vpack.c.b16 %v3303, %v3299
    %v3664 = vpack.c.b16 %v3308, %v3304
    %v3665 = vpack.c.b16 %v3309, %v3305
    %v3666 = vpack.c.b16 %v3310, %v3306
    %v3667 = vpack.c.b16 %v3311, %v3307
    %v3668 = vpack.c.b16 %v3316, %v3312
    %v3669 = vpack.c.b16 %v3317, %v3313
    %v3670 = vpack.c.b16 %v3318, %v3314
    %v3671 = vpack.c.b16 %v3319, %v3315
    %v3672 = vpack.c.b16 %v3324, %v3320
    %v3673 = vpack.c.b16 %v3325, %v3321
    %v3674 = vpack.c.b16 %v3326, %v3322
    %v3675 = vpack.c.b16 %v3327, %v3323
    %v3676 = vpack.c.b16 %v3332, %v3328
    %v3677 = vpack.c.b16 %v3333, %v3329
    %v3678 = vpack.c.b16 %v3334, %v3330
    %v3679 = vpack.c.b16 %v3335, %v3331
    %v3680 = vpack.c.b16 %v3340, %v3336
    %v3681 = vpack.c.b16 %v3341, %v3337
    %v3682 = vpack.c.b16 %v3342, %v3338
    %v3683 = vpack.c.b16 %v3343, %v3339
    %v3684 = vpack.c.b16 %v3348, %v3344
    %v3685 = vpack.c.b16 %v3349, %v3345
    %v3686 = vpack.c.b16 %v3350, %v3346
    %v3687 = vpack.c.b16 %v3351, %v3347
    %v3688 = vpack.c.b16 %v3356, %v3352
    %v3689 = vpack.c.b16 %v3357, %v3353
    %v3690 = vpack.c.b16 %v3358, %v3354
    %v3691 = vpack.c.b16 %v3359, %v3355
    %v3692 = vpack.c.b16 %v3364, %v3360
    %v3693 = vpack.c.b16 %v3365, %v3361
    %v3694 = vpack.c.b16 %v3366, %v3362
    %v3695 = vpack.c.b16 %v3367, %v3363
    %v3696 = vpack.c.b16 %v3372, %v3368
    %v3697 = vpack.c.b16 %v3373, %v3369
    %v3698 = vpack.c.b16 %v3374, %v3370
    %v3699 = vpack.c.b16 %v3375, %v3371
    %v3700 = vpack.c.b16 %v3380, %v3376
    %v3701 = vpack.c.b16 %v3381, %v3377
    %v3702 = vpack.c.b16 %v3382, %v3378
    %v3703 = vpack.c.b16 %v3383, %v3379
    %v3704 = vpack.c.b16 %v3388, %v3384
    %v3705 = vpack.c.b16 %v3389, %v3385
    %v3706 = vpack.c.b16 %v3390, %v3386
    %v3707 = vpack.c.b16 %v3391, %v3387
    %v3708 = vpack.c.b16 %v3396, %v3392
    %v3709 = vpack.c.b16 %v3397, %v3393
    %v3710 = vpack.c.b16 %v3398, %v3394
    %v3711 = vpack.c.b16 %v3399, %v3395
    %v3712 = vpack.c.b16 %v3404, %v3400
    %v3713 = vpack.c.b16 %v3405, %v3401
    %v3714 = vpack.c.b16 %v3406, %v3402
    %v3715 = vpack.c.b16 %v3407, %v3403
    %v3716 = vpack.c.b16 %v3412, %v3408
    %v3717 = vpack.c.b16 %v3413, %v3409
    %v3718 = vpack.c.b16 %v3414, %v3410
    %v3719 = vpack.c.b16 %v3415, %v3411
    %v3720 = vpack.c.b16 %v3420, %v3416
    %v3721 = vpack.c.b16 %v3421, %v3417
    %v3722 = vpack.c.b16 %v3422, %v3418
    %v3723 = vpack.c.b16 %v3423, %v3419
    %v3724 = vpack.c.b16 %v3428, %v3424
    %v3725 = vpack.c.b16 %v3429, %v3425
    %v3726 = vpack.c.b16 %v3430, %v3426
    %v3727 = vpack.c.b16 %v3431, %v3427
    %v3728 = vpack.c.b16 %v3436, %v3432
    %v3729 = vpack.c.b16 %v3437, %v3433
    %v3730 = vpack.c.b16 %v3438, %v3434
    %v3731 = vpack.c.b16 %v3439, %v3435
    %v3732 = vpack.c.b16 %v3444, %v3440
    %v3733 = vpack.c.b16 %v3445, %v3441
    %v3734 = vpack.c.b16 %v3446, %v3442
    %v3735 = vpack.c.b16 %v3447, %v3443
    %v3736 = vpack.c.b16 %v3452, %v3448
    %v3737 = vpack.c.b16 %v3453, %v3449
    %v3738 = vpack.c.b16 %v3454, %v3450
    %v3739 = vpack.c.b16 %v3455, %v3451
    %v3740 = vpack.c.b16 %v3460, %v3456
    %v3741 = vpack.c.b16 %v3461, %v3457
    %v3742 = vpack.c.b16 %v3462, %v3458
    %v3743 = vpack.c.b16 %v3463, %v3459
    %v3744 = vpack.c.b16 %v3468, %v3464
    %v3745 = vpack.c.b16 %v3469, %v3465
    %v3746 = vpack.c.b16 %v3470, %v3466
    %v3747 = vpack.c.b16 %v3471, %v3467
    %v3748 = vpack.c.b16 %v3476, %v3472
    %v3749 = vpack.c.b16 %v3477, %v3473
    %v3750 = vpack.c.b16 %v3478, %v3474
    %v3751 = vpack.c.b16 %v3479, %v3475
    %v3752 = vpack.c.b16 %v3484, %v3480
    %v3753 = vpack.c.b16 %v3485, %v3481
    %v3754 = vpack.c.b16 %v3486, %v3482
    %v3755 = vpack.c.b16 %v3487, %v3483
    %v3756 = vpack.c.b16 %v3492, %v3488
    %v3757 = vpack.c.b16 %v3493, %v3489
    %v3758 = vpack.c.b16 %v3494, %v3490
    %v3759 = vpack.c.b16 %v3495, %v3491
    %v3760 = vpack.c.b16 %v3500, %v3496
    %v3761 = vpack.c.b16 %v3501, %v3497
    %v3762 = vpack.c.b16 %v3502, %v3498
    %v3763 = vpack.c.b16 %v3503, %v3499
    %v3764 = vpack.c.b16 %v3508, %v3504
    %v3765 = vpack.c.b16 %v3509, %v3505
    %v3766 = vpack.c.b16 %v3510, %v3506
    %v3767 = vpack.c.b16 %v3511, %v3507
    %4024 = vmatprep.subr.bf16.mxu0 %v3513
    %4025 = vmatpush1.bf16.msra.mxu0 %v3512
    %4026 = vmatprep.subr.bf16.mxu0 %v3517
    %4027 = vmatpush1.bf16.msra.mxu0 %v3516
    %4028 = vmatprep.subr.bf16.mxu0 %v3521
    %4029 = vmatpush1.bf16.msra.mxu0 %v3520
    %4030 = vmatprep.subr.bf16.mxu0 %v3525
    %4031 = vmatpush1.bf16.msra.mxu0 %v3524
    %4032 = vmatprep.subr.bf16.mxu0 %v3529
    %4033 = vmatpush1.bf16.msra.mxu0 %v3528
    %4034 = vmatprep.subr.bf16.mxu0 %v3533
    %4035 = vmatpush1.bf16.msra.mxu0 %v3532
    %4036 = vmatprep.subr.bf16.mxu0 %v3537
    %4037 = vmatpush1.bf16.msra.mxu0 %v3536
    %4038 = vmatprep.subr.bf16.mxu0 %v3541
    %4039 = vmatpush1.bf16.msra.mxu0 %v3540
    %4040 = vmatprep.subr.bf16.mxu0 %v3545
    %4041 = vmatpush1.bf16.msra.mxu0 %v3544
    %4042 = vmatprep.subr.bf16.mxu0 %v3549
    %4043 = vmatpush1.bf16.msra.mxu0 %v3548
    %4044 = vmatprep.subr.bf16.mxu0 %v3553
    %4045 = vmatpush1.bf16.msra.mxu0 %v3552
    %4046 = vmatprep.subr.bf16.mxu0 %v3557
    %4047 = vmatpush1.bf16.msra.mxu0 %v3556
    %4048 = vmatprep.subr.bf16.mxu0 %v3561
    %4049 = vmatpush1.bf16.msra.mxu0 %v3560
    %4050 = vmatprep.subr.bf16.mxu0 %v3565
    %4051 = vmatpush1.bf16.msra.mxu0 %v3564
    %4052 = vmatprep.subr.bf16.mxu0 %v3569
    %4053 = vmatpush1.bf16.msra.mxu0 %v3568
    %4054 = vmatprep.subr.bf16.mxu0 %v3573
    %4055 = vmatpush1.bf16.msra.mxu0 %v3572
    %4056 = vmatprep.mubr.bf16.mxu0 %v2459
    %4057 = vmatmul.mubr.bf16.gmra.mrb[0].mxu0 %v2458
    %v4058 = vpop.f32.mrb[0].mxu0
    %v4059 = vadd.f32 %v2727, %v4058
    %v4060 = vpop.f32.mrb[0].mxu0
    %v4061 = vadd.f32 %v2731, %v4060
    %v4062 = vpop.f32.mrb[0].mxu0
    %v4063 = vpop.f32.mrb[0].mxu0
    %4064 = vdwg.mxu0
    %4065 = vmatprep.subr.bf16.mxu0 %v3577
    %4066 = vmatpush1.bf16.msra.mxu0 %v3576
    %4067 = vmatprep.subr.bf16.mxu0 %v3581
    %4068 = vmatpush1.bf16.msra.mxu0 %v3580
    %4069 = vmatprep.subr.bf16.mxu0 %v3585
    %4070 = vmatpush1.bf16.msra.mxu0 %v3584
    %4071 = vmatprep.subr.bf16.mxu0 %v3589
    %4072 = vmatpush1.bf16.msra.mxu0 %v3588
    %4073 = vmatprep.subr.bf16.mxu0 %v3593
    %4074 = vmatpush1.bf16.msra.mxu0 %v3592
    %4075 = vmatprep.subr.bf16.mxu0 %v3597
    %4076 = vmatpush1.bf16.msra.mxu0 %v3596
    %4077 = vmatprep.subr.bf16.mxu0 %v3601
    %4078 = vmatpush1.bf16.msra.mxu0 %v3600
    %4079 = vmatprep.subr.bf16.mxu0 %v3605
    %4080 = vmatpush1.bf16.msra.mxu0 %v3604
    %4081 = vmatprep.subr.bf16.mxu0 %v3609
    %4082 = vmatpush1.bf16.msra.mxu0 %v3608
    %4083 = vmatprep.subr.bf16.mxu0 %v3613
    %4084 = vmatpush1.bf16.msra.mxu0 %v3612
    %4085 = vmatprep.subr.bf16.mxu0 %v3617
    %4086 = vmatpush1.bf16.msra.mxu0 %v3616
    %4087 = vmatprep.subr.bf16.mxu0 %v3621
    %4088 = vmatpush1.bf16.msra.mxu0 %v3620
    %4089 = vmatprep.subr.bf16.mxu0 %v3625
    %4090 = vmatpush1.bf16.msra.mxu0 %v3624
    %4091 = vmatprep.subr.bf16.mxu0 %v3629
    %4092 = vmatpush1.bf16.msra.mxu0 %v3628
    %4093 = vmatprep.subr.bf16.mxu0 %v3633
    %4094 = vmatpush1.bf16.msra.mxu0 %v3632
    %4095 = vmatprep.subr.bf16.mxu0 %v3637
    %4096 = vmatpush1.bf16.msra.mxu0 %v3636
    %4097 = vmatprep.mubr.bf16.mxu0 %v2461
    %4098 = vmatmul.mubr.bf16.gmra.mrb[0].mxu0 %v2460
    %v4099 = vpop.f32.mrb[0].mxu0
    %v4100 = vadd.f32 %v4059, %v4099
    %v4101 = vpop.f32.mrb[0].mxu0
    %v4102 = vadd.f32 %v4061, %v4101
    %v4103 = vpop.f32.mrb[0].mxu0
    %v4104 = vpop.f32.mrb[0].mxu0
    %4105 = vdwg.mxu0
    %4106 = vmatprep.subr.bf16.mxu0 %v3641
    %4107 = vmatpush1.bf16.msra.mxu0 %v3640
    %4108 = vmatprep.subr.bf16.mxu0 %v3645
    %4109 = vmatpush1.bf16.msra.mxu0 %v3644
    %4110 = vmatprep.subr.bf16.mxu0 %v3649
    %4111 = vmatpush1.bf16.msra.mxu0 %v3648
    %4112 = vmatprep.subr.bf16.mxu0 %v3653
    %4113 = vmatpush1.bf16.msra.mxu0 %v3652
    %4114 = vmatprep.subr.bf16.mxu0 %v3657
    %4115 = vmatpush1.bf16.msra.mxu0 %v3656
    %4116 = vmatprep.subr.bf16.mxu0 %v3661
    %4117 = vmatpush1.bf16.msra.mxu0 %v3660
    %4118 = vmatprep.subr.bf16.mxu0 %v3665
    %4119 = vmatpush1.bf16.msra.mxu0 %v3664
    %4120 = vmatprep.subr.bf16.mxu0 %v3669
    %4121 = vmatpush1.bf16.msra.mxu0 %v3668
    %4122 = vmatprep.subr.bf16.mxu0 %v3673
    %4123 = vmatpush1.bf16.msra.mxu0 %v3672
    %4124 = vmatprep.subr.bf16.mxu0 %v3677
    %4125 = vmatpush1.bf16.msra.mxu0 %v3676
    %4126 = vmatprep.subr.bf16.mxu0 %v3681
    %4127 = vmatpush1.bf16.msra.mxu0 %v3680
    %4128 = vmatprep.subr.bf16.mxu0 %v3685
    %4129 = vmatpush1.bf16.msra.mxu0 %v3684
    %4130 = vmatprep.subr.bf16.mxu0 %v3689
    %4131 = vmatpush1.bf16.msra.mxu0 %v3688
    %4132 = vmatprep.subr.bf16.mxu0 %v3693
    %4133 = vmatpush1.bf16.msra.mxu0 %v3692
    %4134 = vmatprep.subr.bf16.mxu0 %v3697
    %4135 = vmatpush1.bf16.msra.mxu0 %v3696
    %4136 = vmatprep.subr.bf16.mxu0 %v3701
    %4137 = vmatpush1.bf16.msra.mxu0 %v3700
    %4138 = vmatprep.mubr.bf16.mxu0 %v2463
    %4139 = vmatmul.mubr.bf16.gmra.mrb[0].mxu0 %v2462
    %v4140 = vpop.f32.mrb[0].mxu0
    %v4141 = vadd.f32 %v4100, %v4140
    %v4142 = vpop.f32.mrb[0].mxu0
    %v4143 = vadd.f32 %v4102, %v4142
    %v4144 = vpop.f32.mrb[0].mxu0
    %v4145 = vpop.f32.mrb[0].mxu0
    %4146 = vdwg.mxu0
    %4147 = vmatprep.subr.bf16.mxu0 %v3705
    %4148 = vmatpush1.bf16.msra.mxu0 %v3704
    %4149 = vmatprep.subr.bf16.mxu0 %v3709
    %4150 = vmatpush1.bf16.msra.mxu0 %v3708
    %4151 = vmatprep.subr.bf16.mxu0 %v3713
    %4152 = vmatpush1.bf16.msra.mxu0 %v3712
    %4153 = vmatprep.subr.bf16.mxu0 %v3717
    %4154 = vmatpush1.bf16.msra.mxu0 %v3716
    %4155 = vmatprep.subr.bf16.mxu0 %v3721
    %4156 = vmatpush1.bf16.msra.mxu0 %v3720
    %4157 = vmatprep.subr.bf16.mxu0 %v3725
    %4158 = vmatpush1.bf16.msra.mxu0 %v3724
    %4159 = vmatprep.subr.bf16.mxu0 %v3729
    %4160 = vmatpush1.bf16.msra.mxu0 %v3728
    %4161 = vmatprep.subr.bf16.mxu0 %v3733
    %4162 = vmatpush1.bf16.msra.mxu0 %v3732
    %4163 = vmatprep.subr.bf16.mxu0 %v3737
    %4164 = vmatpush1.bf16.msra.mxu0 %v3736
    %4165 = vmatprep.subr.bf16.mxu0 %v3741
    %4166 = vmatpush1.bf16.msra.mxu0 %v3740
    %4167 = vmatprep.subr.bf16.mxu0 %v3745
    %4168 = vmatpush1.bf16.msra.mxu0 %v3744
    %4169 = vmatprep.subr.bf16.mxu0 %v3749
    %4170 = vmatpush1.bf16.msra.mxu0 %v3748
    %4171 = vmatprep.subr.bf16.mxu0 %v3753
    %4172 = vmatpush1.bf16.msra.mxu0 %v3752
    %4173 = vmatprep.subr.bf16.mxu0 %v3757
    %4174 = vmatpush1.bf16.msra.mxu0 %v3756
    %4175 = vmatprep.subr.bf16.mxu0 %v3761
    %4176 = vmatpush1.bf16.msra.mxu0 %v3760
    %4177 = vmatprep.subr.bf16.mxu0 %v3765
    %4178 = vmatpush1.bf16.msra.mxu0 %v3764
    %4179 = vmatprep.mubr.bf16.mxu0 %v2465
    %4180 = vmatmul.mubr.bf16.gmra.mrb[0].mxu0 %v2464
    %v4181 = vpop.f32.mrb[0].mxu0
    %v4182 = vadd.f32 %v4141, %v4181
    %v4183 = vpop.f32.mrb[0].mxu0
    %v4184 = vadd.f32 %v4143, %v4183
    %v4185 = vpop.f32.mrb[0].mxu0
    %v4186 = vpop.f32.mrb[0].mxu0
    %4187 = vdwg.mxu0
    %4188 = vmatprep.subr.bf16.mxu0 %v3515
    %4189 = vmatpush1.bf16.msra.mxu0 %v3514
    %4190 = vmatprep.subr.bf16.mxu0 %v3519
    %4191 = vmatpush1.bf16.msra.mxu0 %v3518
    %4192 = vmatprep.subr.bf16.mxu0 %v3523
    %4193 = vmatpush1.bf16.msra.mxu0 %v3522
    %4194 = vmatprep.subr.bf16.mxu0 %v3527
    %4195 = vmatpush1.bf16.msra.mxu0 %v3526
    %4196 = vmatprep.subr.bf16.mxu0 %v3531
    %4197 = vmatpush1.bf16.msra.mxu0 %v3530
    %4198 = vmatprep.subr.bf16.mxu0 %v3535
    %4199 = vmatpush1.bf16.msra.mxu0 %v3534
    %4200 = vmatprep.subr.bf16.mxu0 %v3539
    %4201 = vmatpush1.bf16.msra.mxu0 %v3538
    %4202 = vmatprep.subr.bf16.mxu0 %v3543
    %4203 = vmatpush1.bf16.msra.mxu0 %v3542
    %4204 = vmatprep.subr.bf16.mxu0 %v3547
    %4205 = vmatpush1.bf16.msra.mxu0 %v3546
    %4206 = vmatprep.subr.bf16.mxu0 %v3551
    %4207 = vmatpush1.bf16.msra.mxu0 %v3550
    %4208 = vmatprep.subr.bf16.mxu0 %v3555
    %4209 = vmatpush1.bf16.msra.mxu0 %v3554
    %4210 = vmatprep.subr.bf16.mxu0 %v3559
    %4211 = vmatpush1.bf16.msra.mxu0 %v3558
    %4212 = vmatprep.subr.bf16.mxu0 %v3563
    %4213 = vmatpush1.bf16.msra.mxu0 %v3562
    %4214 = vmatprep.subr.bf16.mxu0 %v3567
    %4215 = vmatpush1.bf16.msra.mxu0 %v3566
    %4216 = vmatprep.subr.bf16.mxu0 %v3571
    %4217 = vmatpush1.bf16.msra.mxu0 %v3570
    %4218 = vmatprep.subr.bf16.mxu0 %v3575
    %4219 = vmatpush1.bf16.msra.mxu0 %v3574
    %4220 = vmatprep.mubr.bf16.mxu0 %v2459
    %4221 = vmatmul.mubr.bf16.gmra.mrb[0].mxu0 %v2458
    %v4222 = vpop.f32.mrb[0].mxu0
    %v4223 = vadd.f32 %v2735, %v4222
    %v4224 = vpop.f32.mrb[0].mxu0
    %v4225 = vadd.f32 %v2739, %v4224
    %v4226 = vpop.f32.mrb[0].mxu0
    %v4227 = vpop.f32.mrb[0].mxu0
    %4228 = vdwg.mxu0
    %4229 = vmatprep.subr.bf16.mxu0 %v3579
    %4230 = vmatpush1.bf16.msra.mxu0 %v3578
    %4231 = vmatprep.subr.bf16.mxu0 %v3583
    %4232 = vmatpush1.bf16.msra.mxu0 %v3582
    %4233 = vmatprep.subr.bf16.mxu0 %v3587
    %4234 = vmatpush1.bf16.msra.mxu0 %v3586
    %4235 = vmatprep.subr.bf16.mxu0 %v3591
    %4236 = vmatpush1.bf16.msra.mxu0 %v3590
    %4237 = vmatprep.subr.bf16.mxu0 %v3595
    %4238 = vmatpush1.bf16.msra.mxu0 %v3594
    %4239 = vmatprep.subr.bf16.mxu0 %v3599
    %4240 = vmatpush1.bf16.msra.mxu0 %v3598
    %4241 = vmatprep.subr.bf16.mxu0 %v3603
    %4242 = vmatpush1.bf16.msra.mxu0 %v3602
    %4243 = vmatprep.subr.bf16.mxu0 %v3607
    %4244 = vmatpush1.bf16.msra.mxu0 %v3606
    %4245 = vmatprep.subr.bf16.mxu0 %v3611
    %4246 = vmatpush1.bf16.msra.mxu0 %v3610
    %4247 = vmatprep.subr.bf16.mxu0 %v3615
    %4248 = vmatpush1.bf16.msra.mxu0 %v3614
    %4249 = vmatprep.subr.bf16.mxu0 %v3619
    %4250 = vmatpush1.bf16.msra.mxu0 %v3618
    %4251 = vmatprep.subr.bf16.mxu0 %v3623
    %4252 = vmatpush1.bf16.msra.mxu0 %v3622
    %4253 = vmatprep.subr.bf16.mxu0 %v3627
    %4254 = vmatpush1.bf16.msra.mxu0 %v3626
    %4255 = vmatprep.subr.bf16.mxu0 %v3631
    %4256 = vmatpush1.bf16.msra.mxu0 %v3630
    %4257 = vmatprep.subr.bf16.mxu0 %v3635
    %4258 = vmatpush1.bf16.msra.mxu0 %v3634
    %4259 = vmatprep.subr.bf16.mxu0 %v3639
    %4260 = vmatpush1.bf16.msra.mxu0 %v3638
    %4261 = vmatprep.mubr.bf16.mxu0 %v2461
    %4262 = vmatmul.mubr.bf16.gmra.mrb[0].mxu0 %v2460
    %v4263 = vpop.f32.mrb[0].mxu0
    %v4264 = vadd.f32 %v4223, %v4263
    %v4265 = vpop.f32.mrb[0].mxu0
    %v4266 = vadd.f32 %v4225, %v4265
    %v4267 = vpop.f32.mrb[0].mxu0
    %v4268 = vpop.f32.mrb[0].mxu0
    %4269 = vdwg.mxu0
    %4270 = vmatprep.subr.bf16.mxu0 %v3643
    %4271 = vmatpush1.bf16.msra.mxu0 %v3642
    %4272 = vmatprep.subr.bf16.mxu0 %v3647
    %4273 = vmatpush1.bf16.msra.mxu0 %v3646
    %4274 = vmatprep.subr.bf16.mxu0 %v3651
    %4275 = vmatpush1.bf16.msra.mxu0 %v3650
    %4276 = vmatprep.subr.bf16.mxu0 %v3655
    %4277 = vmatpush1.bf16.msra.mxu0 %v3654
    %4278 = vmatprep.subr.bf16.mxu0 %v3659
    %4279 = vmatpush1.bf16.msra.mxu0 %v3658
    %4280 = vmatprep.subr.bf16.mxu0 %v3663
    %4281 = vmatpush1.bf16.msra.mxu0 %v3662
    %4282 = vmatprep.subr.bf16.mxu0 %v3667
    %4283 = vmatpush1.bf16.msra.mxu0 %v3666
    %4284 = vmatprep.subr.bf16.mxu0 %v3671
    %4285 = vmatpush1.bf16.msra.mxu0 %v3670
    %4286 = vmatprep.subr.bf16.mxu0 %v3675
    %4287 = vmatpush1.bf16.msra.mxu0 %v3674
    %4288 = vmatprep.subr.bf16.mxu0 %v3679
    %4289 = vmatpush1.bf16.msra.mxu0 %v3678
    %4290 = vmatprep.subr.bf16.mxu0 %v3683
    %4291 = vmatpush1.bf16.msra.mxu0 %v3682
    %4292 = vmatprep.subr.bf16.mxu0 %v3687
    %4293 = vmatpush1.bf16.msra.mxu0 %v3686
    %4294 = vmatprep.subr.bf16.mxu0 %v3691
    %4295 = vmatpush1.bf16.msra.mxu0 %v3690
    %4296 = vmatprep.subr.bf16.mxu0 %v3695
    %4297 = vmatpush1.bf16.msra.mxu0 %v3694
    %4298 = vmatprep.subr.bf16.mxu0 %v3699
    %4299 = vmatpush1.bf16.msra.mxu0 %v3698
    %4300 = vmatprep.subr.bf16.mxu0 %v3703
    %4301 = vmatpush1.bf16.msra.mxu0 %v3702
    %4302 = vmatprep.mubr.bf16.mxu0 %v2463
    %4303 = vmatmul.mubr.bf16.gmra.mrb[0].mxu0 %v2462
    %v4304 = vpop.f32.mrb[0].mxu0
    %v4305 = vadd.f32 %v4264, %v4304
    %v4306 = vpop.f32.mrb[0].mxu0
    %v4307 = vadd.f32 %v4266, %v4306
    %v4308 = vpop.f32.mrb[0].mxu0
    %v4309 = vpop.f32.mrb[0].mxu0
    %4310 = vdwg.mxu0
    %4311 = vmatprep.subr.bf16.mxu0 %v3707
    %4312 = vmatpush1.bf16.msra.mxu0 %v3706
    %4313 = vmatprep.subr.bf16.mxu0 %v3711
    %4314 = vmatpush1.bf16.msra.mxu0 %v3710
    %4315 = vmatprep.subr.bf16.mxu0 %v3715
    %4316 = vmatpush1.bf16.msra.mxu0 %v3714
    %4317 = vmatprep.subr.bf16.mxu0 %v3719
    %4318 = vmatpush1.bf16.msra.mxu0 %v3718
    %4319 = vmatprep.subr.bf16.mxu0 %v3723
    %4320 = vmatpush1.bf16.msra.mxu0 %v3722
    %4321 = vmatprep.subr.bf16.mxu0 %v3727
    %4322 = vmatpush1.bf16.msra.mxu0 %v3726
    %4323 = vmatprep.subr.bf16.mxu0 %v3731
    %4324 = vmatpush1.bf16.msra.mxu0 %v3730
    %4325 = vmatprep.subr.bf16.mxu0 %v3735
    %4326 = vmatpush1.bf16.msra.mxu0 %v3734
    %4327 = vmatprep.subr.bf16.mxu0 %v3739
    %4328 = vmatpush1.bf16.msra.mxu0 %v3738
    %4329 = vmatprep.subr.bf16.mxu0 %v3743
    %4330 = vmatpush1.bf16.msra.mxu0 %v3742
    %4331 = vmatprep.subr.bf16.mxu0 %v3747
    %4332 = vmatpush1.bf16.msra.mxu0 %v3746
    %4333 = vmatprep.subr.bf16.mxu0 %v3751
    %4334 = vmatpush1.bf16.msra.mxu0 %v3750
    %4335 = vmatprep.subr.bf16.mxu0 %v3755
    %4336 = vmatpush1.bf16.msra.mxu0 %v3754
    %4337 = vmatprep.subr.bf16.mxu0 %v3759
    %4338 = vmatpush1.bf16.msra.mxu0 %v3758
    %4339 = vmatprep.subr.bf16.mxu0 %v3763
    %4340 = vmatpush1.bf16.msra.mxu0 %v3762
    %4341 = vmatprep.subr.bf16.mxu0 %v3767
    %4342 = vmatpush1.bf16.msra.mxu0 %v3766
    %4343 = vmatprep.mubr.bf16.mxu0 %v2465
    %4344 = vmatmul.mubr.bf16.gmra.mrb[0].mxu0 %v2464
    %v4345 = vpop.f32.mrb[0].mxu0
    %v4346 = vadd.f32 %v4305, %v4345
    %v4347 = vpop.f32.mrb[0].mxu0
    %v4348 = vadd.f32 %v4307, %v4347
    %v4349 = vpop.f32.mrb[0].mxu0
    %v4350 = vpop.f32.mrb[0].mxu0
    %4351 = vdwg.mxu0
    %v4352 = vmax.f32 %v4182, 0.0
    %v4353 = vmax.f32 %v4184, 0.0
    %v4354 = vmax.f32 %v4346, 0.0
    %v4355 = vmax.f32 %v4348, 0.0
    %v4356 = vpack.c.bf16 %v4352, %v4352
    %v4357 = vpack.c.bf16 %v4353, %v4353
    %v4358 = vpack.c.bf16 %v4354, %v4354
    %v4359 = vpack.c.bf16 %v4355, %v4355
    %v4360 = vld [vmem:[#allocation12] sm:$0xff]
    %v4361 = vld [vmem:[#allocation12 + $0x8] sm:$0xff]
    %v4362 = vld [vmem:[#allocation12 + $0x10] sm:$0xff]
    %v4363 = vld [vmem:[#allocation12 + $0x18] sm:$0xff]
    %v4364 = vld [vmem:[#allocation12 + $0x20] sm:$0xff]
    %v4365 = vld [vmem:[#allocation12 + $0x28] sm:$0xff]
    %v4366 = vld [vmem:[#allocation12 + $0x30] sm:$0xff]
    %v4367 = vld [vmem:[#allocation12 + $0x38] sm:$0xff]
    %v4368 = vld [vmem:[#allocation12 + $0x40] sm:$0xff]
    %v4369 = vld [vmem:[#allocation12 + $0x48] sm:$0xff]
    %v4370 = vld [vmem:[#allocation12 + $0x50] sm:$0xff]
    %v4371 = vld [vmem:[#allocation12 + $0x58] sm:$0xff]
    %v4372 = vld [vmem:[#allocation12 + $0x60] sm:$0xff]
    %v4373 = vld [vmem:[#allocation12 + $0x68] sm:$0xff]
    %v4374 = vld [vmem:[#allocation12 + $0x70] sm:$0xff]
    %v4375 = vld [vmem:[#allocation12 + $0x78] sm:$0xff]
    %v4376 = vld [vmem:[#allocation12 + $0x80] sm:$0xff]
    %v4377 = vld [vmem:[#allocation12 + $0x88] sm:$0xff]
    %v4378 = vld [vmem:[#allocation12 + $0x90] sm:$0xff]
    %v4379 = vld [vmem:[#allocation12 + $0x98] sm:$0xff]
    %v4380 = vld [vmem:[#allocation12 + $0xa0] sm:$0xff]
    %v4381 = vld [vmem:[#allocation12 + $0xa8] sm:$0xff]
    %v4382 = vld [vmem:[#allocation12 + $0xb0] sm:$0xff]
    %v4383 = vld [vmem:[#allocation12 + $0xb8] sm:$0xff]
    %v4384 = vld [vmem:[#allocation12 + $0xc0] sm:$0xff]
    %v4385 = vld [vmem:[#allocation12 + $0xc8] sm:$0xff]
    %v4386 = vld [vmem:[#allocation12 + $0xd0] sm:$0xff]
    %v4387 = vld [vmem:[#allocation12 + $0xd8] sm:$0xff]
    %v4388 = vld [vmem:[#allocation12 + $0xe0] sm:$0xff]
    %v4389 = vld [vmem:[#allocation12 + $0xe8] sm:$0xff]
    %v4390 = vld [vmem:[#allocation12 + $0xf0] sm:$0xff]
    %v4391 = vld [vmem:[#allocation12 + $0xf8] sm:$0xff]
    %v4392 = vld [vmem:[#allocation12 + $0x100] sm:$0xff]
    %v4393 = vld [vmem:[#allocation12 + $0x108] sm:$0xff]
    %v4394 = vld [vmem:[#allocation12 + $0x110] sm:$0xff]
    %v4395 = vld [vmem:[#allocation12 + $0x118] sm:$0xff]
    %v4396 = vld [vmem:[#allocation12 + $0x120] sm:$0xff]
    %v4397 = vld [vmem:[#allocation12 + $0x128] sm:$0xff]
    %v4398 = vld [vmem:[#allocation12 + $0x130] sm:$0xff]
    %v4399 = vld [vmem:[#allocation12 + $0x138] sm:$0xff]
    %v4400 = vld [vmem:[#allocation12 + $0x140] sm:$0xff]
    %v4401 = vld [vmem:[#allocation12 + $0x148] sm:$0xff]
    %v4402 = vld [vmem:[#allocation12 + $0x150] sm:$0xff]
    %v4403 = vld [vmem:[#allocation12 + $0x158] sm:$0xff]
    %v4404 = vld [vmem:[#allocation12 + $0x160] sm:$0xff]
    %v4405 = vld [vmem:[#allocation12 + $0x168] sm:$0xff]
    %v4406 = vld [vmem:[#allocation12 + $0x170] sm:$0xff]
    %v4407 = vld [vmem:[#allocation12 + $0x178] sm:$0xff]
    %v4408 = vld [vmem:[#allocation12 + $0x180] sm:$0xff]
    %v4409 = vld [vmem:[#allocation12 + $0x188] sm:$0xff]
    %v4410 = vld [vmem:[#allocation12 + $0x190] sm:$0xff]
    %v4411 = vld [vmem:[#allocation12 + $0x198] sm:$0xff]
    %v4412 = vld [vmem:[#allocation12 + $0x1a0] sm:$0xff]
    %v4413 = vld [vmem:[#allocation12 + $0x1a8] sm:$0xff]
    %v4414 = vld [vmem:[#allocation12 + $0x1b0] sm:$0xff]
    %v4415 = vld [vmem:[#allocation12 + $0x1b8] sm:$0xff]
    %v4416 = vld [vmem:[#allocation12 + $0x1c0] sm:$0xff]
    %v4417 = vld [vmem:[#allocation12 + $0x1c8] sm:$0xff]
    %v4418 = vld [vmem:[#allocation12 + $0x1d0] sm:$0xff]
    %v4419 = vld [vmem:[#allocation12 + $0x1d8] sm:$0xff]
    %v4420 = vld [vmem:[#allocation12 + $0x1e0] sm:$0xff]
    %v4421 = vld [vmem:[#allocation12 + $0x1e8] sm:$0xff]
    %v4422 = vld [vmem:[#allocation12 + $0x1f0] sm:$0xff]
    %v4423 = vld [vmem:[#allocation12 + $0x1f8] sm:$0xff]
    %v4424 = vld [vmem:[%s10] sm:$0x3]
    %v4426 = vlaneseq
    %v4427 = vshrl.u32 %v4426, 7
    %v4428 = vsub.s32 0, %v4427
    %v4429 = vrot.slane %v4424, %v4428
    %v4430 = vlaneseq
    %v4431 = vshrl.u32 %v4430, 7
    %v4432 = vsub.s32 1, %v4431
    %v4433 = vrot.slane %v4424, %v4432
    %v4500 = vunpack.c.l.b16 %v4360
    %v4501 = vunpack.c.h.b16 %v4360
    %v4502 = vunpack.c.l.b16 %v4361
    %v4503 = vunpack.c.h.b16 %v4361
    %v4504 = vunpack.c.l.b16 %v4362
    %v4505 = vunpack.c.h.b16 %v4362
    %v4506 = vunpack.c.l.b16 %v4363
    %v4507 = vunpack.c.h.b16 %v4363
    %v4508 = vunpack.c.l.b16 %v4364
    %v4509 = vunpack.c.h.b16 %v4364
    %v4510 = vunpack.c.l.b16 %v4365
    %v4511 = vunpack.c.h.b16 %v4365
    %v4512 = vunpack.c.l.b16 %v4366
    %v4513 = vunpack.c.h.b16 %v4366
    %v4514 = vunpack.c.l.b16 %v4367
    %v4515 = vunpack.c.h.b16 %v4367
    %v4516 = vunpack.c.l.b16 %v4368
    %v4517 = vunpack.c.h.b16 %v4368
    %v4518 = vunpack.c.l.b16 %v4369
    %v4519 = vunpack.c.h.b16 %v4369
    %v4520 = vunpack.c.l.b16 %v4370
    %v4521 = vunpack.c.h.b16 %v4370
    %v4522 = vunpack.c.l.b16 %v4371
    %v4523 = vunpack.c.h.b16 %v4371
    %v4524 = vunpack.c.l.b16 %v4372
    %v4525 = vunpack.c.h.b16 %v4372
    %v4526 = vunpack.c.l.b16 %v4373
    %v4527 = vunpack.c.h.b16 %v4373
    %v4528 = vunpack.c.l.b16 %v4374
    %v4529 = vunpack.c.h.b16 %v4374
    %v4530 = vunpack.c.l.b16 %v4375
    %v4531 = vunpack.c.h.b16 %v4375
    %v4532 = vunpack.c.l.b16 %v4376
    %v4533 = vunpack.c.h.b16 %v4376
    %v4534 = vunpack.c.l.b16 %v4377
    %v4535 = vunpack.c.h.b16 %v4377
    %v4536 = vunpack.c.l.b16 %v4378
    %v4537 = vunpack.c.h.b16 %v4378
    %v4538 = vunpack.c.l.b16 %v4379
    %v4539 = vunpack.c.h.b16 %v4379
    %v4540 = vunpack.c.l.b16 %v4380
    %v4541 = vunpack.c.h.b16 %v4380
    %v4542 = vunpack.c.l.b16 %v4381
    %v4543 = vunpack.c.h.b16 %v4381
    %v4544 = vunpack.c.l.b16 %v4382
    %v4545 = vunpack.c.h.b16 %v4382
    %v4546 = vunpack.c.l.b16 %v4383
    %v4547 = vunpack.c.h.b16 %v4383
    %v4548 = vunpack.c.l.b16 %v4384
    %v4549 = vunpack.c.h.b16 %v4384
    %v4550 = vunpack.c.l.b16 %v4385
    %v4551 = vunpack.c.h.b16 %v4385
    %v4552 = vunpack.c.l.b16 %v4386
    %v4553 = vunpack.c.h.b16 %v4386
    %v4554 = vunpack.c.l.b16 %v4387
    %v4555 = vunpack.c.h.b16 %v4387
    %v4556 = vunpack.c.l.b16 %v4388
    %v4557 = vunpack.c.h.b16 %v4388
    %v4558 = vunpack.c.l.b16 %v4389
    %v4559 = vunpack.c.h.b16 %v4389
    %v4560 = vunpack.c.l.b16 %v4390
    %v4561 = vunpack.c.h.b16 %v4390
    %v4562 = vunpack.c.l.b16 %v4391
    %v4563 = vunpack.c.h.b16 %v4391
    %v4564 = vunpack.c.l.b16 %v4392
    %v4565 = vunpack.c.h.b16 %v4392
    %v4566 = vunpack.c.l.b16 %v4393
    %v4567 = vunpack.c.h.b16 %v4393
    %v4568 = vunpack.c.l.b16 %v4394
    %v4569 = vunpack.c.h.b16 %v4394
    %v4570 = vunpack.c.l.b16 %v4395
    %v4571 = vunpack.c.h.b16 %v4395
    %v4572 = vunpack.c.l.b16 %v4396
    %v4573 = vunpack.c.h.b16 %v4396
    %v4574 = vunpack.c.l.b16 %v4397
    %v4575 = vunpack.c.h.b16 %v4397
    %v4576 = vunpack.c.l.b16 %v4398
    %v4577 = vunpack.c.h.b16 %v4398
    %v4578 = vunpack.c.l.b16 %v4399
    %v4579 = vunpack.c.h.b16 %v4399
    %v4580 = vunpack.c.l.b16 %v4400
    %v4581 = vunpack.c.h.b16 %v4400
    %v4582 = vunpack.c.l.b16 %v4401
    %v4583 = vunpack.c.h.b16 %v4401
    %v4584 = vunpack.c.l.b16 %v4402
    %v4585 = vunpack.c.h.b16 %v4402
    %v4586 = vunpack.c.l.b16 %v4403
    %v4587 = vunpack.c.h.b16 %v4403
    %v4588 = vunpack.c.l.b16 %v4404
    %v4589 = vunpack.c.h.b16 %v4404
    %v4590 = vunpack.c.l.b16 %v4405
    %v4591 = vunpack.c.h.b16 %v4405
    %v4592 = vunpack.c.l.b16 %v4406
    %v4593 = vunpack.c.h.b16 %v4406
    %v4594 = vunpack.c.l.b16 %v4407
    %v4595 = vunpack.c.h.b16 %v4407
    %v4596 = vunpack.c.l.b16 %v4408
    %v4597 = vunpack.c.h.b16 %v4408
    %v4598 = vunpack.c.l.b16 %v4409
    %v4599 = vunpack.c.h.b16 %v4409
    %v4600 = vunpack.c.l.b16 %v4410
    %v4601 = vunpack.c.h.b16 %v4410
    %v4602 = vunpack.c.l.b16 %v4411
    %v4603 = vunpack.c.h.b16 %v4411
    %v4604 = vunpack.c.l.b16 %v4412
    %v4605 = vunpack.c.h.b16 %v4412
    %v4606 = vunpack.c.l.b16 %v4413
    %v4607 = vunpack.c.h.b16 %v4413
    %v4608 = vunpack.c.l.b16 %v4414
    %v4609 = vunpack.c.h.b16 %v4414
    %v4610 = vunpack.c.l.b16 %v4415
    %v4611 = vunpack.c.h.b16 %v4415
    %v4612 = vunpack.c.l.b16 %v4416
    %v4613 = vunpack.c.h.b16 %v4416
    %v4614 = vunpack.c.l.b16 %v4417
    %v4615 = vunpack.c.h.b16 %v4417
    %v4616 = vunpack.c.l.b16 %v4418
    %v4617 = vunpack.c.h.b16 %v4418
    %v4618 = vunpack.c.l.b16 %v4419
    %v4619 = vunpack.c.h.b16 %v4419
    %v4620 = vunpack.c.l.b16 %v4420
    %v4621 = vunpack.c.h.b16 %v4420
    %v4622 = vunpack.c.l.b16 %v4421
    %v4623 = vunpack.c.h.b16 %v4421
    %v4624 = vunpack.c.l.b16 %v4422
    %v4625 = vunpack.c.h.b16 %v4422
    %v4626 = vunpack.c.l.b16 %v4423
    %v4627 = vunpack.c.h.b16 %v4423
    %v4628 = vpack.c.b16 %v4502, %v4500
    %v4629 = vpack.c.b16 %v4503, %v4501
    %v4630 = vpack.c.b16 %v4506, %v4504
    %v4631 = vpack.c.b16 %v4507, %v4505
    %v4632 = vpack.c.b16 %v4510, %v4508
    %v4633 = vpack.c.b16 %v4511, %v4509
    %v4634 = vpack.c.b16 %v4514, %v4512
    %v4635 = vpack.c.b16 %v4515, %v4513
    %v4636 = vpack.c.b16 %v4518, %v4516
    %v4637 = vpack.c.b16 %v4519, %v4517
    %v4638 = vpack.c.b16 %v4522, %v4520
    %v4639 = vpack.c.b16 %v4523, %v4521
    %v4640 = vpack.c.b16 %v4526, %v4524
    %v4641 = vpack.c.b16 %v4527, %v4525
    %v4642 = vpack.c.b16 %v4530, %v4528
    %v4643 = vpack.c.b16 %v4531, %v4529
    %v4644 = vpack.c.b16 %v4534, %v4532
    %v4645 = vpack.c.b16 %v4535, %v4533
    %v4646 = vpack.c.b16 %v4538, %v4536
    %v4647 = vpack.c.b16 %v4539, %v4537
    %v4648 = vpack.c.b16 %v4542, %v4540
    %v4649 = vpack.c.b16 %v4543, %v4541
    %v4650 = vpack.c.b16 %v4546, %v4544
    %v4651 = vpack.c.b16 %v4547, %v4545
    %v4652 = vpack.c.b16 %v4550, %v4548
    %v4653 = vpack.c.b16 %v4551, %v4549
    %v4654 = vpack.c.b16 %v4554, %v4552
    %v4655 = vpack.c.b16 %v4555, %v4553
    %v4656 = vpack.c.b16 %v4558, %v4556
    %v4657 = vpack.c.b16 %v4559, %v4557
    %v4658 = vpack.c.b16 %v4562, %v4560
    %v4659 = vpack.c.b16 %v4563, %v4561
    %v4660 = vpack.c.b16 %v4566, %v4564
    %v4661 = vpack.c.b16 %v4567, %v4565
    %v4662 = vpack.c.b16 %v4570, %v4568
    %v4663 = vpack.c.b16 %v4571, %v4569
    %v4664 = vpack.c.b16 %v4574, %v4572
    %v4665 = vpack.c.b16 %v4575, %v4573
    %v4666 = vpack.c.b16 %v4578, %v4576
    %v4667 = vpack.c.b16 %v4579, %v4577
    %v4668 = vpack.c.b16 %v4582, %v4580
    %v4669 = vpack.c.b16 %v4583, %v4581
    %v4670 = vpack.c.b16 %v4586, %v4584
    %v4671 = vpack.c.b16 %v4587, %v4585
    %v4672 = vpack.c.b16 %v4590, %v4588
    %v4673 = vpack.c.b16 %v4591, %v4589
    %v4674 = vpack.c.b16 %v4594, %v4592
    %v4675 = vpack.c.b16 %v4595, %v4593
    %v4676 = vpack.c.b16 %v4598, %v4596
    %v4677 = vpack.c.b16 %v4599, %v4597
    %v4678 = vpack.c.b16 %v4602, %v4600
    %v4679 = vpack.c.b16 %v4603, %v4601
    %v4680 = vpack.c.b16 %v4606, %v4604
    %v4681 = vpack.c.b16 %v4607, %v4605
    %v4682 = vpack.c.b16 %v4610, %v4608
    %v4683 = vpack.c.b16 %v4611, %v4609
    %v4684 = vpack.c.b16 %v4614, %v4612
    %v4685 = vpack.c.b16 %v4615, %v4613
    %v4686 = vpack.c.b16 %v4618, %v4616
    %v4687 = vpack.c.b16 %v4619, %v4617
    %v4688 = vpack.c.b16 %v4622, %v4620
    %v4689 = vpack.c.b16 %v4623, %v4621
    %v4690 = vpack.c.b16 %v4626, %v4624
    %v4691 = vpack.c.b16 %v4627, %v4625
    %4756 = vmatprep.subr.bf16.mxu0 %v4629
    %4757 = vmatpush1.bf16.msra.mxu0 %v4628
    %4758 = vmatprep.subr.bf16.mxu0 %v4631
    %4759 = vmatpush1.bf16.msra.mxu0 %v4630
    %4760 = vmatprep.subr.bf16.mxu0 %v4633
    %4761 = vmatpush1.bf16.msra.mxu0 %v4632
    %4762 = vmatprep.subr.bf16.mxu0 %v4635
    %4763 = vmatpush1.bf16.msra.mxu0 %v4634
    %4764 = vmatprep.subr.bf16.mxu0 %v4637
    %4765 = vmatpush1.bf16.msra.mxu0 %v4636
    %4766 = vmatprep.subr.bf16.mxu0 %v4639
    %4767 = vmatpush1.bf16.msra.mxu0 %v4638
    %4768 = vmatprep.subr.bf16.mxu0 %v4641
    %4769 = vmatpush1.bf16.msra.mxu0 %v4640
    %4770 = vmatprep.subr.bf16.mxu0 %v4643
    %4771 = vmatpush1.bf16.msra.mxu0 %v4642
    %4772 = vmatprep.subr.bf16.mxu0 %v4645
    %4773 = vmatpush1.bf16.msra.mxu0 %v4644
    %4774 = vmatprep.subr.bf16.mxu0 %v4647
    %4775 = vmatpush1.bf16.msra.mxu0 %v4646
    %4776 = vmatprep.subr.bf16.mxu0 %v4649
    %4777 = vmatpush1.bf16.msra.mxu0 %v4648
    %4778 = vmatprep.subr.bf16.mxu0 %v4651
    %4779 = vmatpush1.bf16.msra.mxu0 %v4650
    %4780 = vmatprep.subr.bf16.mxu0 %v4653
    %4781 = vmatpush1.bf16.msra.mxu0 %v4652
    %4782 = vmatprep.subr.bf16.mxu0 %v4655
    %4783 = vmatpush1.bf16.msra.mxu0 %v4654
    %4784 = vmatprep.subr.bf16.mxu0 %v4657
    %4785 = vmatpush1.bf16.msra.mxu0 %v4656
    %4786 = vmatprep.subr.bf16.mxu0 %v4659
    %4787 = vmatpush1.bf16.msra.mxu0 %v4658
    %4788 = vmatprep.mubr.bf16.mxu0 %v4357
    %4789 = vmatmul.mubr.bf16.gmra.mrb[0].mxu0 %v4356
    %v4790 = vpop.f32.mrb[0].mxu0
    %v4791 = vadd.f32 %v4429, %v4790
    %v4792 = vpop.f32.mrb[0].mxu0
    %v4793 = vadd.f32 %v4433, %v4792
    %v4794 = vpop.f32.mrb[0].mxu0
    %v4795 = vpop.f32.mrb[0].mxu0
    %4796 = vdwg.mxu0
    %4797 = vmatprep.subr.bf16.mxu0 %v4661
    %4798 = vmatpush1.bf16.msra.mxu0 %v4660
    %4799 = vmatprep.subr.bf16.mxu0 %v4663
    %4800 = vmatpush1.bf16.msra.mxu0 %v4662
    %4801 = vmatprep.subr.bf16.mxu0 %v4665
    %4802 = vmatpush1.bf16.msra.mxu0 %v4664
    %4803 = vmatprep.subr.bf16.mxu0 %v4667
    %4804 = vmatpush1.bf16.msra.mxu0 %v4666
    %4805 = vmatprep.subr.bf16.mxu0 %v4669
    %4806 = vmatpush1.bf16.msra.mxu0 %v4668
    %4807 = vmatprep.subr.bf16.mxu0 %v4671
    %4808 = vmatpush1.bf16.msra.mxu0 %v4670
    %4809 = vmatprep.subr.bf16.mxu0 %v4673
    %4810 = vmatpush1.bf16.msra.mxu0 %v4672
    %4811 = vmatprep.subr.bf16.mxu0 %v4675
    %4812 = vmatpush1.bf16.msra.mxu0 %v4674
    %4813 = vmatprep.subr.bf16.mxu0 %v4677
    %4814 = vmatpush1.bf16.msra.mxu0 %v4676
    %4815 = vmatprep.subr.bf16.mxu0 %v4679
    %4816 = vmatpush1.bf16.msra.mxu0 %v4678
    %4817 = vmatprep.subr.bf16.mxu0 %v4681
    %4818 = vmatpush1.bf16.msra.mxu0 %v4680
    %4819 = vmatprep.subr.bf16.mxu0 %v4683
    %4820 = vmatpush1.bf16.msra.mxu0 %v4682
    %4821 = vmatprep.subr.bf16.mxu0 %v4685
    %4822 = vmatpush1.bf16.msra.mxu0 %v4684
    %4823 = vmatprep.subr.bf16.mxu0 %v4687
    %4824 = vmatpush1.bf16.msra.mxu0 %v4686
    %4825 = vmatprep.subr.bf16.mxu0 %v4689
    %4826 = vmatpush1.bf16.msra.mxu0 %v4688
    %4827 = vmatprep.subr.bf16.mxu0 %v4691
    %4828 = vmatpush1.bf16.msra.mxu0 %v4690
    %4829 = vmatprep.mubr.bf16.mxu0 %v4359
    %4830 = vmatmul.mubr.bf16.gmra.mrb[0].mxu0 %v4358
    %v4831 = vpop.f32.mrb[0].mxu0
    %v4832 = vadd.f32 %v4791, %v4831
    %v4833 = vpop.f32.mrb[0].mxu0
    %v4834 = vadd.f32 %v4793, %v4833
    %v4835 = vpop.f32.mrb[0].mxu0
    %v4836 = vpop.f32.mrb[0].mxu0
    %4837 = vdwg.mxu0
    %v4838 = vmax.f32 %v4832, 0.0
    %v4839 = vmax.f32 %v4834, 0.0
    %v4840 = vpack.c.bf16 %v4838, %v4838
    %v4841 = vpack.c.bf16 %v4839, %v4839
    %v4842 = vld [vmem:[#allocation13] sm:$0xf]
    %v4843 = vld [vmem:[#allocation13 + $0x4] sm:$0xf]
    %v4844 = vld [vmem:[#allocation13 + $0x8] sm:$0xf]
    %v4845 = vld [vmem:[#allocation13 + $0xc] sm:$0xf]
    %v4846 = vld [vmem:[#allocation13 + $0x10] sm:$0xf]
    %v4847 = vld [vmem:[#allocation13 + $0x14] sm:$0xf]
    %v4848 = vld [vmem:[#allocation13 + $0x18] sm:$0xf]
    %v4849 = vld [vmem:[#allocation13 + $0x1c] sm:$0xf]
    %v4850 = vld [vmem:[#allocation13 + $0x20] sm:$0xf]
    %v4851 = vld [vmem:[#allocation13 + $0x24] sm:$0xf]
    %v4852 = vld [vmem:[#allocation13 + $0x28] sm:$0xf]
    %v4853 = vld [vmem:[#allocation13 + $0x2c] sm:$0xf]
    %v4854 = vld [vmem:[#allocation13 + $0x30] sm:$0xf]
    %v4855 = vld [vmem:[#allocation13 + $0x34] sm:$0xf]
    %v4856 = vld [vmem:[#allocation13 + $0x38] sm:$0xf]
    %v4857 = vld [vmem:[#allocation13 + $0x3c] sm:$0xf]
    %v4858 = vld [vmem:[#allocation13 + $0x40] sm:$0xf]
    %v4859 = vld [vmem:[#allocation13 + $0x44] sm:$0xf]
    %v4860 = vld [vmem:[#allocation13 + $0x48] sm:$0xf]
    %v4861 = vld [vmem:[#allocation13 + $0x4c] sm:$0xf]
    %v4862 = vld [vmem:[#allocation13 + $0x50] sm:$0xf]
    %v4863 = vld [vmem:[#allocation13 + $0x54] sm:$0xf]
    %v4864 = vld [vmem:[#allocation13 + $0x58] sm:$0xf]
    %v4865 = vld [vmem:[#allocation13 + $0x5c] sm:$0xf]
    %v4866 = vld [vmem:[#allocation13 + $0x60] sm:$0xf]
    %v4867 = vld [vmem:[#allocation13 + $0x64] sm:$0xf]
    %v4868 = vld [vmem:[#allocation13 + $0x68] sm:$0xf]
    %v4869 = vld [vmem:[#allocation13 + $0x6c] sm:$0xf]
    %v4870 = vld [vmem:[#allocation13 + $0x70] sm:$0xf]
    %v4871 = vld [vmem:[#allocation13 + $0x74] sm:$0xf]
    %v4872 = vld [vmem:[#allocation13 + $0x78] sm:$0xf]
    %v4873 = vld [vmem:[#allocation13 + $0x7c] sm:$0xf]
    %v4874 = vld [vmem:[%s12] sm:$0x1]
    %v4876 = vlaneseq
    %v4877 = vshrl.u32 %v4876, 7
    %v4878 = vsub.s32 0, %v4877
    %v4879 = vrot.slane %v4874, %v4878
    %v4913 = vunpack.c.l.b16 %v4842
    %v4914 = vunpack.c.l.b16 %v4843
    %v4915 = vunpack.c.l.b16 %v4844
    %v4916 = vunpack.c.l.b16 %v4845
    %v4917 = vunpack.c.l.b16 %v4846
    %v4918 = vunpack.c.l.b16 %v4847
    %v4919 = vunpack.c.l.b16 %v4848
    %v4920 = vunpack.c.l.b16 %v4849
    %v4921 = vunpack.c.l.b16 %v4850
    %v4922 = vunpack.c.l.b16 %v4851
    %v4923 = vunpack.c.l.b16 %v4852
    %v4924 = vunpack.c.l.b16 %v4853
    %v4925 = vunpack.c.l.b16 %v4854
    %v4926 = vunpack.c.l.b16 %v4855
    %v4927 = vunpack.c.l.b16 %v4856
    %v4928 = vunpack.c.l.b16 %v4857
    %v4929 = vunpack.c.l.b16 %v4858
    %v4930 = vunpack.c.l.b16 %v4859
    %v4931 = vunpack.c.l.b16 %v4860
    %v4932 = vunpack.c.l.b16 %v4861
    %v4933 = vunpack.c.l.b16 %v4862
    %v4934 = vunpack.c.l.b16 %v4863
    %v4935 = vunpack.c.l.b16 %v4864
    %v4936 = vunpack.c.l.b16 %v4865
    %v4937 = vunpack.c.l.b16 %v4866
    %v4938 = vunpack.c.l.b16 %v4867
    %v4939 = vunpack.c.l.b16 %v4868
    %v4940 = vunpack.c.l.b16 %v4869
    %v4941 = vunpack.c.l.b16 %v4870
    %v4942 = vunpack.c.l.b16 %v4871
    %v4943 = vunpack.c.l.b16 %v4872
    %v4944 = vunpack.c.l.b16 %v4873
    %v4945 = vpack.c.b16 %v4914, %v4913
    %v4946 = vpack.c.b16 %v4916, %v4915
    %v4947 = vpack.c.b16 %v4918, %v4917
    %v4948 = vpack.c.b16 %v4920, %v4919
    %v4949 = vpack.c.b16 %v4922, %v4921
    %v4950 = vpack.c.b16 %v4924, %v4923
    %v4951 = vpack.c.b16 %v4926, %v4925
    %v4952 = vpack.c.b16 %v4928, %v4927
    %v4953 = vpack.c.b16 %v4930, %v4929
    %v4954 = vpack.c.b16 %v4932, %v4931
    %v4955 = vpack.c.b16 %v4934, %v4933
    %v4956 = vpack.c.b16 %v4936, %v4935
    %v4957 = vpack.c.b16 %v4938, %v4937
    %v4958 = vpack.c.b16 %v4940, %v4939
    %v4959 = vpack.c.b16 %v4942, %v4941
    %v4960 = vpack.c.b16 %v4944, %v4943
    %4977 = vmatprep.subr.bf16.mxu0 0
    %4978 = vmatpush1.bf16.msra.mxu0 %v4945
    %4979 = vmatprep.subr.bf16.mxu0 0
    %4980 = vmatpush1.bf16.msra.mxu0 %v4946
    %4981 = vmatprep.subr.bf16.mxu0 0
    %4982 = vmatpush1.bf16.msra.mxu0 %v4947
    %4983 = vmatprep.subr.bf16.mxu0 0
    %4984 = vmatpush1.bf16.msra.mxu0 %v4948
    %4985 = vmatprep.subr.bf16.mxu0 0
    %4986 = vmatpush1.bf16.msra.mxu0 %v4949
    %4987 = vmatprep.subr.bf16.mxu0 0
    %4988 = vmatpush1.bf16.msra.mxu0 %v4950
    %4989 = vmatprep.subr.bf16.mxu0 0
    %4990 = vmatpush1.bf16.msra.mxu0 %v4951
    %4991 = vmatprep.subr.bf16.mxu0 0
    %4992 = vmatpush1.bf16.msra.mxu0 %v4952
    %4993 = vmatprep.subr.bf16.mxu0 0
    %4994 = vmatpush1.bf16.msra.mxu0 %v4953
    %4995 = vmatprep.subr.bf16.mxu0 0
    %4996 = vmatpush1.bf16.msra.mxu0 %v4954
    %4997 = vmatprep.subr.bf16.mxu0 0
    %4998 = vmatpush1.bf16.msra.mxu0 %v4955
    %4999 = vmatprep.subr.bf16.mxu0 0
    %5000 = vmatpush1.bf16.msra.mxu0 %v4956
    %5001 = vmatprep.subr.bf16.mxu0 0
    %5002 = vmatpush1.bf16.msra.mxu0 %v4957
    %5003 = vmatprep.subr.bf16.mxu0 0
    %5004 = vmatpush1.bf16.msra.mxu0 %v4958
    %5005 = vmatprep.subr.bf16.mxu0 0
    %5006 = vmatpush1.bf16.msra.mxu0 %v4959
    %5007 = vmatprep.subr.bf16.mxu0 0
    %5008 = vmatpush1.bf16.msra.mxu0 %v4960
    %5009 = vmatprep.mubr.bf16.mxu0 %v4841
    %5010 = vmatmul.mubr.bf16.gmra.mrb[0].mxu0 %v4840
    %v5011 = vpop.f32.mrb[0].mxu0
    %v5012 = vadd.f32 %v4879, %v5011
    %v5013 = vpop.f32.mrb[0].mxu0
    %v5014 = vpop.f32.mrb[0].mxu0
    %v5015 = vpop.f32.mrb[0].mxu0
    %5016 = vdwg.mxu0
    %v5017 = vmax.f32 %v5012, 0.0
    %v5018 = vpack.c.bf16 %v5017, %v5017
    %v5019 = vld [vmem:[#allocation15] sm:$0xf]
    %v5020 = vld [vmem:[#allocation15 + $0x4] sm:$0xf]
    %v5021 = vld [vmem:[#allocation15 + $0x8] sm:$0xf]
    %v5022 = vld [vmem:[#allocation15 + $0xc] sm:$0xf]
    %v5023 = vld [vmem:[#allocation15 + $0x10] sm:$0xf]
    %v5024 = vld [vmem:[#allocation15 + $0x14] sm:$0xf]
    %v5025 = vld [vmem:[#allocation15 + $0x18] sm:$0xf]
    %v5026 = vld [vmem:[#allocation15 + $0x1c] sm:$0xf]
    %v5027 = vld [vmem:[#allocation15 + $0x20] sm:$0xf]
    %v5028 = vld [vmem:[#allocation15 + $0x24] sm:$0xf]
    %v5029 = vld [vmem:[#allocation15 + $0x28] sm:$0xf]
    %v5030 = vld [vmem:[#allocation15 + $0x2c] sm:$0xf]
    %v5031 = vld [vmem:[#allocation15 + $0x30] sm:$0xf]
    %v5032 = vld [vmem:[#allocation15 + $0x34] sm:$0xf]
    %v5033 = vld [vmem:[#allocation15 + $0x38] sm:$0xf]
    %v5034 = vld [vmem:[#allocation15 + $0x3c] sm:$0xf]
    %v5035 = vld [vmem:[%s14] sm:$0x1]
    %v5037 = vlaneseq
    %v5038 = vshrl.u32 %v5037, 7
    %v5039 = vsub.s32 0, %v5038
    %v5040 = vrot.slane %v5035, %v5039
    %v5058 = vunpack.c.l.b16 %v5019
    %v5059 = vunpack.c.l.b16 %v5020
    %v5060 = vunpack.c.l.b16 %v5021
    %v5061 = vunpack.c.l.b16 %v5022
    %v5062 = vunpack.c.l.b16 %v5023
    %v5063 = vunpack.c.l.b16 %v5024
    %v5064 = vunpack.c.l.b16 %v5025
    %v5065 = vunpack.c.l.b16 %v5026
    %v5066 = vunpack.c.l.b16 %v5027
    %v5067 = vunpack.c.l.b16 %v5028
    %v5068 = vunpack.c.l.b16 %v5029
    %v5069 = vunpack.c.l.b16 %v5030
    %v5070 = vunpack.c.l.b16 %v5031
    %v5071 = vunpack.c.l.b16 %v5032
    %v5072 = vunpack.c.l.b16 %v5033
    %v5073 = vunpack.c.l.b16 %v5034
    %v5074 = vpack.c.b16 %v5059, %v5058
    %v5075 = vpack.c.b16 %v5061, %v5060
    %v5076 = vpack.c.b16 %v5063, %v5062
    %v5077 = vpack.c.b16 %v5065, %v5064
    %v5078 = vpack.c.b16 %v5067, %v5066
    %v5079 = vpack.c.b16 %v5069, %v5068
    %v5080 = vpack.c.b16 %v5071, %v5070
    %v5081 = vpack.c.b16 %v5073, %v5072
    %5090 = vmatprep.subr.bf16.mxu0 0
    %5091 = vmatpush1.bf16.msra.mxu0 %v5074
    %5092 = vmatprep.subr.bf16.mxu0 0
    %5093 = vmatpush1.bf16.msra.mxu0 %v5075
    %5094 = vmatprep.subr.bf16.mxu0 0
    %5095 = vmatpush1.bf16.msra.mxu0 %v5076
    %5096 = vmatprep.subr.bf16.mxu0 0
    %5097 = vmatpush1.bf16.msra.mxu0 %v5077
    %5098 = vmatprep.subr.bf16.mxu0 0
    %5099 = vmatpush1.bf16.msra.mxu0 %v5078
    %5100 = vmatprep.subr.bf16.mxu0 0
    %5101 = vmatpush1.bf16.msra.mxu0 %v5079
    %5102 = vmatprep.subr.bf16.mxu0 0
    %5103 = vmatpush1.bf16.msra.mxu0 %v5080
    %5104 = vmatprep.subr.bf16.mxu0 0
    %5105 = vmatpush1.bf16.msra.mxu0 %v5081
    %5106 = vmatprep.subr.bf16.mxu0 0
    %5107 = vmatpush1.bf16.msra.mxu0 0
    %5108 = vmatprep.subr.bf16.mxu0 0
    %5109 = vmatpush1.bf16.msra.mxu0 0
    %5110 = vmatprep.subr.bf16.mxu0 0
    %5111 = vmatpush1.bf16.msra.mxu0 0
    %5112 = vmatprep.subr.bf16.mxu0 0
    %5113 = vmatpush1.bf16.msra.mxu0 0
    %5114 = vmatprep.subr.bf16.mxu0 0
    %5115 = vmatpush1.bf16.msra.mxu0 0
    %5116 = vmatprep.subr.bf16.mxu0 0
    %5117 = vmatpush1.bf16.msra.mxu0 0
    %5118 = vmatprep.subr.bf16.mxu0 0
    %5119 = vmatpush1.bf16.msra.mxu0 0
    %5120 = vmatprep.subr.bf16.mxu0 0
    %5121 = vmatpush1.bf16.msra.mxu0 0
    %5122 = vmatprep.mubr.bf16.mxu0 0
    %5123 = vmatmul.mubr.bf16.gmra.mrb[0].mxu0 %v5018
    %v5124 = vpop.f32.mrb[0].mxu0
    %v5125 = vadd.f32 %v5040, %v5124
    %v5126 = vpop.f32.mrb[0].mxu0
    %v5127 = vpop.f32.mrb[0].mxu0
    %v5128 = vpop.f32.mrb[0].mxu0
    %5129 = vdwg.mxu0
    %5130 = vst [vmem:[%s15] sm:$0xff] %v5125
    // Predicated region
    $region98: #{custom_net_forward.1} parent=1 // pred_check
      _
    $region99: #{custom_net_forward.1} parent=1 // pred_check_branch
      %5132 = sbr.rel (0) target = $region101
    $region100: #{custom_net_forward.1} parent=1 // pred_region
      _
    $region101: #{custom_net_forward.1} parent=1 // pred_fallthru
      _
    // Predicated region
    $region102: #{custom_net_forward.1} parent=1 // pred_check
      _
    $region103: #{custom_net_forward.1} parent=1 // pred_check_branch
      %5134 = sbr.rel (0) target = $region105
    $region104: #{custom_net_forward.1} parent=1 // pred_region
      _
    $region105: #{custom_net_forward.1} parent=1 // pred_fallthru
      _
    %5135 = vsyncpa [#allocation3], 1
    %5136 = vsyncpa [#allocation5], 1
    %5137 = vsyncpa [#allocation8], 1
    %5138 = vsyncpa [#allocation11], 1
    %5139 = vsyncpa [#allocation14], 1

</llo_original>
